<compile_context>
chip_gen: v7x
topology: tpu7x:2x2x1
jax: 0.10.0
libtpu: 0.0.40
codegen_flags: <defaults>
</compile_context>

<pallas_src>
import jax
import jax.numpy as jnp
from jax import lax
from jax.experimental import pallas as pl
from jax.experimental.pallas import tpu as pltpu


def _round_up(x, m):
    return ((x + m - 1) // m) * m


def _choose_tq(N, cap=256):
    """Largest multiple-of-8 divisor of N that is <= cap with >= 2 tiles.

    Falls back to TQ = N (single tile, full-dim block) when no such divisor
    exists (e.g. N = 49 or 196 for PVT stage 3/4)."""
    best = None
    for t in range(8, min(N, cap) + 1, 8):
        if N % t == 0 and N // t >= 2:
            best = t
    return best if best is not None else N


_BUFFERED_OK = None


def _supports_buffered_weights():
    """Isolated feature probe for BlockSpec(pipeline_mode=pl.Buffered(1)).

    Runs a tiny dedicated pallas_call so that a failure here can only mean
    'feature unsupported' and never masks errors from the real SRA kernel."""
    global _BUFFERED_OK
    if _BUFFERED_OK is not None:
        return _BUFFERED_OK
    if not hasattr(pl, "Buffered"):
        _BUFFERED_OK = False
        return False
    try:
        w_spec = pl.BlockSpec((8, 128), lambda i: (0, 0),
                              pipeline_mode=pl.Buffered(1))

        def probe_kernel(w_ref, x_ref, o_ref):
            o_ref[...] = x_ref[...] + w_ref[...]

        fn = pl.pallas_call(
            probe_kernel,
            out_shape=jax.ShapeDtypeStruct((16, 128), jnp.float32),
            grid_spec=pltpu.PrefetchScalarGridSpec(
                num_scalar_prefetch=0,
                grid=(2,),
                in_specs=[w_spec, pl.BlockSpec((8, 128), lambda i: (i, 0))],
                out_specs=pl.BlockSpec((8, 128), lambda i: (i, 0))),
        )
        jax.block_until_ready(fn(jnp.zeros((8, 128), jnp.float32),
                                 jnp.zeros((16, 128), jnp.float32)))
        _BUFFERED_OK = True
    except Exception:
        _BUFFERED_OK = False
    return _BUFFERED_OK


def _make_sra_kernel(*, TQ, Nk, Nk_pad, D, num_heads, use_sr, eps=1e-5):
    """Builds the fused SRA kernel (q-tiled, persistent per-batch K/V')."""
    hd = D // num_heads
    bf16 = jnp.bfloat16
    f32 = jnp.float32
    padded = Nk_pad != Nk

    def compute_kv(xkv_bf, wkv_ref, wsr_ref, bsr_ref, gamma_ref, beta_ref,
                   wproj_ref, k_sc, vp_sc):
        # xkv_bf: (Nk_pad, sr*sr*D) patch tokens (sr>1) or (Nk_pad, D) tokens,
        # already zero-padded to Nk_pad rows in the wrapper.
        if use_sr:
            # Conv2d(k=sr, stride=sr) as patch matmul + bias, then LayerNorm.
            xs = jnp.dot(xkv_bf, wsr_ref[...],
                         preferred_element_type=f32) + bsr_ref[...]
            mu = jnp.mean(xs, axis=-1, keepdims=True)
            var = jnp.mean(jnp.square(xs - mu), axis=-1, keepdims=True)
            xs = (xs - mu) * lax.rsqrt(var + eps)
            xs = xs * gamma_ref[...] + beta_ref[...]
            xs_bf = xs.astype(bf16)
        else:
            xs_bf = xkv_bf
        # Single fused K/V projection (2*D-wide MXU output).
        kv = jnp.dot(xs_bf, wkv_ref[...], preferred_element_type=f32)
        k_sc[...] = kv[:, :D].astype(bf16)
        v_bf = kv[:, D:].astype(bf16)
        # Fold the output projection into V per head: V'_h = V_h @ Wproj_h.
        # Per-q-tile PV matmuls then produce full D-wide outputs and the
        # separate proj matmul / masked per-head acc stores disappear.
        for h in range(num_heads):
            lo, hi = h * hd, (h + 1) * hd
            vp_sc[h] = jnp.dot(v_bf[:, lo:hi], wproj_ref[lo:hi, :],
                               preferred_element_type=f32).astype(bf16)

    def attention(q_bf, k_sc, vp_sc):
        # q_bf: (TQ, D) bf16, attention scale already folded into wq.
        if padded:
            col = lax.broadcasted_iota(jnp.int32, (TQ, Nk_pad), 1)
            pad_mask = col >= Nk          # hoisted out of the head loop
        out = None
        for h in range(num_heads):
            lo, hi = h * hd, (h + 1) * hd
            qh = q_bf[:, lo:hi]           # (TQ, hd)
            kh = k_sc[:, lo:hi]           # ref lane-slice, no full K load
            # QK^T without an explicit transpose (contract the last dims).
            s = lax.dot_general(qh, kh, (((1,), (1,)), ((), ())),
                                preferred_element_type=f32)  # (TQ, Nk_pad)
            if padded:
                s = jnp.where(pad_mask, jnp.float32(-1e30), s)
            # Manual softmax; reciprocal runs on the otherwise-idle EUP.
            m = jnp.max(s, axis=-1, keepdims=True)
            e = jnp.exp(s - m)
            denom = jnp.sum(e, axis=-1, keepdims=True)
            p = e * pl.reciprocal(denom, approx=True)
            oh = jnp.dot(p.astype(bf16), vp_sc[h],
                         preferred_element_type=f32)         # (TQ, D)
            out = oh if out is None else out + oh
        return out

    if use_sr:
        def kernel(x_ref, xkv_ref, wq_ref, wkv_ref, wsr_ref, bsr_ref,
                   gamma_ref, beta_ref, wproj_ref, bproj_ref, o_ref,
                   k_sc, vp_sc):
            @pl.when(pl.program_id(1) == 0)
            def _():
                compute_kv(xkv_ref[0], wkv_ref, wsr_ref, bsr_ref, gamma_ref,
                           beta_ref, wproj_ref, k_sc, vp_sc)
            q = jnp.dot(x_ref[0], wq_ref[...],
                        preferred_element_type=f32).astype(bf16)
            out = attention(q, k_sc, vp_sc) + bproj_ref[...]
            o_ref[0] = out.astype(o_ref.dtype)
        return kernel
    else:
        def kernel(x_ref, xkv_ref, wq_ref, wkv_ref, wproj_ref, bproj_ref,
                   o_ref, k_sc, vp_sc):
            @pl.when(pl.program_id(1) == 0)
            def _():
                compute_kv(xkv_ref[0], wkv_ref, None, None, None, None,
                           wproj_ref, k_sc, vp_sc)
            q = jnp.dot(x_ref[0], wq_ref[...],
                        preferred_element_type=f32).astype(bf16)
            out = attention(q, k_sc, vp_sc) + bproj_ref[...]
            o_ref[0] = out.astype(o_ref.dtype)
        return kernel


def sra_forward(x, H, W, params, *, num_heads, sr_ratio, eps=1e-5):
    """Pallas-backed forward of SpatialReductionAttention.  x: (B, N, D)."""
    B, N, D = x.shape
    assert N == H * W and D % num_heads == 0
    hd = D // num_heads
    scale = hd ** -0.5
    use_sr = sr_ratio > 1
    TQ = _choose_tq(N)
    NQ = N // TQ
    bf16 = jnp.bfloat16
    f32 = jnp.float32

    # MXU operands in bf16 (f32 accumulation in-kernel); biases / LayerNorm
    # affine stay f32.  The attention scale is folded into wq once; wk and wv
    # are fused into a single (D, 2D) weight.
    x_bf = x.astype(bf16)
    wq = (params["wq"] * scale).astype(bf16)
    wkv = jnp.concatenate([params["wk"], params["wv"]], axis=1).astype(bf16)
    wproj = params["wproj"].astype(bf16)
    bproj = params["bproj"].astype(f32)

    if use_sr:
        s = sr_ratio
        Hk, Wk = H // s, W // s
        Nk = Hk * Wk
        P = s * s * D
        # Patchify (== Conv2d k=s, stride=s input windows), flatten (kh,kw,cin),
        # already in bf16 to halve the HBM round trip of the KV source.
        xkv = (x_bf.reshape(B, Hk, s, Wk, s, D)
                   .transpose(0, 1, 3, 2, 4, 5)
                   .reshape(B, Nk, P))
    else:
        Nk = N
        P = D
        xkv = x_bf

    Nk_pad = _round_up(Nk, 128)   # lane/MXU-friendly padded KV length
    if Nk_pad != Nk:
        # Zero-pad in the wrapper so the kernel writes full, aligned K/V tiles
        # (pad columns are masked with -1e30 before the softmax in-kernel).
        xkv = jnp.pad(xkv, ((0, 0), (0, Nk_pad - Nk), (0, 0)))

    if use_sr:
        weights = [wq, wkv, params["wsr"].astype(bf16),
                   params["bsr"].astype(f32), params["gamma"].astype(f32),
                   params["beta"].astype(f32), wproj, bproj]
    else:
        weights = [wq, wkv, wproj, bproj]
    weight_shapes = [tuple(w.shape) for w in weights]

    kernel = _make_sra_kernel(TQ=TQ, Nk=Nk, Nk_pad=Nk_pad, D=D,
                              num_heads=num_heads, use_sr=use_sr, eps=eps)

    buffered = _supports_buffered_weights()

    def w_spec(shape):
        if buffered:
            # Grid-invariant weights: single-buffered (no double-buffer cost).
            return pl.BlockSpec(shape, lambda b, j: (0, 0),
                                pipeline_mode=pl.Buffered(1))
        return pl.BlockSpec(shape, lambda b, j: (0, 0))

    in_specs = [
        pl.BlockSpec((1, TQ, D), lambda b, j: (b, j, 0)),       # x (q tile)
        pl.BlockSpec((1, Nk_pad, P), lambda b, j: (b, 0, 0)),   # kv source
    ] + [w_spec(shp) for shp in weight_shapes]

    # Explicit scoped-VMEM budget (tile sizes + headroom), clamped to 75% of
    # this generation's physical VMEM (v7x has only 64 MiB per TensorCore).
    weight_bytes = sum(int(w.size) * w.dtype.itemsize for w in weights)
    wbuf = 1 if buffered else 2
    est = (2 * TQ * D * 2                       # x tile (bf16, dbl-buffered)
           + 2 * Nk_pad * P * 2                 # kv source tile (bf16)
           + 2 * TQ * D * 4                     # out tile (dbl-buffered)
           + wbuf * weight_bytes
           + (1 + num_heads) * Nk_pad * D * 2   # K + per-head V' scratch
           + 4 * TQ * Nk_pad * 4)               # softmax intermediates/spill
    est = int(1.5 * est) + (4 << 20)
    vmem_cap = 128 * 2 ** 20
    if hasattr(pltpu, "get_tpu_info"):
        try:
            vmem_cap = int(pltpu.get_tpu_info().vmem_capacity_bytes)
        except Exception:
            pass  # capability query only; keep the conservative default
    vmem_limit = min(max(est, 32 * 2 ** 20), int(0.75 * vmem_cap))

    fn = pl.pallas_call(
        kernel,
        out_shape=jax.ShapeDtypeStruct((B, N, D), x.dtype),
        grid_spec=pltpu.PrefetchScalarGridSpec(
            num_scalar_prefetch=0,
            grid=(B, NQ),
            in_specs=in_specs,
            out_specs=pl.BlockSpec((1, TQ, D), lambda b, j: (b, j, 0)),
            scratch_shapes=[
                pltpu.VMEM((Nk_pad, D), jnp.bfloat16),             # K
                pltpu.VMEM((num_heads, Nk_pad, D), jnp.bfloat16),  # V@Wproj/head
            ]),
        compiler_params=pltpu.CompilerParams(
            dimension_semantics=("parallel", "arbitrary"),
            vmem_limit_bytes=vmem_limit),
    )
    return fn(x_bf, xkv, *weights)


def sra_reference(x, H, W, params, *, num_heads, sr_ratio, eps=1e-5):
    """Pure-JAX (f32) reference matching the PyTorch forward (eval mode)."""
    B, N, D = x.shape
    hd = D // num_heads
    scale = hd ** -0.5
    q = x @ params["wq"]
    if sr_ratio > 1:
        s = sr_ratio
        Nk = (H // s) * (W // s)
        xp = (x.reshape(B, H // s, s, W // s, s, D)
                .transpose(0, 1, 3, 2, 4, 5)
                .reshape(B, Nk, s * s * D))
        xs = xp @ params["wsr"] + params["bsr"]
        mu = jnp.mean(xs, axis=-1, keepdims=True)
        var = jnp.mean((xs - mu) ** 2, axis=-1, keepdims=True)
        xs = (xs - mu) * jax.lax.rsqrt(var + eps)
        xs = xs * params["gamma"] + params["beta"]
    else:
        xs = x
        Nk = N
    k = xs @ params["wk"]
    v = xs @ params["wv"]
    qh = q.reshape(B, N, num_heads, hd).transpose(0, 2, 1, 3)
    kh = k.reshape(B, Nk, num_heads, hd).transpose(0, 2, 1, 3)
    vh = v.reshape(B, Nk, num_heads, hd).transpose(0, 2, 1, 3)
    attn = jnp.einsum("bhnd,bhmd->bhnm", qh, kh) * scale
    attn = jax.nn.softmax(attn, axis=-1)
    out = jnp.einsum("bhnm,bhmd->bhnd", attn, vh)
    out = out.transpose(0, 2, 1, 3).reshape(B, N, D)
    return out @ params["wproj"] + params["bproj"]


def init_params(key, D, sr_ratio):
    ks = jax.random.split(key, 7)
    p = {
        "wq": 0.05 * jax.random.normal(ks[0], (D, D), jnp.float32),
        "wk": 0.05 * jax.random.normal(ks[1], (D, D), jnp.float32),
        "wv": 0.05 * jax.random.normal(ks[2], (D, D), jnp.float32),
        "wproj": 0.05 * jax.random.normal(ks[3], (D, D), jnp.float32),
        "bproj": 0.05 * jax.random.normal(ks[4], (1, D), jnp.float32),
    }
    if sr_ratio > 1:
        P = sr_ratio * sr_ratio * D
        p["wsr"] = 0.05 * jax.random.normal(ks[5], (P, D), jnp.float32)
        p["bsr"] = 0.05 * jax.random.normal(ks[6], (1, D), jnp.float32)
        p["gamma"] = jnp.ones((1, D), jnp.float32)
        p["beta"] = jnp.zeros((1, D), jnp.float32)
    return p


if __name__ == "__main__":
    B, H, W, D, num_heads = 2, 16, 16, 32, 4
    N = H * W

    key = jax.random.PRNGKey(0)
    kx, kp1, kp2 = jax.random.split(key, 3)
    x = jax.random.normal(kx, (B, N, D), jnp.float32)

    # sr_ratio=2 exercises the conv-as-matmul + LayerNorm + Nk padding path;
    # sr_ratio=1 exercises the plain self-attention path.  Tolerance is set
    # for bf16 MXU operands (f32 accumulation, EUP approx reciprocal) vs. the
    # f32 reference.
    for sr_ratio, kp in ((2, kp1), (1, kp2)):
        params = init_params(kp, D, sr_ratio)
        out = sra_forward(x, H, W, params, num_heads=num_heads,
                          sr_ratio=sr_ratio)
        out = jax.block_until_ready(out)
        assert out.shape == (B, N, D)
        ref = sra_reference(x, H, W, params, num_heads=num_heads,
                            sr_ratio=sr_ratio)
        max_err = float(jnp.max(jnp.abs(out - ref)))
        assert bool(jnp.allclose(out, ref, atol=2e-2, rtol=2e-2)), (
            sr_ratio, max_err)

    print("KERNEL_OK")
</pallas_src>

<mosaic_0001>
module attributes {stable_mosaic.version = 11 : i64} {
  func.func @probe_kernel(%arg0: i32, %arg1: memref<8x128xf32, #tpu.memory_space<vmem>>, %arg2: memref<8x128xf32, #tpu.memory_space<vmem>>, %arg3: memref<8x128xf32, #tpu.memory_space<vmem>>) attributes {dimension_semantics = [#tpu.dimension_semantics<arbitrary>], iteration_bounds = array<i64: 2>, scalar_prefetch = 0 : i64, scratch_operands = 0 : i64, tpu.core_type = #tpu.core_type<tc>, window_params = [{pipeline_mode = #tpu.pipeline_mode<synchronous>, transform_indices = @transform_0, window_bounds = array<i64: 8, 128>}, {transform_indices = @transform_1, window_bounds = array<i64: 8, 128>}, {transform_indices = @transform_2, window_bounds = array<i64: 8, 128>}]} {
    %c0 = arith.constant 0 : index
    %c0_0 = arith.constant 0 : index
    %0 = vector.load %arg2[%c0, %c0_0] : memref<8x128xf32, #tpu.memory_space<vmem>>, vector<8x128xf32>
    %c0_1 = arith.constant 0 : index
    %c0_2 = arith.constant 0 : index
    %1 = vector.load %arg1[%c0_1, %c0_2] : memref<8x128xf32, #tpu.memory_space<vmem>>, vector<8x128xf32>
    %2 = arith.addf %0, %1 : vector<8x128xf32>
    %c0_3 = arith.constant 0 : index
    %c0_4 = arith.constant 0 : index
    %3 = vector.load %arg3[%c0_3, %c0_4] : memref<8x128xf32, #tpu.memory_space<vmem>>, vector<8x128xf32>
    tpu.vector_store %arg3[%c0_3, %c0_4], %2 {strides = array<i32>} : memref<8x128xf32, #tpu.memory_space<vmem>>, vector<8x128xf32>,
    return
  }
  func.func @transform_0(%arg0: i32) -> (i32, i32) {
    %c0_i32 = arith.constant 0 : i32
    %c0_i32_0 = arith.constant 0 : i32
    %c0_i32_1 = arith.constant 0 : i32
    return %c0_i32, %c0_i32_0 : i32, i32
  }
  func.func @transform_1(%arg0: i32) -> (i32, i32) {
    %c0_i32 = arith.constant 0 : i32
    %c0_i32_0 = arith.constant 0 : i32
    return %arg0, %c0_i32 : i32, i32
  }
  func.func @transform_2(%arg0: i32) -> (i32, i32) {
    %c0_i32 = arith.constant 0 : i32
    %c0_i32_0 = arith.constant 0 : i32
    return %arg0, %c0_i32 : i32, i32
  }
}

module attributes {stable_mosaic.version = 11 : i64} {
  func.func @kernel(%arg0: i32, %arg1: i32, %arg2: memref<1x128x32xbf16, #tpu.memory_space<vmem>>, %arg3: memref<1x128x128xbf16, #tpu.memory_space<vmem>>, %arg4: memref<32x32xbf16, #tpu.memory_space<vmem>>, %arg5: memref<32x64xbf16, #tpu.memory_space<vmem>>, %arg6: memref<128x32xbf16, #tpu.memory_space<vmem>>, %arg7: memref<1x32xf32, #tpu.memory_space<vmem>>, %arg8: memref<1x32xf32, #tpu.memory_space<vmem>>, %arg9: memref<1x32xf32, #tpu.memory_space<vmem>>, %arg10: memref<32x32xbf16, #tpu.memory_space<vmem>>, %arg11: memref<1x32xf32, #tpu.memory_space<vmem>>, %arg12: memref<1x128x32xf32, #tpu.memory_space<vmem>>, %arg13: memref<128x32xbf16, #tpu.memory_space<vmem>>, %arg14: memref<4x128x32xbf16, #tpu.memory_space<vmem>>) attributes {dimension_semantics = [#tpu.dimension_semantics<parallel>, #tpu.dimension_semantics<arbitrary>], iteration_bounds = array<i64: 2, 2>, scalar_prefetch = 0 : i64, scratch_operands = 2 : i64, tpu.core_type = #tpu.core_type<tc>, window_params = [{transform_indices = @transform_0, window_bounds = array<i64: 1, 128, 32>}, {transform_indices = @transform_1, window_bounds = array<i64: 1, 128, 128>}, {pipeline_mode = #tpu.pipeline_mode<synchronous>, transform_indices = @transform_2, window_bounds = array<i64: 32, 32>}, {pipeline_mode = #tpu.pipeline_mode<synchronous>, transform_indices = @transform_3, window_bounds = array<i64: 32, 64>}, {pipeline_mode = #tpu.pipeline_mode<synchronous>, transform_indices = @transform_4, window_bounds = array<i64: 128, 32>}, {pipeline_mode = #tpu.pipeline_mode<synchronous>, transform_indices = @transform_5, window_bounds = array<i64: 1, 32>}, {pipeline_mode = #tpu.pipeline_mode<synchronous>, transform_indices = @transform_6, window_bounds = array<i64: 1, 32>}, {pipeline_mode = #tpu.pipeline_mode<synchronous>, transform_indices = @transform_7, window_bounds = array<i64: 1, 32>}, {pipeline_mode = #tpu.pipeline_mode<synchronous>, transform_indices = @transform_8, window_bounds = array<i64: 32, 32>}, {pipeline_mode = #tpu.pipeline_mode<synchronous>, transform_indices = @transform_9, window_bounds = array<i64: 1, 32>}, {transform_indices = @transform_10, window_bounds = array<i64: 1, 128, 32>}]} {
    %c0_i32 = arith.constant 0 : i32
    %0 = arith.cmpi eq, %arg1, %c0_i32 : i32
    %1 = arith.extui %0 : i1 to i32
    %c0_i32_0 = arith.constant 0 : i32
    %2 = arith.cmpi ne, %1, %c0_i32_0 : i32
    scf.if %2 {
      %c0_44 = arith.constant 0 : index
      %c0_45 = arith.constant 0 : index
      %c0_46 = arith.constant 0 : index
      %96 = vector.load %arg3[%c0_44, %c0_45, %c0_46] : memref<1x128x128xbf16, #tpu.memory_space<vmem>>, vector<1x128x128xbf16>
      %97 = vector.shape_cast %96 : vector<1x128x128xbf16> to vector<128x128xbf16>
      %c0_47 = arith.constant 0 : index
      %c0_48 = arith.constant 0 : index
      %98 = vector.load %arg6[%c0_47, %c0_48] : memref<128x32xbf16, #tpu.memory_space<vmem>>, vector<128x32xbf16>
      %cst_49 = arith.constant dense<0.000000e+00> : vector<128x32xf32>
      %99 = tpu.matmul %97, %98, %cst_49 {dimension_numbers = #tpu.dot_dimension_numbers<[1], [0], [0], [1], [0, 0, 1, 1], [], []>} : vector<128x128xbf16>, vector<128x32xbf16>, vector<128x32xf32> -> vector<128x32xf32>
      %c0_50 = arith.constant 0 : index
      %c0_51 = arith.constant 0 : index
      %100 = vector.load %arg7[%c0_50, %c0_51] : memref<1x32xf32, #tpu.memory_space<vmem>>, vector<1x32xf32>
      %101 = vector.broadcast %100 : vector<1x32xf32> to vector<128x32xf32>
      %102 = arith.addf %99, %101 : vector<128x32xf32>
      %cst_52 = arith.constant dense<0.000000e+00> : vector<128xf32>
      %103 = vector.multi_reduction <add>, %102, %cst_52 [1] : vector<128x32xf32> to vector<128xf32>
      %104 = vector.shape_cast %103 : vector<128xf32> to vector<128x1xf32>
      %cst_53 = arith.constant 3.200000e+01 : f32
      %105 = vector.broadcast %cst_53 : f32 to vector<128x1xf32>
      %106 = arith.divf %104, %105 : vector<128x1xf32>
      %107 = vector.broadcast %106 : vector<128x1xf32> to vector<128x32xf32>
      %108 = arith.subf %102, %107 : vector<128x32xf32>
      %109 = arith.mulf %108, %108 : vector<128x32xf32>
      %cst_54 = arith.constant dense<0.000000e+00> : vector<128xf32>
      %110 = vector.multi_reduction <add>, %109, %cst_54 [1] : vector<128x32xf32> to vector<128xf32>
      %111 = vector.shape_cast %110 : vector<128xf32> to vector<128x1xf32>
      %cst_55 = arith.constant 3.200000e+01 : f32
      %112 = vector.broadcast %cst_55 : f32 to vector<128x1xf32>
      %113 = arith.divf %111, %112 : vector<128x1xf32>
      %114 = vector.broadcast %106 : vector<128x1xf32> to vector<128x32xf32>
      %115 = arith.subf %102, %114 : vector<128x32xf32>
      %cst_56 = arith.constant 9.99999974E-6 : f32
      %116 = vector.broadcast %cst_56 : f32 to vector<128x1xf32>
      %117 = arith.addf %113, %116 : vector<128x1xf32>
      %118 = math.rsqrt %117 : vector<128x1xf32>
      %119 = vector.broadcast %118 : vector<128x1xf32> to vector<128x32xf32>
      %120 = arith.mulf %115, %119 : vector<128x32xf32>
      %c0_57 = arith.constant 0 : index
      %c0_58 = arith.constant 0 : index
      %121 = vector.load %arg8[%c0_57, %c0_58] : memref<1x32xf32, #tpu.memory_space<vmem>>, vector<1x32xf32>
      %122 = vector.broadcast %121 : vector<1x32xf32> to vector<128x32xf32>
      %123 = arith.mulf %120, %122 : vector<128x32xf32>
      %c0_59 = arith.constant 0 : index
      %c0_60 = arith.constant 0 : index
      %124 = vector.load %arg9[%c0_59, %c0_60] : memref<1x32xf32, #tpu.memory_space<vmem>>, vector<1x32xf32>
      %125 = vector.broadcast %124 : vector<1x32xf32> to vector<128x32xf32>
      %126 = arith.addf %123, %125 : vector<128x32xf32>
      %127 = arith.truncf %126 : vector<128x32xf32> to vector<128x32xbf16>
      %c0_61 = arith.constant 0 : index
      %c0_62 = arith.constant 0 : index
      %128 = vector.load %arg5[%c0_61, %c0_62] : memref<32x64xbf16, #tpu.memory_space<vmem>>, vector<32x64xbf16>
      %cst_63 = arith.constant dense<0.000000e+00> : vector<128x64xf32>
      %129 = tpu.matmul %127, %128, %cst_63 {dimension_numbers = #tpu.dot_dimension_numbers<[1], [0], [0], [1], [0, 0, 1, 1], [], []>} : vector<128x32xbf16>, vector<32x64xbf16>, vector<128x64xf32> -> vector<128x64xf32>
      %130 = vector.extract_strided_slice %129 {offsets = [0, 0], sizes = [128, 32], strides = [1, 1]} : vector<128x64xf32> to vector<128x32xf32>
      %131 = arith.truncf %130 : vector<128x32xf32> to vector<128x32xbf16>
      %c0_64 = arith.constant 0 : index
      %c0_65 = arith.constant 0 : index
      %132 = vector.load %arg13[%c0_64, %c0_65] : memref<128x32xbf16, #tpu.memory_space<vmem>>, vector<128x32xbf16>
      tpu.vector_store %arg13[%c0_64, %c0_65], %131 {strides = array<i32>} : memref<128x32xbf16, #tpu.memory_space<vmem>>, vector<128x32xbf16>,
      %133 = vector.extract_strided_slice %129 {offsets = [0, 32], sizes = [128, 32], strides = [1, 1]} : vector<128x64xf32> to vector<128x32xf32>
      %134 = arith.truncf %133 : vector<128x32xf32> to vector<128x32xbf16>
      %135 = vector.extract_strided_slice %134 {offsets = [0, 0], sizes = [128, 8], strides = [1, 1]} : vector<128x32xbf16> to vector<128x8xbf16>
      %c0_66 = arith.constant 0 : index
      %c0_67 = arith.constant 0 : index
      %136 = vector.load %arg10[%c0_66, %c0_67] : memref<32x32xbf16, #tpu.memory_space<vmem>>, vector<8x32xbf16>
      %cst_68 = arith.constant dense<0.000000e+00> : vector<128x32xf32>
      %137 = tpu.matmul %135, %136, %cst_68 {dimension_numbers = #tpu.dot_dimension_numbers<[1], [0], [0], [1], [0, 0, 1, 1], [], []>} : vector<128x8xbf16>, vector<8x32xbf16>, vector<128x32xf32> -> vector<128x32xf32>
      %138 = arith.truncf %137 : vector<128x32xf32> to vector<128x32xbf16>
      %c0_69 = arith.constant 0 : index
      %c0_70 = arith.constant 0 : index
      %c0_71 = arith.constant 0 : index
      %139 = vector.load %arg14[%c0_69, %c0_70, %c0_71] : memref<4x128x32xbf16, #tpu.memory_space<vmem>>, vector<1x128x32xbf16>
      %140 = vector.shape_cast %139 : vector<1x128x32xbf16> to vector<128x32xbf16>
      %141 = vector.shape_cast %138 : vector<128x32xbf16> to vector<1x128x32xbf16>
      tpu.vector_store %arg14[%c0_69, %c0_70, %c0_71], %141 {strides = array<i32>} : memref<4x128x32xbf16, #tpu.memory_space<vmem>>, vector<1x128x32xbf16>,
      %142 = vector.extract_strided_slice %134 {offsets = [0, 8], sizes = [128, 8], strides = [1, 1]} : vector<128x32xbf16> to vector<128x8xbf16>
      %c8_72 = arith.constant 8 : index
      %c0_73 = arith.constant 0 : index
      %143 = vector.load %arg10[%c8_72, %c0_73] : memref<32x32xbf16, #tpu.memory_space<vmem>>, vector<8x32xbf16>
      %cst_74 = arith.constant dense<0.000000e+00> : vector<128x32xf32>
      %144 = tpu.matmul %142, %143, %cst_74 {dimension_numbers = #tpu.dot_dimension_numbers<[1], [0], [0], [1], [0, 0, 1, 1], [], []>} : vector<128x8xbf16>, vector<8x32xbf16>, vector<128x32xf32> -> vector<128x32xf32>
      %145 = arith.truncf %144 : vector<128x32xf32> to vector<128x32xbf16>
      %c1_75 = arith.constant 1 : index
      %c0_76 = arith.constant 0 : index
      %c0_77 = arith.constant 0 : index
      %146 = vector.load %arg14[%c1_75, %c0_76, %c0_77] : memref<4x128x32xbf16, #tpu.memory_space<vmem>>, vector<1x128x32xbf16>
      %147 = vector.shape_cast %146 : vector<1x128x32xbf16> to vector<128x32xbf16>
      %148 = vector.shape_cast %145 : vector<128x32xbf16> to vector<1x128x32xbf16>
      tpu.vector_store %arg14[%c1_75, %c0_76, %c0_77], %148 {strides = array<i32>} : memref<4x128x32xbf16, #tpu.memory_space<vmem>>, vector<1x128x32xbf16>,
      %149 = vector.extract_strided_slice %134 {offsets = [0, 16], sizes = [128, 8], strides = [1, 1]} : vector<128x32xbf16> to vector<128x8xbf16>
      %c16_78 = arith.constant 16 : index
      %c0_79 = arith.constant 0 : index
      %150 = vector.load %arg10[%c16_78, %c0_79] : memref<32x32xbf16, #tpu.memory_space<vmem>>, vector<8x32xbf16>
      %cst_80 = arith.constant dense<0.000000e+00> : vector<128x32xf32>
      %151 = tpu.matmul %149, %150, %cst_80 {dimension_numbers = #tpu.dot_dimension_numbers<[1], [0], [0], [1], [0, 0, 1, 1], [], []>} : vector<128x8xbf16>, vector<8x32xbf16>, vector<128x32xf32> -> vector<128x32xf32>
      %152 = arith.truncf %151 : vector<128x32xf32> to vector<128x32xbf16>
      %c2_81 = arith.constant 2 : index
      %c0_82 = arith.constant 0 : index
      %c0_83 = arith.constant 0 : index
      %153 = vector.load %arg14[%c2_81, %c0_82, %c0_83] : memref<4x128x32xbf16, #tpu.memory_space<vmem>>, vector<1x128x32xbf16>
      %154 = vector.shape_cast %153 : vector<1x128x32xbf16> to vector<128x32xbf16>
      %155 = vector.shape_cast %152 : vector<128x32xbf16> to vector<1x128x32xbf16>
      tpu.vector_store %arg14[%c2_81, %c0_82, %c0_83], %155 {strides = array<i32>} : memref<4x128x32xbf16, #tpu.memory_space<vmem>>, vector<1x128x32xbf16>,
      %156 = vector.extract_strided_slice %134 {offsets = [0, 24], sizes = [128, 8], strides = [1, 1]} : vector<128x32xbf16> to vector<128x8xbf16>
      %c24_84 = arith.constant 24 : index
      %c0_85 = arith.constant 0 : index
      %157 = vector.load %arg10[%c24_84, %c0_85] : memref<32x32xbf16, #tpu.memory_space<vmem>>, vector<8x32xbf16>
      %cst_86 = arith.constant dense<0.000000e+00> : vector<128x32xf32>
      %158 = tpu.matmul %156, %157, %cst_86 {dimension_numbers = #tpu.dot_dimension_numbers<[1], [0], [0], [1], [0, 0, 1, 1], [], []>} : vector<128x8xbf16>, vector<8x32xbf16>, vector<128x32xf32> -> vector<128x32xf32>
      %159 = arith.truncf %158 : vector<128x32xf32> to vector<128x32xbf16>
      %c3_87 = arith.constant 3 : index
      %c0_88 = arith.constant 0 : index
      %c0_89 = arith.constant 0 : index
      %160 = vector.load %arg14[%c3_87, %c0_88, %c0_89] : memref<4x128x32xbf16, #tpu.memory_space<vmem>>, vector<1x128x32xbf16>
      %161 = vector.shape_cast %160 : vector<1x128x32xbf16> to vector<128x32xbf16>
      %162 = vector.shape_cast %159 : vector<128x32xbf16> to vector<1x128x32xbf16>
      tpu.vector_store %arg14[%c3_87, %c0_88, %c0_89], %162 {strides = array<i32>} : memref<4x128x32xbf16, #tpu.memory_space<vmem>>, vector<1x128x32xbf16>,
    } else {
    }
    %c0 = arith.constant 0 : index
    %c0_1 = arith.constant 0 : index
    %c0_2 = arith.constant 0 : index
    %3 = vector.load %arg2[%c0, %c0_1, %c0_2] : memref<1x128x32xbf16, #tpu.memory_space<vmem>>, vector<1x128x32xbf16>
    %4 = vector.shape_cast %3 : vector<1x128x32xbf16> to vector<128x32xbf16>
    %c0_3 = arith.constant 0 : index
    %c0_4 = arith.constant 0 : index
    %5 = vector.load %arg4[%c0_3, %c0_4] : memref<32x32xbf16, #tpu.memory_space<vmem>>, vector<32x32xbf16>
    %cst = arith.constant dense<0.000000e+00> : vector<128x32xf32>
    %6 = tpu.matmul %4, %5, %cst {dimension_numbers = #tpu.dot_dimension_numbers<[1], [0], [0], [1], [0, 0, 1, 1], [], []>} : vector<128x32xbf16>, vector<32x32xbf16>, vector<128x32xf32> -> vector<128x32xf32>
    %7 = arith.truncf %6 : vector<128x32xf32> to vector<128x32xbf16>
    %8 = tpu.iota {dimensions = array<i32: 1>} : vector<128x128xi32>
    %c64_i32 = arith.constant 64 : i32
    %9 = vector.broadcast %c64_i32 : i32 to vector<128x128xi32>
    %10 = arith.cmpi sge, %8, %9 : vector<128x128xi32>
    %11 = vector.extract_strided_slice %7 {offsets = [0, 0], sizes = [128, 8], strides = [1, 1]} : vector<128x32xbf16> to vector<128x8xbf16>
    %c0_5 = arith.constant 0 : index
    %c0_6 = arith.constant 0 : index
    %12 = vector.load %arg13[%c0_5, %c0_6] : memref<128x32xbf16, #tpu.memory_space<vmem>>, vector<128x8xbf16>
    %cst_7 = arith.constant dense<0.000000e+00> : vector<128x128xf32>
    %13 = tpu.matmul %11, %12, %cst_7 {dimension_numbers = #tpu.dot_dimension_numbers<[1], [1], [0], [0], [0, 0, 1, 0], [], []>} : vector<128x8xbf16>, vector<128x8xbf16>, vector<128x128xf32> -> vector<128x128xf32>
    %cst_8 = arith.constant -1.000000e+30 : f32
    %14 = vector.broadcast %cst_8 : f32 to vector<128x128xf32>
    %15 = arith.select %10, %14, %13 : vector<128x128xi1>, vector<128x128xf32>
    %cst_9 = arith.constant dense<0xFF800000> : vector<128xf32>
    %16 = vector.multi_reduction <maximumf>, %15, %cst_9 [1] : vector<128x128xf32> to vector<128xf32>
    %17 = vector.shape_cast %16 : vector<128xf32> to vector<128x1xf32>
    %18 = vector.broadcast %17 : vector<128x1xf32> to vector<128x128xf32>
    %19 = arith.subf %15, %18 : vector<128x128xf32>
    %20 = math.exp %19 : vector<128x128xf32>
    %cst_10 = arith.constant dense<0.000000e+00> : vector<128xf32>
    %21 = vector.multi_reduction <add>, %20, %cst_10 [1] : vector<128x128xf32> to vector<128xf32>
    %22 = vector.shape_cast %21 : vector<128xf32> to vector<128x1xf32>
    %23 = tpu.reciprocal %22 {approx = true} : vector<128x1xf32> -> vector<128x1xf32>
    %24 = vector.broadcast %23 : vector<128x1xf32> to vector<128x128xf32>
    %25 = arith.mulf %20, %24 : vector<128x128xf32>
    %26 = arith.truncf %25 : vector<128x128xf32> to vector<128x128xbf16>
    %c0_11 = arith.constant 0 : index
    %c0_12 = arith.constant 0 : index
    %c0_13 = arith.constant 0 : index
    %27 = vector.load %arg14[%c0_11, %c0_12, %c0_13] : memref<4x128x32xbf16, #tpu.memory_space<vmem>>, vector<1x128x32xbf16>
    %28 = vector.shape_cast %27 : vector<1x128x32xbf16> to vector<128x32xbf16>
    %cst_14 = arith.constant dense<0.000000e+00> : vector<128x32xf32>
    %29 = tpu.matmul %26, %28, %cst_14 {dimension_numbers = #tpu.dot_dimension_numbers<[1], [0], [0], [1], [0, 0, 1, 1], [], []>} : vector<128x128xbf16>, vector<128x32xbf16>, vector<128x32xf32> -> vector<128x32xf32>
    %30 = vector.extract_strided_slice %7 {offsets = [0, 8], sizes = [128, 8], strides = [1, 1]} : vector<128x32xbf16> to vector<128x8xbf16>
    %c0_15 = arith.constant 0 : index
    %c8 = arith.constant 8 : index
    %31 = vector.load %arg13[%c0_15, %c8] : memref<128x32xbf16, #tpu.memory_space<vmem>>, vector<128x8xbf16>
    %cst_16 = arith.constant dense<0.000000e+00> : vector<128x128xf32>
    %32 = tpu.matmul %30, %31, %cst_16 {dimension_numbers = #tpu.dot_dimension_numbers<[1], [1], [0], [0], [0, 0, 1, 0], [], []>} : vector<128x8xbf16>, vector<128x8xbf16>, vector<128x128xf32> -> vector<128x128xf32>
    %cst_17 = arith.constant -1.000000e+30 : f32
    %33 = vector.broadcast %cst_17 : f32 to vector<128x128xf32>
    %34 = arith.select %10, %33, %32 : vector<128x128xi1>, vector<128x128xf32>
    %cst_18 = arith.constant dense<0xFF800000> : vector<128xf32>
    %35 = vector.multi_reduction <maximumf>, %34, %cst_18 [1] : vector<128x128xf32> to vector<128xf32>
    %36 = vector.shape_cast %35 : vector<128xf32> to vector<128x1xf32>
    %37 = vector.broadcast %36 : vector<128x1xf32> to vector<128x128xf32>
    %38 = arith.subf %34, %37 : vector<128x128xf32>
    %39 = math.exp %38 : vector<128x128xf32>
    %cst_19 = arith.constant dense<0.000000e+00> : vector<128xf32>
    %40 = vector.multi_reduction <add>, %39, %cst_19 [1] : vector<128x128xf32> to vector<128xf32>
    %41 = vector.shape_cast %40 : vector<128xf32> to vector<128x1xf32>
    %42 = tpu.reciprocal %41 {approx = true} : vector<128x1xf32> -> vector<128x1xf32>
    %43 = vector.broadcast %42 : vector<128x1xf32> to vector<128x128xf32>
    %44 = arith.mulf %39, %43 : vector<128x128xf32>
    %45 = arith.truncf %44 : vector<128x128xf32> to vector<128x128xbf16>
    %c1 = arith.constant 1 : index
    %c0_20 = arith.constant 0 : index
    %c0_21 = arith.constant 0 : index
    %46 = vector.load %arg14[%c1, %c0_20, %c0_21] : memref<4x128x32xbf16, #tpu.memory_space<vmem>>, vector<1x128x32xbf16>
    %47 = vector.shape_cast %46 : vector<1x128x32xbf16> to vector<128x32xbf16>
    %cst_22 = arith.constant dense<0.000000e+00> : vector<128x32xf32>
    %48 = tpu.matmul %45, %47, %cst_22 {dimension_numbers = #tpu.dot_dimension_numbers<[1], [0], [0], [1], [0, 0, 1, 1], [], []>} : vector<128x128xbf16>, vector<128x32xbf16>, vector<128x32xf32> -> vector<128x32xf32>
    %49 = arith.addf %29, %48 : vector<128x32xf32>
    %50 = vector.extract_strided_slice %7 {offsets = [0, 16], sizes = [128, 8], strides = [1, 1]} : vector<128x32xbf16> to vector<128x8xbf16>
    %c0_23 = arith.constant 0 : index
    %c16 = arith.constant 16 : index
    %51 = vector.load %arg13[%c0_23, %c16] : memref<128x32xbf16, #tpu.memory_space<vmem>>, vector<128x8xbf16>
    %cst_24 = arith.constant dense<0.000000e+00> : vector<128x128xf32>
    %52 = tpu.matmul %50, %51, %cst_24 {dimension_numbers = #tpu.dot_dimension_numbers<[1], [1], [0], [0], [0, 0, 1, 0], [], []>} : vector<128x8xbf16>, vector<128x8xbf16>, vector<128x128xf32> -> vector<128x128xf32>
    %cst_25 = arith.constant -1.000000e+30 : f32
    %53 = vector.broadcast %cst_25 : f32 to vector<128x128xf32>
    %54 = arith.select %10, %53, %52 : vector<128x128xi1>, vector<128x128xf32>
    %cst_26 = arith.constant dense<0xFF800000> : vector<128xf32>
    %55 = vector.multi_reduction <maximumf>, %54, %cst_26 [1] : vector<128x128xf32> to vector<128xf32>
    %56 = vector.shape_cast %55 : vector<128xf32> to vector<128x1xf32>
    %57 = vector.broadcast %56 : vector<128x1xf32> to vector<128x128xf32>
    %58 = arith.subf %54, %57 : vector<128x128xf32>
    %59 = math.exp %58 : vector<128x128xf32>
    %cst_27 = arith.constant dense<0.000000e+00> : vector<128xf32>
    %60 = vector.multi_reduction <add>, %59, %cst_27 [1] : vector<128x128xf32> to vector<128xf32>
    %61 = vector.shape_cast %60 : vector<128xf32> to vector<128x1xf32>
    %62 = tpu.reciprocal %61 {approx = true} : vector<128x1xf32> -> vector<128x1xf32>
    %63 = vector.broadcast %62 : vector<128x1xf32> to vector<128x128xf32>
    %64 = arith.mulf %59, %63 : vector<128x128xf32>
    %65 = arith.truncf %64 : vector<128x128xf32> to vector<128x128xbf16>
    %c2 = arith.constant 2 : index
    %c0_28 = arith.constant 0 : index
    %c0_29 = arith.constant 0 : index
    %66 = vector.load %arg14[%c2, %c0_28, %c0_29] : memref<4x128x32xbf16, #tpu.memory_space<vmem>>, vector<1x128x32xbf16>
    %67 = vector.shape_cast %66 : vector<1x128x32xbf16> to vector<128x32xbf16>
    %cst_30 = arith.constant dense<0.000000e+00> : vector<128x32xf32>
    %68 = tpu.matmul %65, %67, %cst_30 {dimension_numbers = #tpu.dot_dimension_numbers<[1], [0], [0], [1], [0, 0, 1, 1], [], []>} : vector<128x128xbf16>, vector<128x32xbf16>, vector<128x32xf32> -> vector<128x32xf32>
    %69 = arith.addf %49, %68 : vector<128x32xf32>
    %70 = vector.extract_strided_slice %7 {offsets = [0, 24], sizes = [128, 8], strides = [1, 1]} : vector<128x32xbf16> to vector<128x8xbf16>
    %c0_31 = arith.constant 0 : index
    %c24 = arith.constant 24 : index
    %71 = vector.load %arg13[%c0_31, %c24] : memref<128x32xbf16, #tpu.memory_space<vmem>>, vector<128x8xbf16>
    %cst_32 = arith.constant dense<0.000000e+00> : vector<128x128xf32>
    %72 = tpu.matmul %70, %71, %cst_32 {dimension_numbers = #tpu.dot_dimension_numbers<[1], [1], [0], [0], [0, 0, 1, 0], [], []>} : vector<128x8xbf16>, vector<128x8xbf16>, vector<128x128xf32> -> vector<128x128xf32>
    %cst_33 = arith.constant -1.000000e+30 : f32
    %73 = vector.broadcast %cst_33 : f32 to vector<128x128xf32>
    %74 = arith.select %10, %73, %72 : vector<128x128xi1>, vector<128x128xf32>
    %cst_34 = arith.constant dense<0xFF800000> : vector<128xf32>
    %75 = vector.multi_reduction <maximumf>, %74, %cst_34 [1] : vector<128x128xf32> to vector<128xf32>
    %76 = vector.shape_cast %75 : vector<128xf32> to vector<128x1xf32>
    %77 = vector.broadcast %76 : vector<128x1xf32> to vector<128x128xf32>
    %78 = arith.subf %74, %77 : vector<128x128xf32>
    %79 = math.exp %78 : vector<128x128xf32>
    %cst_35 = arith.constant dense<0.000000e+00> : vector<128xf32>
    %80 = vector.multi_reduction <add>, %79, %cst_35 [1] : vector<128x128xf32> to vector<128xf32>
    %81 = vector.shape_cast %80 : vector<128xf32> to vector<128x1xf32>
    %82 = tpu.reciprocal %81 {approx = true} : vector<128x1xf32> -> vector<128x1xf32>
    %83 = vector.broadcast %82 : vector<128x1xf32> to vector<128x128xf32>
    %84 = arith.mulf %79, %83 : vector<128x128xf32>
    %85 = arith.truncf %84 : vector<128x128xf32> to vector<128x128xbf16>
    %c3 = arith.constant 3 : index
    %c0_36 = arith.constant 0 : index
    %c0_37 = arith.constant 0 : index
    %86 = vector.load %arg14[%c3, %c0_36, %c0_37] : memref<4x128x32xbf16, #tpu.memory_space<vmem>>, vector<1x128x32xbf16>
    %87 = vector.shape_cast %86 : vector<1x128x32xbf16> to vector<128x32xbf16>
    %cst_38 = arith.constant dense<0.000000e+00> : vector<128x32xf32>
    %88 = tpu.matmul %85, %87, %cst_38 {dimension_numbers = #tpu.dot_dimension_numbers<[1], [0], [0], [1], [0, 0, 1, 1], [], []>} : vector<128x128xbf16>, vector<128x32xbf16>, vector<128x32xf32> -> vector<128x32xf32>
    %89 = arith.addf %69, %88 : vector<128x32xf32>
    %c0_39 = arith.constant 0 : index
    %c0_40 = arith.constant 0 : index
    %90 = vector.load %arg11[%c0_39, %c0_40] : memref<1x32xf32, #tpu.memory_space<vmem>>, vector<1x32xf32>
    %91 = vector.broadcast %90 : vector<1x32xf32> to vector<128x32xf32>
    %92 = arith.addf %89, %91 : vector<128x32xf32>
    %c0_41 = arith.constant 0 : index
    %c0_42 = arith.constant 0 : index
    %c0_43 = arith.constant 0 : index
    %93 = vector.load %arg12[%c0_41, %c0_42, %c0_43] : memref<1x128x32xf32, #tpu.memory_space<vmem>>, vector<1x128x32xf32>
    %94 = vector.shape_cast %93 : vector<1x128x32xf32> to vector<128x32xf32>
    %95 = vector.shape_cast %92 : vector<128x32xf32> to vector<1x128x32xf32>
    tpu.vector_store %arg12[%c0_41, %c0_42, %c0_43], %95 {strides = array<i32>} : memref<1x128x32xf32, #tpu.memory_space<vmem>>, vector<1x128x32xf32>,
    return
  }
  func.func @transform_0(%arg0: i32, %arg1: i32) -> (i32, i32, i32) {
    %c0_i32 = arith.constant 0 : i32
    %c0_i32_0 = arith.constant 0 : i32
    return %arg0, %arg1, %c0_i32 : i32, i32, i32
  }
  func.func @transform_1(%arg0: i32, %arg1: i32) -> (i32, i32, i32) {
    %c0_i32 = arith.constant 0 : i32
    %c0_i32_0 = arith.constant 0 : i32
    %c0_i32_1 = arith.constant 0 : i32
    return %arg0, %c0_i32, %c0_i32_0 : i32, i32, i32
  }
  func.func @transform_2(%arg0: i32, %arg1: i32) -> (i32, i32) {
    %c0_i32 = arith.constant 0 : i32
    %c0_i32_0 = arith.constant 0 : i32
    %c0_i32_1 = arith.constant 0 : i32
    return %c0_i32, %c0_i32_0 : i32, i32
  }
  func.func @transform_3(%arg0: i32, %arg1: i32) -> (i32, i32) {
    %c0_i32 = arith.constant 0 : i32
    %c0_i32_0 = arith.constant 0 : i32
    %c0_i32_1 = arith.constant 0 : i32
    return %c0_i32, %c0_i32_0 : i32, i32
  }
  func.func @transform_4(%arg0: i32, %arg1: i32) -> (i32, i32) {
    %c0_i32 = arith.constant 0 : i32
    %c0_i32_0 = arith.constant 0 : i32
    %c0_i32_1 = arith.constant 0 : i32
    return %c0_i32, %c0_i32_0 : i32, i32
  }
  func.func @transform_5(%arg0: i32, %arg1: i32) -> (i32, i32) {
    %c0_i32 = arith.constant 0 : i32
    %c0_i32_0 = arith.constant 0 : i32
    %c0_i32_1 = arith.constant 0 : i32
    return %c0_i32, %c0_i32_0 : i32, i32
  }
  func.func @transform_6(%arg0: i32, %arg1: i32) -> (i32, i32) {
    %c0_i32 = arith.constant 0 : i32
    %c0_i32_0 = arith.constant 0 : i32
    %c0_i32_1 = arith.constant 0 : i32
    return %c0_i32, %c0_i32_0 : i32, i32
  }
  func.func @transform_7(%arg0: i32, %arg1: i32) -> (i32, i32) {
    %c0_i32 = arith.constant 0 : i32
    %c0_i32_0 = arith.constant 0 : i32
    %c0_i32_1 = arith.constant 0 : i32
    return %c0_i32, %c0_i32_0 : i32, i32
  }
  func.func @transform_8(%arg0: i32, %arg1: i32) -> (i32, i32) {
    %c0_i32 = arith.constant 0 : i32
    %c0_i32_0 = arith.constant 0 : i32
    %c0_i32_1 = arith.constant 0 : i32
    return %c0_i32, %c0_i32_0 : i32, i32
  }
  func.func @transform_9(%arg0: i32, %arg1: i32) -> (i32, i32) {
    %c0_i32 = arith.constant 0 : i32
    %c0_i32_0 = arith.constant 0 : i32
    %c0_i32_1 = arith.constant 0 : i32
    return %c0_i32, %c0_i32_0 : i32, i32
  }
  func.func @transform_10(%arg0: i32, %arg1: i32) -> (i32, i32, i32) {
    %c0_i32 = arith.constant 0 : i32
    %c0_i32_0 = arith.constant 0 : i32
    return %arg0, %arg1, %c0_i32 : i32, i32, i32
  }
}

</mosaic_0001>

<llo_original>
// kernel: tpu_custom_call.1
$region0: #{tpu_custom_call.1}
  #allocation0 [shape = 'u32[]', space=smem, size = 0x4, offset = 0x4, fixed_abs, tag = 'smem constant byte address 0x4 - core index']
  #allocation1 [shape = 'u32[144,128]{1,0:T(1,128)}', space=vmem, size = 0x12000, scoped, tag = 'internal scratch']
  %s0 = inlined_call_operand.hbm [shape: f32[8,128], index: 0, kind: input, shape index: {}]
  %s1 = inlined_call_operand.hbm [shape: f32[16,128], index: 1, kind: input, shape index: {}]
  %s2 = inlined_call_operand.hbm [shape: f32[16,128], index: 2, kind: output, shape index: {}]
  %s3 = sld [smem:[#allocation0]]
  $region49: #{tpu_custom_call.1} parent=0
    _
  %s5 = ssub.s32 1, %s3
  %s6 = scalar_select 0, %s5, %s3
  $region1: #{tpu_custom_call.1} parent=0
    #allocation2 [shape = 'u8[4096]{0}', space=vmem, size = 0x1000, scoped, tag = 'input window, operand 0, single buffered']
    #allocation3 [shape = 's32[2]{0}', space=sflag, size = 0x8, scoped, tag = 'scoped memory for tpu_custom_call.1']
    #allocation4 [shape = 's32[2]{0}', space=sflag, size = 0x8, scoped, tag = 'scoped memory for tpu_custom_call.1']
    #allocation5 [shape = 'u8[8192]{0}', space=vmem, size = 0x2000, scoped, tag = 'input window, operand 1']
    #allocation6 [shape = 's32[2]{0}', space=sflag, size = 0x8, scoped, tag = 'scoped memory for tpu_custom_call.1']
    #allocation7 [shape = 'u8[8192]{0}', space=vmem, size = 0x2000, scoped, tag = 'output window, operand 0']
    %7 = vsyncpa [#allocation3], 0
    %8 = vsyncpa [#allocation6], 0
    %s9 = scalar_lea.sflag [#allocation6], 1
    %10 = vsyncpa %s9, 0
    %11 = vsyncpa [#allocation4], 0
    %s12 = scalar_lea.sflag [#allocation4], 1
    %13 = vsyncpa %s12, 0
    loop: start=0, step=1, limit=4
    $region2: #{tpu_custom_call.1} parent=1 // loop_pre_header
      _
    $region3: #{tpu_custom_call.1} parent=1 // loop_header
      %s15 = sphi 0, %s19
      %p16 = scmp.ge.s32.totalorder %s15, 4
      %s23 = sphi 0, %s23
      %s25 = sphi 0, %s23
      %s26 = sphi 0, %s25
      %s40 = sphi 0, %s26
      %s46 = sphi 0, %s48
      %s49 = sphi 0, %s46
      %s50 = sphi 0, %s49
      %s66 = sphi 0, %s50
      %s72 = sphi 0, %s74
      %s75 = sphi 0, %s72
      %s76 = sphi 0, %s75
      %s92 = sphi 0, %s76
    $region4: #{tpu_custom_call.1} parent=1 // loop_header_branch
      %18 = sbr.rel (%p16) target = $region8
    $region5: #{tpu_custom_call.1} parent=1 // loop_body
      %s20 = ssub.s32 %s15, 1
      %s21 = ssub.s32 %s15, 2
      %s22 = sadd.s32 %s15, 1
      %s24 = sadd.s32 %s23, 1
      %p27 = scmp.eq.s32.totalorder %s15, 1
      %p28 = scmp.ne.s32.totalorder %s23, %s25
      %p29 = scmp.eq.s32.totalorder %s15, 0
      %p30 = por %p28, %p29
      %p31 = scmp.ne.s32.totalorder %s23, %s25
      %p32 = scmp.eq.s32.totalorder %s20, 1
      %p33 = por %p31, %p32
      %p34 = scmp.ne.s32.totalorder %s25, %s26
      %p35 = scmp.eq.s32.totalorder %s20, 0
      %p36 = por %p34, %p35
      %p37 = scmp.ne.s32.totalorder %s25, %s26
      %p38 = scmp.eq.s32.totalorder %s21, 1
      %p39 = por %p37, %p38
      %p41 = scmp.ne.s32.totalorder %s26, %s40
      %p42 = scmp.eq.s32.totalorder %s21, 0
      %p43 = por %p41, %p42
      %s44 = ssub.s32 %s15, %s22
      %p45 = scmp.eq.s32.totalorder %s44, 0
      %s47 = sadd.s32 %s46, 1
      %s48 = scalar_select %p45, %s46, %s47
      %p51 = pneg %p45
      %p52 = scmp.eq.s32.totalorder %s15, 1
      %p53 = por %p51, %p52
      %p54 = scmp.ne.s32.totalorder %s46, %s49
      %p55 = scmp.eq.s32.totalorder %s15, 0
      %p56 = por %p54, %p55
      %p57 = scmp.ne.s32.totalorder %s46, %s49
      %p58 = scmp.eq.s32.totalorder %s20, 1
      %p59 = por %p57, %p58
      %p60 = scmp.ne.s32.totalorder %s49, %s50
      %p61 = scmp.eq.s32.totalorder %s20, 0
      %p62 = por %p60, %p61
      %p63 = scmp.ne.s32.totalorder %s49, %s50
      %p64 = scmp.eq.s32.totalorder %s21, 1
      %p65 = por %p63, %p64
      %p67 = scmp.ne.s32.totalorder %s50, %s66
      %p68 = scmp.eq.s32.totalorder %s21, 0
      %p69 = por %p67, %p68
      %s70 = ssub.s32 %s15, %s22
      %p71 = scmp.eq.s32.totalorder %s70, 0
      %s73 = sadd.s32 %s72, 1
      %s74 = scalar_select %p71, %s72, %s73
      %p77 = pneg %p71
      %p78 = scmp.eq.s32.totalorder %s15, 1
      %p79 = por %p77, %p78
      %p80 = scmp.ne.s32.totalorder %s72, %s75
      %p81 = scmp.eq.s32.totalorder %s15, 0
      %p82 = por %p80, %p81
      %p83 = scmp.ne.s32.totalorder %s72, %s75
      %p84 = scmp.eq.s32.totalorder %s20, 1
      %p85 = por %p83, %p84
      %p86 = scmp.ne.s32.totalorder %s75, %s76
      %p87 = scmp.eq.s32.totalorder %s20, 0
      %p88 = por %p86, %p87
      %p89 = scmp.ne.s32.totalorder %s75, %s76
      %p90 = scmp.eq.s32.totalorder %s21, 1
      %p91 = por %p89, %p90
      %p93 = scmp.ne.s32.totalorder %s76, %s92
      %p94 = scmp.eq.s32.totalorder %s21, 0
      %p95 = por %p93, %p94
      %p96 = scmp.le.s32.totalorder 1, %s15
      %p97 = scmp.lt.s32.totalorder %s15, 3
      %p98 = pnand %p96, %p97
      %p99 = pneg %p98
      // Predicated region
      $region9: #{tpu_custom_call.1} parent=5 // pred_check
        _
      $region10: #{tpu_custom_call.1} parent=5 // pred_check_branch
        %101 = sbr.rel (%p98) target = $region12
      $region11: #{tpu_custom_call.1} parent=5 // pred_region
        %s102 = ssub.s32 %s15, 1
        // Predicated region
        $region13: #{tpu_custom_call.1} parent=11 // pred_check
          %p103 = pneg %p36
        $region14: #{tpu_custom_call.1} parent=11 // pred_check_branch
          %105 = sbr.rel (%p103) target = $region16
        $region15: #{tpu_custom_call.1} parent=11 // pred_region
          %s107 = ssub.s32 128, 128
          %108 = vsyncadd [#allocation3], %s107
          %s110 = sshll.u32 [#allocation2], 4
          %s111 = int_to_ptr.vmem [resolvable:$true] %s110
          %113 = dma.hbm_to_vmem [thread:$0]  %s0, 128, %s111, [#allocation3]
        $region16: #{tpu_custom_call.1} parent=11 // pred_fallthru
          _
      $region12: #{tpu_custom_call.1} parent=5 // pred_fallthru
        _
      %p114 = scmp.lt.s32.totalorder %s15, 2
      // Predicated region
      $region17: #{tpu_custom_call.1} parent=5 // pred_check
        %p115 = pneg %p114
      $region18: #{tpu_custom_call.1} parent=5 // pred_check_branch
        %117 = sbr.rel (%p115) target = $region20
      $region19: #{tpu_custom_call.1} parent=5 // pred_region
        // Predicated region
        $region21: #{tpu_custom_call.1} parent=19 // pred_check
          %p118 = pneg %p56
        $region22: #{tpu_custom_call.1} parent=19 // pred_check_branch
          %120 = sbr.rel (%p118) target = $region24
        $region23: #{tpu_custom_call.1} parent=19 // pred_region
          %s121 = sand.u32 %s46, 1
          %s122 = scalar_lea.sflag [#allocation6], %s121
          %s123 = sand.u32 %s46, 1
          %s124 = smul.addr %s123, 8
          %s125 = scalar_lea.vmem [#allocation5], %s124
          %s127 = ssub.s32 128, 128
          %128 = vsyncadd %s122, %s127
          %s129 = smul.addr %s15, 128
          %s130 = scalar_lea.hbm %s1, %s129
          %s132 = sshll.u32 %s125, 4
          %s133 = int_to_ptr.vmem [resolvable:$true] %s132
          %135 = dma.hbm_to_vmem [thread:$0]  %s130, 128, %s133, %s122
        $region24: #{tpu_custom_call.1} parent=19 // pred_fallthru
          _
      $region20: #{tpu_custom_call.1} parent=5 // pred_fallthru
        _
      %p136 = scmp.le.s32.totalorder 1, %s15
      %p137 = scmp.lt.s32.totalorder %s15, 3
      %p138 = pnand %p136, %p137
      %p139 = pneg %p138
      // Predicated region
      $region25: #{tpu_custom_call.1} parent=5 // pred_check
        _
      $region26: #{tpu_custom_call.1} parent=5 // pred_check_branch
        %141 = sbr.rel (%p138) target = $region28
      $region27: #{tpu_custom_call.1} parent=5 // pred_region
        %s142 = ssub.s32 %s15, 1
        // Predicated region
        $region29: #{tpu_custom_call.1} parent=27 // pred_check
          %p143 = pneg %p36
        $region30: #{tpu_custom_call.1} parent=27 // pred_check_branch
          %145 = sbr.rel (%p143) target = $region32
        $region31: #{tpu_custom_call.1} parent=27 // pred_region
          %146 = dma.done [#allocation3], 128
        $region32: #{tpu_custom_call.1} parent=27 // pred_fallthru
          _
        %s147 = sand.u32 %s49, 1
        %s148 = scalar_lea.sflag [#allocation6], %s147
        %s149 = sand.u32 %s49, 1
        %s150 = smul.addr %s149, 8
        %s151 = scalar_lea.vmem [#allocation5], %s150
        // Predicated region
        $region33: #{tpu_custom_call.1} parent=27 // pred_check
          %p152 = pneg %p62
        $region34: #{tpu_custom_call.1} parent=27 // pred_check_branch
          %154 = sbr.rel (%p152) target = $region36
        $region35: #{tpu_custom_call.1} parent=27 // pred_region
          %155 = dma.done %s148, 128
        $region36: #{tpu_custom_call.1} parent=27 // pred_fallthru
          _
        %p156 = pneg %p36
        %p157 = pneg %p33
        %s158 = sand.u32 %s49, 1
        %s159 = scalar_lea.sflag [#allocation6], %s158
        %s160 = sand.u32 %s49, 1
        %s161 = smul.addr %s160, 8
        %s162 = scalar_lea.vmem [#allocation5], %s161
        %p163 = pneg %p62
        %p164 = pneg %p59
        %p165 = pneg %p88
        %p166 = pneg %p85
        %s167 = sand.u32 %s75, 1
        %s168 = scalar_lea.sflag [#allocation4], %s167
        %s169 = sand.u32 %s75, 1
        %s170 = smul.addr %s169, 8
        %s171 = scalar_lea.vmem [#allocation7], %s170
        %v172 = vld [vmem:[%s151] sm:$0xff]
        %v173 = vld [vmem:[#allocation2] sm:$0xff]
        %v174 = vadd.f32 %v172, %v173
        %175 = vst [vmem:[%s171] sm:$0xff] %v174
        %s176 = sand.u32 %s75, 1
        %s177 = scalar_lea.sflag [#allocation4], %s176
        %s178 = sand.u32 %s75, 1
        %s179 = smul.addr %s178, 8
        %s180 = scalar_lea.vmem [#allocation7], %s179
        // Predicated region
        $region37: #{tpu_custom_call.1} parent=27 // pred_check
          %p181 = pneg %p85
        $region38: #{tpu_custom_call.1} parent=27 // pred_check_branch
          %183 = sbr.rel (%p181) target = $region40
        $region39: #{tpu_custom_call.1} parent=27 // pred_region
          %s185 = ssub.s32 128, 128
          %186 = vsyncadd %s177, %s185
          %s187 = smul.addr %s20, 128
          %s188 = scalar_lea.hbm %s2, %s187
          %s190 = sshll.u32 %s180, 4
          %s191 = int_to_ptr.vmem [resolvable:$true] %s190
          %193 = dma.vmem_to_hbm [thread:$0]  %s191, 128, %s188, %s177
        $region40: #{tpu_custom_call.1} parent=27 // pred_fallthru
          _
      $region28: #{tpu_custom_call.1} parent=5 // pred_fallthru
        _
      %p194 = scmp.le.s32.totalorder 2, %s15
      // Predicated region
      $region41: #{tpu_custom_call.1} parent=5 // pred_check
        %p195 = pneg %p194
      $region42: #{tpu_custom_call.1} parent=5 // pred_check_branch
        %197 = sbr.rel (%p195) target = $region44
      $region43: #{tpu_custom_call.1} parent=5 // pred_region
        %s198 = ssub.s32 %s15, 2
        // Predicated region
        $region45: #{tpu_custom_call.1} parent=43 // pred_check
          %p199 = pneg %p91
        $region46: #{tpu_custom_call.1} parent=43 // pred_check_branch
          %201 = sbr.rel (%p199) target = $region48
        $region47: #{tpu_custom_call.1} parent=43 // pred_region
          %s202 = sand.u32 %s76, 1
          %s203 = scalar_lea.sflag [#allocation4], %s202
          %s204 = sand.u32 %s76, 1
          %s205 = smul.addr %s204, 8
          %s206 = scalar_lea.vmem [#allocation7], %s205
          %207 = dma.done %s203, 128
        $region48: #{tpu_custom_call.1} parent=43 // pred_fallthru
          _
      $region44: #{tpu_custom_call.1} parent=5 // pred_fallthru
        _
    $region6: #{tpu_custom_call.1} parent=1 // loop_footer
      %s19 = sadd.s32 1, %s15
    $region7: #{tpu_custom_call.1} parent=1 // loop_footer_branch
      %14 = sbr.rel target = $region3
    $region8: #{tpu_custom_call.1} parent=1 // loop_exit
      _
    %208 = vsyncpa [#allocation3], 1
    %s209 = scalar_lea.sflag [#allocation3], 1
    %210 = vsyncpa %s209, 1
    %211 = vsyncpa [#allocation6], 1
    %s212 = scalar_lea.sflag [#allocation6], 1
    %213 = vsyncpa %s212, 1
    %214 = vsyncpa [#allocation4], 1
    %s215 = scalar_lea.sflag [#allocation4], 1
    %216 = vsyncpa %s215, 1

// kernel: tpu_custom_call.1
$region0: #{tpu_custom_call.1}
  #allocation0 [shape = 'u32[]', space=smem, size = 0x4, offset = 0x4, fixed_abs, tag = 'smem constant byte address 0x4 - core index']
  #allocation1 [shape = 'u32[144,128]{1,0:T(1,128)}', space=vmem, size = 0x12000, scoped, tag = 'internal scratch']
  #allocation2 [shape = 'bf16[128,32]{1,0:T(16,128)(2,1)}', space=vmem, size = 0x8000, scoped, tag = 'scratch operand']
  #allocation3 [shape = 'bf16[4,128,32]{2,1,0:T(16,128)(2,1)}', space=vmem, size = 0x20000, scoped, tag = 'scratch operand']
  %s0 = inlined_call_operand.vmem [shape: bf16[2,256,32], index: 0, kind: input, shape index: {}]
  %s1 = inlined_call_operand.vmem [shape: bf16[2,128,128], index: 1, kind: input, shape index: {}]
  %s2 = inlined_call_operand.vmem [shape: bf16[32,32], index: 2, kind: input, shape index: {}]
  %s3 = inlined_call_operand.vmem [shape: bf16[32,64], index: 3, kind: input, shape index: {}]
  %s4 = inlined_call_operand.vmem [shape: bf16[128,32], index: 4, kind: input, shape index: {}]
  %s5 = inlined_call_operand.vmem [shape: f32[1,32], index: 5, kind: input, shape index: {}]
  %s6 = inlined_call_operand.vmem [shape: f32[1,32], index: 6, kind: input, shape index: {}]
  %s7 = inlined_call_operand.vmem [shape: f32[1,32], index: 7, kind: input, shape index: {}]
  %s8 = inlined_call_operand.vmem [shape: bf16[32,32], index: 8, kind: input, shape index: {}]
  %s9 = inlined_call_operand.vmem [shape: f32[1,32], index: 9, kind: input, shape index: {}]
  %s10 = inlined_call_operand.vmem [shape: f32[2,256,32], index: 10, kind: output, shape index: {}]
  %s11 = sld [smem:[#allocation0]]
  $region77: #{tpu_custom_call.1} parent=0
    _
  %s13 = ssub.s32 1, %s11
  %s14 = scalar_select 0, %s13, %s11
  loop: start=0, step=1, limit=6
  $region2: #{tpu_custom_call.1} parent=0 // loop_pre_header
    _
  $region3: #{tpu_custom_call.1} parent=0 // loop_header
    %s16 = sphi 0, %s20
    %p17 = scmp.ge.s32.totalorder %s16, 6
    %s23 = sphi 0, %s35
    %s24 = sphi 0, %s31
    %s25 = sphi 0, %s23
    %s26 = sphi 0, %s24
    %s27 = sphi 0, %s25
    %s28 = sphi 0, %s26
    %s40 = sphi 0, %s42
    %s43 = sphi 0, %s40
    %s44 = sphi 0, %s43
    %s60 = sphi 0, %s44
    %s66 = sphi 0, %s68
    %s69 = sphi 0, %s66
    %s70 = sphi 0, %s69
    %s86 = sphi 0, %s70
    %s90 = sphi 0, %s90
    %s92 = sphi 0, %s90
    %s93 = sphi 0, %s92
    %s107 = sphi 0, %s93
    %s111 = sphi 0, %s111
    %s113 = sphi 0, %s111
    %s114 = sphi 0, %s113
    %s128 = sphi 0, %s114
    %s132 = sphi 0, %s132
    %s134 = sphi 0, %s132
    %s135 = sphi 0, %s134
    %s149 = sphi 0, %s135
    %s153 = sphi 0, %s153
    %s155 = sphi 0, %s153
    %s156 = sphi 0, %s155
    %s170 = sphi 0, %s156
    %s174 = sphi 0, %s174
    %s176 = sphi 0, %s174
    %s177 = sphi 0, %s176
    %s191 = sphi 0, %s177
    %s195 = sphi 0, %s195
    %s197 = sphi 0, %s195
    %s198 = sphi 0, %s197
    %s212 = sphi 0, %s198
    %s216 = sphi 0, %s216
    %s218 = sphi 0, %s216
    %s219 = sphi 0, %s218
    %s233 = sphi 0, %s219
    %s237 = sphi 0, %s237
    %s239 = sphi 0, %s237
    %s240 = sphi 0, %s239
    %s254 = sphi 0, %s240
    %s262 = sphi 0, %s264
    %s265 = sphi 0, %s262
    %s266 = sphi 0, %s265
    %s282 = sphi 0, %s266
  $region4: #{tpu_custom_call.1} parent=0 // loop_header_branch
    %19 = sbr.rel (%p17) target = $region8
  $region5: #{tpu_custom_call.1} parent=0 // loop_body
    %s21 = ssub.s32 %s16, 1
    %s22 = ssub.s32 %s16, 2
    %s29 = sadd.s32 1, %s24
    %p30 = scmp.ge.s32.totalorder %s29, 2
    %s31 = scalar_select %p30, 0, %s29
    %s32 = sadd.s32 1, %s23
    %s33 = scalar_select %p30, %s32, %s23
    %p34 = scmp.ge.s32.totalorder %s33, 2
    %s35 = scalar_select %p34, 0, %s33
    %s36 = ssub.s32 %s23, %s35
    %s37 = ssub.s32 %s24, %s31
    %s38 = sor.u32 %s36, %s37
    %p39 = scmp.eq.s32.totalorder %s38, 0
    %s41 = sadd.s32 %s40, 1
    %s42 = scalar_select %p39, %s40, %s41
    %p45 = pneg %p39
    %p46 = scmp.eq.s32.totalorder %s16, 3
    %p47 = por %p45, %p46
    %p48 = scmp.ne.s32.totalorder %s40, %s43
    %p49 = scmp.eq.s32.totalorder %s16, 0
    %p50 = por %p48, %p49
    %p51 = scmp.ne.s32.totalorder %s40, %s43
    %p52 = scmp.eq.s32.totalorder %s21, 3
    %p53 = por %p51, %p52
    %p54 = scmp.ne.s32.totalorder %s43, %s44
    %p55 = scmp.eq.s32.totalorder %s21, 0
    %p56 = por %p54, %p55
    %p57 = scmp.ne.s32.totalorder %s43, %s44
    %p58 = scmp.eq.s32.totalorder %s22, 3
    %p59 = por %p57, %p58
    %p61 = scmp.ne.s32.totalorder %s44, %s60
    %p62 = scmp.eq.s32.totalorder %s22, 0
    %p63 = por %p61, %p62
    %s64 = ssub.s32 %s23, %s35
    %p65 = scmp.eq.s32.totalorder %s64, 0
    %s67 = sadd.s32 %s66, 1
    %s68 = scalar_select %p65, %s66, %s67
    %p71 = pneg %p65
    %p72 = scmp.eq.s32.totalorder %s16, 3
    %p73 = por %p71, %p72
    %p74 = scmp.ne.s32.totalorder %s66, %s69
    %p75 = scmp.eq.s32.totalorder %s16, 0
    %p76 = por %p74, %p75
    %p77 = scmp.ne.s32.totalorder %s66, %s69
    %p78 = scmp.eq.s32.totalorder %s21, 3
    %p79 = por %p77, %p78
    %p80 = scmp.ne.s32.totalorder %s69, %s70
    %p81 = scmp.eq.s32.totalorder %s21, 0
    %p82 = por %p80, %p81
    %p83 = scmp.ne.s32.totalorder %s69, %s70
    %p84 = scmp.eq.s32.totalorder %s22, 3
    %p85 = por %p83, %p84
    %p87 = scmp.ne.s32.totalorder %s70, %s86
    %p88 = scmp.eq.s32.totalorder %s22, 0
    %p89 = por %p87, %p88
    %s91 = sadd.s32 %s90, 1
    %p94 = scmp.eq.s32.totalorder %s16, 3
    %p95 = scmp.ne.s32.totalorder %s90, %s92
    %p96 = scmp.eq.s32.totalorder %s16, 0
    %p97 = por %p95, %p96
    %p98 = scmp.ne.s32.totalorder %s90, %s92
    %p99 = scmp.eq.s32.totalorder %s21, 3
    %p100 = por %p98, %p99
    %p101 = scmp.ne.s32.totalorder %s92, %s93
    %p102 = scmp.eq.s32.totalorder %s21, 0
    %p103 = por %p101, %p102
    %p104 = scmp.ne.s32.totalorder %s92, %s93
    %p105 = scmp.eq.s32.totalorder %s22, 3
    %p106 = por %p104, %p105
    %p108 = scmp.ne.s32.totalorder %s93, %s107
    %p109 = scmp.eq.s32.totalorder %s22, 0
    %p110 = por %p108, %p109
    %s112 = sadd.s32 %s111, 1
    %p115 = scmp.eq.s32.totalorder %s16, 3
    %p116 = scmp.ne.s32.totalorder %s111, %s113
    %p117 = scmp.eq.s32.totalorder %s16, 0
    %p118 = por %p116, %p117
    %p119 = scmp.ne.s32.totalorder %s111, %s113
    %p120 = scmp.eq.s32.totalorder %s21, 3
    %p121 = por %p119, %p120
    %p122 = scmp.ne.s32.totalorder %s113, %s114
    %p123 = scmp.eq.s32.totalorder %s21, 0
    %p124 = por %p122, %p123
    %p125 = scmp.ne.s32.totalorder %s113, %s114
    %p126 = scmp.eq.s32.totalorder %s22, 3
    %p127 = por %p125, %p126
    %p129 = scmp.ne.s32.totalorder %s114, %s128
    %p130 = scmp.eq.s32.totalorder %s22, 0
    %p131 = por %p129, %p130
    %s133 = sadd.s32 %s132, 1
    %p136 = scmp.eq.s32.totalorder %s16, 3
    %p137 = scmp.ne.s32.totalorder %s132, %s134
    %p138 = scmp.eq.s32.totalorder %s16, 0
    %p139 = por %p137, %p138
    %p140 = scmp.ne.s32.totalorder %s132, %s134
    %p141 = scmp.eq.s32.totalorder %s21, 3
    %p142 = por %p140, %p141
    %p143 = scmp.ne.s32.totalorder %s134, %s135
    %p144 = scmp.eq.s32.totalorder %s21, 0
    %p145 = por %p143, %p144
    %p146 = scmp.ne.s32.totalorder %s134, %s135
    %p147 = scmp.eq.s32.totalorder %s22, 3
    %p148 = por %p146, %p147
    %p150 = scmp.ne.s32.totalorder %s135, %s149
    %p151 = scmp.eq.s32.totalorder %s22, 0
    %p152 = por %p150, %p151
    %s154 = sadd.s32 %s153, 1
    %p157 = scmp.eq.s32.totalorder %s16, 3
    %p158 = scmp.ne.s32.totalorder %s153, %s155
    %p159 = scmp.eq.s32.totalorder %s16, 0
    %p160 = por %p158, %p159
    %p161 = scmp.ne.s32.totalorder %s153, %s155
    %p162 = scmp.eq.s32.totalorder %s21, 3
    %p163 = por %p161, %p162
    %p164 = scmp.ne.s32.totalorder %s155, %s156
    %p165 = scmp.eq.s32.totalorder %s21, 0
    %p166 = por %p164, %p165
    %p167 = scmp.ne.s32.totalorder %s155, %s156
    %p168 = scmp.eq.s32.totalorder %s22, 3
    %p169 = por %p167, %p168
    %p171 = scmp.ne.s32.totalorder %s156, %s170
    %p172 = scmp.eq.s32.totalorder %s22, 0
    %p173 = por %p171, %p172
    %s175 = sadd.s32 %s174, 1
    %p178 = scmp.eq.s32.totalorder %s16, 3
    %p179 = scmp.ne.s32.totalorder %s174, %s176
    %p180 = scmp.eq.s32.totalorder %s16, 0
    %p181 = por %p179, %p180
    %p182 = scmp.ne.s32.totalorder %s174, %s176
    %p183 = scmp.eq.s32.totalorder %s21, 3
    %p184 = por %p182, %p183
    %p185 = scmp.ne.s32.totalorder %s176, %s177
    %p186 = scmp.eq.s32.totalorder %s21, 0
    %p187 = por %p185, %p186
    %p188 = scmp.ne.s32.totalorder %s176, %s177
    %p189 = scmp.eq.s32.totalorder %s22, 3
    %p190 = por %p188, %p189
    %p192 = scmp.ne.s32.totalorder %s177, %s191
    %p193 = scmp.eq.s32.totalorder %s22, 0
    %p194 = por %p192, %p193
    %s196 = sadd.s32 %s195, 1
    %p199 = scmp.eq.s32.totalorder %s16, 3
    %p200 = scmp.ne.s32.totalorder %s195, %s197
    %p201 = scmp.eq.s32.totalorder %s16, 0
    %p202 = por %p200, %p201
    %p203 = scmp.ne.s32.totalorder %s195, %s197
    %p204 = scmp.eq.s32.totalorder %s21, 3
    %p205 = por %p203, %p204
    %p206 = scmp.ne.s32.totalorder %s197, %s198
    %p207 = scmp.eq.s32.totalorder %s21, 0
    %p208 = por %p206, %p207
    %p209 = scmp.ne.s32.totalorder %s197, %s198
    %p210 = scmp.eq.s32.totalorder %s22, 3
    %p211 = por %p209, %p210
    %p213 = scmp.ne.s32.totalorder %s198, %s212
    %p214 = scmp.eq.s32.totalorder %s22, 0
    %p215 = por %p213, %p214
    %s217 = sadd.s32 %s216, 1
    %p220 = scmp.eq.s32.totalorder %s16, 3
    %p221 = scmp.ne.s32.totalorder %s216, %s218
    %p222 = scmp.eq.s32.totalorder %s16, 0
    %p223 = por %p221, %p222
    %p224 = scmp.ne.s32.totalorder %s216, %s218
    %p225 = scmp.eq.s32.totalorder %s21, 3
    %p226 = por %p224, %p225
    %p227 = scmp.ne.s32.totalorder %s218, %s219
    %p228 = scmp.eq.s32.totalorder %s21, 0
    %p229 = por %p227, %p228
    %p230 = scmp.ne.s32.totalorder %s218, %s219
    %p231 = scmp.eq.s32.totalorder %s22, 3
    %p232 = por %p230, %p231
    %p234 = scmp.ne.s32.totalorder %s219, %s233
    %p235 = scmp.eq.s32.totalorder %s22, 0
    %p236 = por %p234, %p235
    %s238 = sadd.s32 %s237, 1
    %p241 = scmp.eq.s32.totalorder %s16, 3
    %p242 = scmp.ne.s32.totalorder %s237, %s239
    %p243 = scmp.eq.s32.totalorder %s16, 0
    %p244 = por %p242, %p243
    %p245 = scmp.ne.s32.totalorder %s237, %s239
    %p246 = scmp.eq.s32.totalorder %s21, 3
    %p247 = por %p245, %p246
    %p248 = scmp.ne.s32.totalorder %s239, %s240
    %p249 = scmp.eq.s32.totalorder %s21, 0
    %p250 = por %p248, %p249
    %p251 = scmp.ne.s32.totalorder %s239, %s240
    %p252 = scmp.eq.s32.totalorder %s22, 3
    %p253 = por %p251, %p252
    %p255 = scmp.ne.s32.totalorder %s240, %s254
    %p256 = scmp.eq.s32.totalorder %s22, 0
    %p257 = por %p255, %p256
    %s258 = ssub.s32 %s23, %s35
    %s259 = ssub.s32 %s24, %s31
    %s260 = sor.u32 %s258, %s259
    %p261 = scmp.eq.s32.totalorder %s260, 0
    %s263 = sadd.s32 %s262, 1
    %s264 = scalar_select %p261, %s262, %s263
    %p267 = pneg %p261
    %p268 = scmp.eq.s32.totalorder %s16, 3
    %p269 = por %p267, %p268
    %p270 = scmp.ne.s32.totalorder %s262, %s265
    %p271 = scmp.eq.s32.totalorder %s16, 0
    %p272 = por %p270, %p271
    %p273 = scmp.ne.s32.totalorder %s262, %s265
    %p274 = scmp.eq.s32.totalorder %s21, 3
    %p275 = por %p273, %p274
    %p276 = scmp.ne.s32.totalorder %s265, %s266
    %p277 = scmp.eq.s32.totalorder %s21, 0
    %p278 = por %p276, %p277
    %p279 = scmp.ne.s32.totalorder %s265, %s266
    %p280 = scmp.eq.s32.totalorder %s22, 3
    %p281 = por %p279, %p280
    %p283 = scmp.ne.s32.totalorder %s266, %s282
    %p284 = scmp.eq.s32.totalorder %s22, 0
    %p285 = por %p283, %p284
    %p286 = scmp.le.s32.totalorder 1, %s16
    %p287 = scmp.lt.s32.totalorder %s16, 5
    %p288 = pnand %p286, %p287
    %p289 = pneg %p288
    // Predicated region
    $region9: #{tpu_custom_call.1} parent=5 // pred_check
      _
    $region10: #{tpu_custom_call.1} parent=5 // pred_check_branch
      %291 = sbr.rel (%p288) target = $region12
    $region11: #{tpu_custom_call.1} parent=5 // pred_region
      %s292 = ssub.s32 %s16, 1
      // Predicated region
      $region13: #{tpu_custom_call.1} parent=11 // pred_check
        %p293 = pneg %p103
      $region14: #{tpu_custom_call.1} parent=11 // pred_check_branch
        %295 = sbr.rel (%p293) target = $region16
      $region15: #{tpu_custom_call.1} parent=11 // pred_region
        _
      $region16: #{tpu_custom_call.1} parent=11 // pred_fallthru
        _
      // Predicated region
      $region17: #{tpu_custom_call.1} parent=11 // pred_check
        %p296 = pneg %p124
      $region18: #{tpu_custom_call.1} parent=11 // pred_check_branch
        %298 = sbr.rel (%p296) target = $region20
      $region19: #{tpu_custom_call.1} parent=11 // pred_region
        _
      $region20: #{tpu_custom_call.1} parent=11 // pred_fallthru
        _
      // Predicated region
      $region21: #{tpu_custom_call.1} parent=11 // pred_check
        %p299 = pneg %p145
      $region22: #{tpu_custom_call.1} parent=11 // pred_check_branch
        %301 = sbr.rel (%p299) target = $region24
      $region23: #{tpu_custom_call.1} parent=11 // pred_region
        _
      $region24: #{tpu_custom_call.1} parent=11 // pred_fallthru
        _
      // Predicated region
      $region25: #{tpu_custom_call.1} parent=11 // pred_check
        %p302 = pneg %p166
      $region26: #{tpu_custom_call.1} parent=11 // pred_check_branch
        %304 = sbr.rel (%p302) target = $region28
      $region27: #{tpu_custom_call.1} parent=11 // pred_region
        _
      $region28: #{tpu_custom_call.1} parent=11 // pred_fallthru
        _
      // Predicated region
      $region29: #{tpu_custom_call.1} parent=11 // pred_check
        %p305 = pneg %p187
      $region30: #{tpu_custom_call.1} parent=11 // pred_check_branch
        %307 = sbr.rel (%p305) target = $region32
      $region31: #{tpu_custom_call.1} parent=11 // pred_region
        _
      $region32: #{tpu_custom_call.1} parent=11 // pred_fallthru
        _
      // Predicated region
      $region33: #{tpu_custom_call.1} parent=11 // pred_check
        %p308 = pneg %p208
      $region34: #{tpu_custom_call.1} parent=11 // pred_check_branch
        %310 = sbr.rel (%p308) target = $region36
      $region35: #{tpu_custom_call.1} parent=11 // pred_region
        _
      $region36: #{tpu_custom_call.1} parent=11 // pred_fallthru
        _
      // Predicated region
      $region37: #{tpu_custom_call.1} parent=11 // pred_check
        %p311 = pneg %p229
      $region38: #{tpu_custom_call.1} parent=11 // pred_check_branch
        %313 = sbr.rel (%p311) target = $region40
      $region39: #{tpu_custom_call.1} parent=11 // pred_region
        _
      $region40: #{tpu_custom_call.1} parent=11 // pred_fallthru
        _
      // Predicated region
      $region41: #{tpu_custom_call.1} parent=11 // pred_check
        %p314 = pneg %p250
      $region42: #{tpu_custom_call.1} parent=11 // pred_check_branch
        %316 = sbr.rel (%p314) target = $region44
      $region43: #{tpu_custom_call.1} parent=11 // pred_region
        _
      $region44: #{tpu_custom_call.1} parent=11 // pred_fallthru
        _
    $region12: #{tpu_custom_call.1} parent=5 // pred_fallthru
      _
    %p317 = scmp.lt.s32.totalorder %s16, 4
    // Predicated region
    $region45: #{tpu_custom_call.1} parent=5 // pred_check
      %p318 = pneg %p317
    $region46: #{tpu_custom_call.1} parent=5 // pred_check_branch
      %320 = sbr.rel (%p318) target = $region48
    $region47: #{tpu_custom_call.1} parent=5 // pred_region
      // Predicated region
      $region49: #{tpu_custom_call.1} parent=47 // pred_check
        %p321 = pneg %p50
      $region50: #{tpu_custom_call.1} parent=47 // pred_check_branch
        %323 = sbr.rel (%p321) target = $region52
      $region51: #{tpu_custom_call.1} parent=47 // pred_region
        %s324 = smul.u32 16, %s24
        %p325 = scmp.lt.s32.totalorder %s23, 1
        %s326 = scalar_select %p325, %s23, 1
        %p327 = scmp.lt.s32.totalorder %s324, 31
        %s328 = scalar_select %p327, %s324, 31
        %s329 = smul.addr %s326, 32
        %s330 = sadd.s32 %s328, %s329
        %s331 = smul.addr %s330, 4
        %s332 = scalar_lea.vmem %s0, %s331
        %s333 = smul.u32 16, %s24
      $region52: #{tpu_custom_call.1} parent=47 // pred_fallthru
        _
      // Predicated region
      $region53: #{tpu_custom_call.1} parent=47 // pred_check
        %p334 = pneg %p76
      $region54: #{tpu_custom_call.1} parent=47 // pred_check_branch
        %336 = sbr.rel (%p334) target = $region56
      $region55: #{tpu_custom_call.1} parent=47 // pred_region
        %p337 = scmp.lt.s32.totalorder %s23, 1
        %s338 = scalar_select %p337, %s23, 1
        %s339 = smul.addr %s338, 16
        %s340 = smul.addr %s339, 4
        %s341 = scalar_lea.vmem %s1, %s340
      $region56: #{tpu_custom_call.1} parent=47 // pred_fallthru
        _
    $region48: #{tpu_custom_call.1} parent=5 // pred_fallthru
      _
    %p342 = scmp.le.s32.totalorder 1, %s16
    %p343 = scmp.lt.s32.totalorder %s16, 5
    %p344 = pnand %p342, %p343
    %p345 = pneg %p344
    // Predicated region
    $region57: #{tpu_custom_call.1} parent=5 // pred_check
      _
    $region58: #{tpu_custom_call.1} parent=5 // pred_check_branch
      %347 = sbr.rel (%p344) target = $region60
    $region59: #{tpu_custom_call.1} parent=5 // pred_region
      %s348 = ssub.s32 %s16, 1
      %s349 = smul.u32 16, %s26
      %p350 = scmp.lt.s32.totalorder %s25, 1
      %s351 = scalar_select %p350, %s25, 1
      %p352 = scmp.lt.s32.totalorder %s349, 31
      %s353 = scalar_select %p352, %s349, 31
      %s354 = smul.addr %s351, 32
      %s355 = sadd.s32 %s353, %s354
      %s356 = smul.addr %s355, 4
      %s357 = scalar_lea.vmem %s0, %s356
      %p358 = pneg %p56
      %p359 = pneg %p53
      %p360 = scmp.lt.s32.totalorder %s25, 1
      %s361 = scalar_select %p360, %s25, 1
      %s362 = smul.addr %s361, 16
      %s363 = smul.addr %s362, 4
      %s364 = scalar_lea.vmem %s1, %s363
      %p365 = pneg %p82
      %p366 = pneg %p79
      %p367 = pneg %p103
      %p368 = pneg %p100
      %p369 = pneg %p124
      %p370 = pneg %p121
      %p371 = pneg %p145
      %p372 = pneg %p142
      %p373 = pneg %p166
      %p374 = pneg %p163
      %p375 = pneg %p187
      %p376 = pneg %p184
      %p377 = pneg %p208
      %p378 = pneg %p205
      %p379 = pneg %p229
      %p380 = pneg %p226
      %p381 = pneg %p250
      %p382 = pneg %p247
      %p383 = pneg %p278
      %p384 = pneg %p275
      %s385 = smul.u32 16, %s26
      %p386 = scmp.lt.s32.totalorder %s25, 1
      %s387 = scalar_select %p386, %s25, 1
      %p388 = scmp.lt.s32.totalorder %s385, 31
      %s389 = scalar_select %p388, %s385, 31
      %s390 = smul.addr %s387, 32
      %s391 = sadd.s32 %s389, %s390
      %s392 = smul.addr %s391, 8
      %s393 = scalar_lea.vmem %s10, %s392
      %s394 = smul.u32 16, %s26
      %p395 = scmp.lt.s32.totalorder %s25, 1
      %s396 = scalar_select %p395, %s25, 1
      %p397 = scmp.lt.s32.totalorder %s394, 31
      %s398 = scalar_select %p397, %s394, 31
      %s399 = smul.addr %s396, 32
      %s400 = sadd.s32 %s398, %s399
      %s401 = smul.addr %s400, 4
      %s402 = scalar_lea.vmem %s0, %s401
      %s403 = smul.u32 16, %s26
      %p404 = scmp.lt.s32.totalorder %s25, 1
      %s405 = scalar_select %p404, %s25, 1
      %s406 = smul.addr %s405, 16
      %s407 = smul.addr %s406, 4
      %s408 = scalar_lea.vmem %s1, %s407
      %s409 = smul.u32 16, %s26
      %p410 = scmp.lt.s32.totalorder %s25, 1
      %s411 = scalar_select %p410, %s25, 1
      %p412 = scmp.lt.s32.totalorder %s409, 31
      %s413 = scalar_select %p412, %s409, 31
      %s414 = smul.addr %s411, 32
      %s415 = sadd.s32 %s413, %s414
      %s416 = smul.addr %s415, 8
      %s417 = scalar_lea.vmem %s10, %s416
      %s418 = smul.u32 16, %s26
      %p420 = scmp.eq.s32.totalorder %s26, 0
      // Predicated region
      $region61: #{tpu_custom_call.1} parent=59 // pred_check
        %p421 = pneg %p420
      $region62: #{tpu_custom_call.1} parent=59 // pred_check_branch
        %423 = sbr.rel (%p421) target = $region64
      $region63: #{tpu_custom_call.1} parent=59 // pred_region
        %v424 = vld [vmem:[%s408] sm:$0xf]
        %v425 = vld [vmem:[%s408 + $0x4] sm:$0xf]
        %v426 = vld [vmem:[%s408 + $0x8] sm:$0xf]
        %v427 = vld [vmem:[%s408 + $0xc] sm:$0xf]
        %v428 = vld [vmem:[%s408 + $0x10] sm:$0xf]
        %v429 = vld [vmem:[%s408 + $0x14] sm:$0xf]
        %v430 = vld [vmem:[%s408 + $0x18] sm:$0xf]
        %v431 = vld [vmem:[%s408 + $0x1c] sm:$0xf]
        %v432 = vld [vmem:[%s408 + $0x20] sm:$0xf]
        %v433 = vld [vmem:[%s408 + $0x24] sm:$0xf]
        %v434 = vld [vmem:[%s408 + $0x28] sm:$0xf]
        %v435 = vld [vmem:[%s408 + $0x2c] sm:$0xf]
        %v436 = vld [vmem:[%s408 + $0x30] sm:$0xf]
        %v437 = vld [vmem:[%s408 + $0x34] sm:$0xf]
        %v438 = vld [vmem:[%s408 + $0x38] sm:$0xf]
        %v439 = vld [vmem:[%s408 + $0x3c] sm:$0xf]
        %v440 = vld [vmem:[%s4] sm:$0xf]
        %v441 = vld [vmem:[%s4 + $0x4] sm:$0xf]
        %v442 = vld [vmem:[%s4 + $0x8] sm:$0xf]
        %v443 = vld [vmem:[%s4 + $0xc] sm:$0xf]
        %v444 = vld [vmem:[%s4 + $0x10] sm:$0xf]
        %v445 = vld [vmem:[%s4 + $0x14] sm:$0xf]
        %v446 = vld [vmem:[%s4 + $0x18] sm:$0xf]
        %v447 = vld [vmem:[%s4 + $0x1c] sm:$0xf]
        %v448 = vld [vmem:[%s4 + $0x20] sm:$0xf]
        %v449 = vld [vmem:[%s4 + $0x24] sm:$0xf]
        %v450 = vld [vmem:[%s4 + $0x28] sm:$0xf]
        %v451 = vld [vmem:[%s4 + $0x2c] sm:$0xf]
        %v452 = vld [vmem:[%s4 + $0x30] sm:$0xf]
        %v453 = vld [vmem:[%s4 + $0x34] sm:$0xf]
        %v454 = vld [vmem:[%s4 + $0x38] sm:$0xf]
        %v455 = vld [vmem:[%s4 + $0x3c] sm:$0xf]
        %v456 = vld [vmem:[%s5] sm:$0x1]
        %v458 = vlaneseq
        %v459 = vshrl.u32 %v458, 7
        %v460 = vsub.s32 0, %v459
        %v461 = vrot.slane %v456, %v460
        %v479 = vunpack.c.l.b16 %v424
        %v480 = vunpack.c.l.b16 %v425
        %v481 = vunpack.c.l.b16 %v426
        %v482 = vunpack.c.l.b16 %v427
        %v483 = vunpack.c.l.b16 %v428
        %v484 = vunpack.c.l.b16 %v429
        %v485 = vunpack.c.l.b16 %v430
        %v486 = vunpack.c.l.b16 %v431
        %v487 = vunpack.c.l.b16 %v432
        %v488 = vunpack.c.l.b16 %v433
        %v489 = vunpack.c.l.b16 %v434
        %v490 = vunpack.c.l.b16 %v435
        %v491 = vunpack.c.l.b16 %v436
        %v492 = vunpack.c.l.b16 %v437
        %v493 = vunpack.c.l.b16 %v438
        %v494 = vunpack.c.l.b16 %v439
        %v495 = vpack.c.b16 %v480, %v479
        %v496 = vpack.c.b16 %v482, %v481
        %v497 = vpack.c.b16 %v484, %v483
        %v498 = vpack.c.b16 %v486, %v485
        %v499 = vpack.c.b16 %v488, %v487
        %v500 = vpack.c.b16 %v490, %v489
        %v501 = vpack.c.b16 %v492, %v491
        %v502 = vpack.c.b16 %v494, %v493
        %v527 = vunpack.c.l.b16 %v440
        %v528 = vunpack.c.l.b16 %v441
        %v529 = vunpack.c.l.b16 %v442
        %v530 = vunpack.c.l.b16 %v443
        %v531 = vunpack.c.l.b16 %v444
        %v532 = vunpack.c.l.b16 %v445
        %v533 = vunpack.c.l.b16 %v446
        %v534 = vunpack.c.l.b16 %v447
        %v535 = vunpack.c.l.b16 %v448
        %v536 = vunpack.c.l.b16 %v449
        %v537 = vunpack.c.l.b16 %v450
        %v538 = vunpack.c.l.b16 %v451
        %v539 = vunpack.c.l.b16 %v452
        %v540 = vunpack.c.l.b16 %v453
        %v541 = vunpack.c.l.b16 %v454
        %v542 = vunpack.c.l.b16 %v455
        %v543 = vpack.c.b16 %v528, %v527
        %v544 = vpack.c.b16 %v530, %v529
        %v545 = vpack.c.b16 %v532, %v531
        %v546 = vpack.c.b16 %v534, %v533
        %v547 = vpack.c.b16 %v536, %v535
        %v548 = vpack.c.b16 %v538, %v537
        %v549 = vpack.c.b16 %v540, %v539
        %v550 = vpack.c.b16 %v542, %v541
        %559 = vmatprep.subr.bf16.mxu0 0
        %560 = vmatpush1.bf16.msra.mxu0 %v543
        %561 = vmatprep.subr.bf16.mxu0 0
        %562 = vmatpush1.bf16.msra.mxu0 %v544
        %563 = vmatprep.subr.bf16.mxu0 0
        %564 = vmatpush1.bf16.msra.mxu0 %v545
        %565 = vmatprep.subr.bf16.mxu0 0
        %566 = vmatpush1.bf16.msra.mxu0 %v546
        %567 = vmatprep.subr.bf16.mxu0 0
        %568 = vmatpush1.bf16.msra.mxu0 %v547
        %569 = vmatprep.subr.bf16.mxu0 0
        %570 = vmatpush1.bf16.msra.mxu0 %v548
        %571 = vmatprep.subr.bf16.mxu0 0
        %572 = vmatpush1.bf16.msra.mxu0 %v549
        %573 = vmatprep.subr.bf16.mxu0 0
        %574 = vmatpush1.bf16.msra.mxu0 %v550
        %575 = vmatprep.subr.bf16.mxu0 0
        %576 = vmatpush1.bf16.msra.mxu0 0
        %577 = vmatprep.subr.bf16.mxu0 0
        %578 = vmatpush1.bf16.msra.mxu0 0
        %579 = vmatprep.subr.bf16.mxu0 0
        %580 = vmatpush1.bf16.msra.mxu0 0
        %581 = vmatprep.subr.bf16.mxu0 0
        %582 = vmatpush1.bf16.msra.mxu0 0
        %583 = vmatprep.subr.bf16.mxu0 0
        %584 = vmatpush1.bf16.msra.mxu0 0
        %585 = vmatprep.subr.bf16.mxu0 0
        %586 = vmatpush1.bf16.msra.mxu0 0
        %587 = vmatprep.subr.bf16.mxu0 0
        %588 = vmatpush1.bf16.msra.mxu0 0
        %589 = vmatprep.subr.bf16.mxu0 0
        %590 = vmatpush1.bf16.msra.mxu0 0
        %591 = vmatprep.mubr.bf16.mxu0 0
        %592 = vmatmul.mubr.bf16.gmra.mrb[0].mxu0 %v495
        %v593 = vpop.f32.mrb[0].mxu0
        %v594 = vadd.f32 %v461, %v593
        %v595 = vpop.f32.mrb[0].mxu0
        %v596 = vpop.f32.mrb[0].mxu0
        %v597 = vadd.f32 %v461, %v596
        %v598 = vpop.f32.mrb[0].mxu0
        %599 = vmatprep.mubr.bf16.mxu0 0
        %600 = vmatmul.mubr.bf16.gmra.mrb[0].mxu0 %v496
        %v601 = vpop.f32.mrb[0].mxu0
        %v602 = vadd.f32 %v461, %v601
        %v603 = vpop.f32.mrb[0].mxu0
        %v604 = vpop.f32.mrb[0].mxu0
        %v605 = vadd.f32 %v461, %v604
        %v606 = vpop.f32.mrb[0].mxu0
        %607 = vmatprep.mubr.bf16.mxu0 0
        %608 = vmatmul.mubr.bf16.gmra.mrb[0].mxu0 %v497
        %v609 = vpop.f32.mrb[0].mxu0
        %v610 = vadd.f32 %v461, %v609
        %v611 = vpop.f32.mrb[0].mxu0
        %v612 = vpop.f32.mrb[0].mxu0
        %v613 = vadd.f32 %v461, %v612
        %v614 = vpop.f32.mrb[0].mxu0
        %615 = vmatprep.mubr.bf16.mxu0 0
        %616 = vmatmul.mubr.bf16.gmra.mrb[0].mxu0 %v498
        %v617 = vpop.f32.mrb[0].mxu0
        %v618 = vadd.f32 %v461, %v617
        %v619 = vpop.f32.mrb[0].mxu0
        %v620 = vpop.f32.mrb[0].mxu0
        %v621 = vadd.f32 %v461, %v620
        %v622 = vpop.f32.mrb[0].mxu0
        %623 = vmatprep.mubr.bf16.mxu0 0
        %624 = vmatmul.mubr.bf16.gmra.mrb[0].mxu0 %v499
        %v625 = vpop.f32.mrb[0].mxu0
        %v626 = vadd.f32 %v461, %v625
        %v627 = vpop.f32.mrb[0].mxu0
        %v628 = vpop.f32.mrb[0].mxu0
        %v629 = vadd.f32 %v461, %v628
        %v630 = vpop.f32.mrb[0].mxu0
        %631 = vmatprep.mubr.bf16.mxu0 0
        %632 = vmatmul.mubr.bf16.gmra.mrb[0].mxu0 %v500
        %v633 = vpop.f32.mrb[0].mxu0
        %v634 = vadd.f32 %v461, %v633
        %v635 = vpop.f32.mrb[0].mxu0
        %v636 = vpop.f32.mrb[0].mxu0
        %v637 = vadd.f32 %v461, %v636
        %v638 = vpop.f32.mrb[0].mxu0
        %639 = vmatprep.mubr.bf16.mxu0 0
        %640 = vmatmul.mubr.bf16.gmra.mrb[0].mxu0 %v501
        %v641 = vpop.f32.mrb[0].mxu0
        %v642 = vadd.f32 %v461, %v641
        %v643 = vpop.f32.mrb[0].mxu0
        %v644 = vpop.f32.mrb[0].mxu0
        %v645 = vadd.f32 %v461, %v644
        %v646 = vpop.f32.mrb[0].mxu0
        %647 = vmatprep.mubr.bf16.mxu0 0
        %648 = vmatmul.mubr.bf16.gmra.mrb[0].mxu0 %v502
        %v649 = vpop.f32.mrb[0].mxu0
        %v650 = vadd.f32 %v461, %v649
        %v651 = vpop.f32.mrb[0].mxu0
        %v652 = vpop.f32.mrb[0].mxu0
        %v653 = vadd.f32 %v461, %v652
        %v654 = vpop.f32.mrb[0].mxu0
        %655 = vdwg.mxu0
        %vm656 = vcmask 261120
        %v657 = vsel %vm656, %v594, 0.0
        %658 = vadd.xlane.f32.xlu0 %v657
        %v659 = vpop.xlane.xlu0 %658
        %v660 = vsel %vm656, %v597, 0.0
        %661 = vadd.xlane.f32.xlu0 %v660
        %v662 = vpop.xlane.xlu0 %661
        %v663 = vsel %vm656, %v602, 0.0
        %664 = vadd.xlane.f32.xlu0 %v663
        %v665 = vpop.xlane.xlu0 %664
        %v666 = vsel %vm656, %v605, 0.0
        %667 = vadd.xlane.f32.xlu0 %v666
        %v668 = vpop.xlane.xlu0 %667
        %v669 = vsel %vm656, %v610, 0.0
        %670 = vadd.xlane.f32.xlu0 %v669
        %v671 = vpop.xlane.xlu0 %670
        %v672 = vsel %vm656, %v613, 0.0
        %673 = vadd.xlane.f32.xlu0 %v672
        %v674 = vpop.xlane.xlu0 %673
        %v675 = vsel %vm656, %v618, 0.0
        %676 = vadd.xlane.f32.xlu0 %v675
        %v677 = vpop.xlane.xlu0 %676
        %v678 = vsel %vm656, %v621, 0.0
        %679 = vadd.xlane.f32.xlu0 %v678
        %v680 = vpop.xlane.xlu0 %679
        %v681 = vsel %vm656, %v626, 0.0
        %682 = vadd.xlane.f32.xlu0 %v681
        %v683 = vpop.xlane.xlu0 %682
        %v684 = vsel %vm656, %v629, 0.0
        %685 = vadd.xlane.f32.xlu0 %v684
        %v686 = vpop.xlane.xlu0 %685
        %v687 = vsel %vm656, %v634, 0.0
        %688 = vadd.xlane.f32.xlu0 %v687
        %v689 = vpop.xlane.xlu0 %688
        %v690 = vsel %vm656, %v637, 0.0
        %691 = vadd.xlane.f32.xlu0 %v690
        %v692 = vpop.xlane.xlu0 %691
        %v693 = vsel %vm656, %v642, 0.0
        %694 = vadd.xlane.f32.xlu0 %v693
        %v695 = vpop.xlane.xlu0 %694
        %v696 = vsel %vm656, %v645, 0.0
        %697 = vadd.xlane.f32.xlu0 %v696
        %v698 = vpop.xlane.xlu0 %697
        %v699 = vsel %vm656, %v650, 0.0
        %700 = vadd.xlane.f32.xlu0 %v699
        %v701 = vpop.xlane.xlu0 %700
        %v702 = vsel %vm656, %v653, 0.0
        %703 = vadd.xlane.f32.xlu0 %v702
        %v704 = vpop.xlane.xlu0 %703
        %v705 = vrcp.pop 32.0
        %v706 = vmul.f32 %v659, %v705
        %v707 = vmul.f32 %v662, %v705
        %v708 = vmul.f32 %v665, %v705
        %v709 = vmul.f32 %v668, %v705
        %v710 = vmul.f32 %v671, %v705
        %v711 = vmul.f32 %v674, %v705
        %v712 = vmul.f32 %v677, %v705
        %v713 = vmul.f32 %v680, %v705
        %v714 = vmul.f32 %v683, %v705
        %v715 = vmul.f32 %v686, %v705
        %v716 = vmul.f32 %v689, %v705
        %v717 = vmul.f32 %v692, %v705
        %v718 = vmul.f32 %v695, %v705
        %v719 = vmul.f32 %v698, %v705
        %v720 = vmul.f32 %v701, %v705
        %v721 = vmul.f32 %v704, %v705
        %v722 = vsub.f32 %v594, %v706
        %v723 = vsub.f32 %v597, %v707
        %v724 = vsub.f32 %v602, %v708
        %v725 = vsub.f32 %v605, %v709
        %v726 = vsub.f32 %v610, %v710
        %v727 = vsub.f32 %v613, %v711
        %v728 = vsub.f32 %v618, %v712
        %v729 = vsub.f32 %v621, %v713
        %v730 = vsub.f32 %v626, %v714
        %v731 = vsub.f32 %v629, %v715
        %v732 = vsub.f32 %v634, %v716
        %v733 = vsub.f32 %v637, %v717
        %v734 = vsub.f32 %v642, %v718
        %v735 = vsub.f32 %v645, %v719
        %v736 = vsub.f32 %v650, %v720
        %v737 = vsub.f32 %v653, %v721
        %v738 = vmul.f32 %v722, %v722
        %v739 = vmul.f32 %v723, %v723
        %v740 = vmul.f32 %v724, %v724
        %v741 = vmul.f32 %v725, %v725
        %v742 = vmul.f32 %v726, %v726
        %v743 = vmul.f32 %v727, %v727
        %v744 = vmul.f32 %v728, %v728
        %v745 = vmul.f32 %v729, %v729
        %v746 = vmul.f32 %v730, %v730
        %v747 = vmul.f32 %v731, %v731
        %v748 = vmul.f32 %v732, %v732
        %v749 = vmul.f32 %v733, %v733
        %v750 = vmul.f32 %v734, %v734
        %v751 = vmul.f32 %v735, %v735
        %v752 = vmul.f32 %v736, %v736
        %v753 = vmul.f32 %v737, %v737
        %v754 = vsel %vm656, %v738, 0.0
        %755 = vadd.xlane.f32.xlu0 %v754
        %v756 = vpop.xlane.xlu0 %755
        %v757 = vsel %vm656, %v739, 0.0
        %758 = vadd.xlane.f32.xlu0 %v757
        %v759 = vpop.xlane.xlu0 %758
        %v760 = vsel %vm656, %v740, 0.0
        %761 = vadd.xlane.f32.xlu0 %v760
        %v762 = vpop.xlane.xlu0 %761
        %v763 = vsel %vm656, %v741, 0.0
        %764 = vadd.xlane.f32.xlu0 %v763
        %v765 = vpop.xlane.xlu0 %764
        %v766 = vsel %vm656, %v742, 0.0
        %767 = vadd.xlane.f32.xlu0 %v766
        %v768 = vpop.xlane.xlu0 %767
        %v769 = vsel %vm656, %v743, 0.0
        %770 = vadd.xlane.f32.xlu0 %v769
        %v771 = vpop.xlane.xlu0 %770
        %v772 = vsel %vm656, %v744, 0.0
        %773 = vadd.xlane.f32.xlu0 %v772
        %v774 = vpop.xlane.xlu0 %773
        %v775 = vsel %vm656, %v745, 0.0
        %776 = vadd.xlane.f32.xlu0 %v775
        %v777 = vpop.xlane.xlu0 %776
        %v778 = vsel %vm656, %v746, 0.0
        %779 = vadd.xlane.f32.xlu0 %v778
        %v780 = vpop.xlane.xlu0 %779
        %v781 = vsel %vm656, %v747, 0.0
        %782 = vadd.xlane.f32.xlu0 %v781
        %v783 = vpop.xlane.xlu0 %782
        %v784 = vsel %vm656, %v748, 0.0
        %785 = vadd.xlane.f32.xlu0 %v784
        %v786 = vpop.xlane.xlu0 %785
        %v787 = vsel %vm656, %v749, 0.0
        %788 = vadd.xlane.f32.xlu0 %v787
        %v789 = vpop.xlane.xlu0 %788
        %v790 = vsel %vm656, %v750, 0.0
        %791 = vadd.xlane.f32.xlu0 %v790
        %v792 = vpop.xlane.xlu0 %791
        %v793 = vsel %vm656, %v751, 0.0
        %794 = vadd.xlane.f32.xlu0 %v793
        %v795 = vpop.xlane.xlu0 %794
        %v796 = vsel %vm656, %v752, 0.0
        %797 = vadd.xlane.f32.xlu0 %v796
        %v798 = vpop.xlane.xlu0 %797
        %v799 = vsel %vm656, %v753, 0.0
        %800 = vadd.xlane.f32.xlu0 %v799
        %v801 = vpop.xlane.xlu0 %800
        %v802 = vmul.f32 %v756, %v705
        %v803 = vmul.f32 %v759, %v705
        %v804 = vmul.f32 %v762, %v705
        %v805 = vmul.f32 %v765, %v705
        %v806 = vmul.f32 %v768, %v705
        %v807 = vmul.f32 %v771, %v705
        %v808 = vmul.f32 %v774, %v705
        %v809 = vmul.f32 %v777, %v705
        %v810 = vmul.f32 %v780, %v705
        %v811 = vmul.f32 %v783, %v705
        %v812 = vmul.f32 %v786, %v705
        %v813 = vmul.f32 %v789, %v705
        %v814 = vmul.f32 %v792, %v705
        %v815 = vmul.f32 %v795, %v705
        %v816 = vmul.f32 %v798, %v705
        %v817 = vmul.f32 %v801, %v705
        %v818 = vadd.f32 %v802, 1e-05
        %v819 = vadd.f32 %v803, 1e-05
        %v820 = vadd.f32 %v804, 1e-05
        %v821 = vadd.f32 %v805, 1e-05
        %v822 = vadd.f32 %v806, 1e-05
        %v823 = vadd.f32 %v807, 1e-05
        %v824 = vadd.f32 %v808, 1e-05
        %v825 = vadd.f32 %v809, 1e-05
        %v826 = vadd.f32 %v810, 1e-05
        %v827 = vadd.f32 %v811, 1e-05
        %v828 = vadd.f32 %v812, 1e-05
        %v829 = vadd.f32 %v813, 1e-05
        %v830 = vadd.f32 %v814, 1e-05
        %v831 = vadd.f32 %v815, 1e-05
        %v832 = vadd.f32 %v816, 1e-05
        %v833 = vadd.f32 %v817, 1e-05
        %v834 = vrsqrt.pop %v818
        %v835 = vrsqrt.pop %v819
        %v836 = vrsqrt.pop %v820
        %v837 = vrsqrt.pop %v821
        %v838 = vrsqrt.pop %v822
        %v839 = vrsqrt.pop %v823
        %v840 = vrsqrt.pop %v824
        %v841 = vrsqrt.pop %v825
        %v842 = vrsqrt.pop %v826
        %v843 = vrsqrt.pop %v827
        %v844 = vrsqrt.pop %v828
        %v845 = vrsqrt.pop %v829
        %v846 = vrsqrt.pop %v830
        %v847 = vrsqrt.pop %v831
        %v848 = vrsqrt.pop %v832
        %v849 = vrsqrt.pop %v833
        %v850 = vmul.f32 %v722, %v834
        %v851 = vmul.f32 %v723, %v835
        %v852 = vmul.f32 %v724, %v836
        %v853 = vmul.f32 %v725, %v837
        %v854 = vmul.f32 %v726, %v838
        %v855 = vmul.f32 %v727, %v839
        %v856 = vmul.f32 %v728, %v840
        %v857 = vmul.f32 %v729, %v841
        %v858 = vmul.f32 %v730, %v842
        %v859 = vmul.f32 %v731, %v843
        %v860 = vmul.f32 %v732, %v844
        %v861 = vmul.f32 %v733, %v845
        %v862 = vmul.f32 %v734, %v846
        %v863 = vmul.f32 %v735, %v847
        %v864 = vmul.f32 %v736, %v848
        %v865 = vmul.f32 %v737, %v849
        %v866 = vld [vmem:[%s6] sm:$0x1]
        %v868 = vlaneseq
        %v869 = vshrl.u32 %v868, 7
        %v870 = vsub.s32 0, %v869
        %v871 = vrot.slane %v866, %v870
        %v873 = vmul.f32 %v850, %v871
        %v874 = vmul.f32 %v851, %v871
        %v875 = vmul.f32 %v852, %v871
        %v876 = vmul.f32 %v853, %v871
        %v877 = vmul.f32 %v854, %v871
        %v878 = vmul.f32 %v855, %v871
        %v879 = vmul.f32 %v856, %v871
        %v880 = vmul.f32 %v857, %v871
        %v881 = vmul.f32 %v858, %v871
        %v882 = vmul.f32 %v859, %v871
        %v883 = vmul.f32 %v860, %v871
        %v884 = vmul.f32 %v861, %v871
        %v885 = vmul.f32 %v862, %v871
        %v886 = vmul.f32 %v863, %v871
        %v887 = vmul.f32 %v864, %v871
        %v888 = vmul.f32 %v865, %v871
        %v889 = vld [vmem:[%s7] sm:$0x1]
        %v891 = vlaneseq
        %v892 = vshrl.u32 %v891, 7
        %v893 = vsub.s32 0, %v892
        %v894 = vrot.slane %v889, %v893
        %v896 = vadd.f32 %v873, %v894
        %v897 = vadd.f32 %v874, %v894
        %v898 = vadd.f32 %v875, %v894
        %v899 = vadd.f32 %v876, %v894
        %v900 = vadd.f32 %v877, %v894
        %v901 = vadd.f32 %v878, %v894
        %v902 = vadd.f32 %v879, %v894
        %v903 = vadd.f32 %v880, %v894
        %v904 = vadd.f32 %v881, %v894
        %v905 = vadd.f32 %v882, %v894
        %v906 = vadd.f32 %v883, %v894
        %v907 = vadd.f32 %v884, %v894
        %v908 = vadd.f32 %v885, %v894
        %v909 = vadd.f32 %v886, %v894
        %v910 = vadd.f32 %v887, %v894
        %v911 = vadd.f32 %v888, %v894
        %v912 = vpack.c.bf16 %v897, %v896
        %v913 = vpack.c.bf16 %v899, %v898
        %v914 = vpack.c.bf16 %v901, %v900
        %v915 = vpack.c.bf16 %v903, %v902
        %v916 = vpack.c.bf16 %v905, %v904
        %v917 = vpack.c.bf16 %v907, %v906
        %v918 = vpack.c.bf16 %v909, %v908
        %v919 = vpack.c.bf16 %v911, %v910
        %v920 = vld [vmem:[%s3] sm:$0xf]
        %v921 = vld [vmem:[%s3 + $0x4] sm:$0xf]
        %v922 = vld [vmem:[%s3 + $0x8] sm:$0xf]
        %v923 = vld [vmem:[%s3 + $0xc] sm:$0xf]
        %v928 = vunpack.c.l.b16 %v920
        %v929 = vunpack.c.l.b16 %v921
        %v930 = vunpack.c.l.b16 %v922
        %v931 = vunpack.c.l.b16 %v923
        %v932 = vpack.c.b16 %v929, %v928
        %v933 = vpack.c.b16 %v931, %v930
        %v937 = vsel %vm656, %v912, 0
        %v940 = vsel %vm656, %v913, 0
        %v943 = vsel %vm656, %v914, 0
        %v946 = vsel %vm656, %v915, 0
        %v949 = vsel %vm656, %v916, 0
        %v952 = vsel %vm656, %v917, 0
        %v955 = vsel %vm656, %v918, 0
        %v958 = vsel %vm656, %v919, 0
        %960 = vmatprep.subr.bf16.mxu0 0
        %961 = vmatpush1.bf16.msra.mxu0 %v932
        %962 = vmatprep.subr.bf16.mxu0 0
        %963 = vmatpush1.bf16.msra.mxu0 %v933
        %964 = vmatprep.subr.bf16.mxu0 0
        %965 = vmatpush1.bf16.msra.mxu0 0
        %966 = vmatprep.subr.bf16.mxu0 0
        %967 = vmatpush1.bf16.msra.mxu0 0
        %968 = vmatprep.subr.bf16.mxu0 0
        %969 = vmatpush1.bf16.msra.mxu0 0
        %970 = vmatprep.subr.bf16.mxu0 0
        %971 = vmatpush1.bf16.msra.mxu0 0
        %972 = vmatprep.subr.bf16.mxu0 0
        %973 = vmatpush1.bf16.msra.mxu0 0
        %974 = vmatprep.subr.bf16.mxu0 0
        %975 = vmatpush1.bf16.msra.mxu0 0
        %976 = vmatprep.subr.bf16.mxu0 0
        %977 = vmatpush1.bf16.msra.mxu0 0
        %978 = vmatprep.subr.bf16.mxu0 0
        %979 = vmatpush1.bf16.msra.mxu0 0
        %980 = vmatprep.subr.bf16.mxu0 0
        %981 = vmatpush1.bf16.msra.mxu0 0
        %982 = vmatprep.subr.bf16.mxu0 0
        %983 = vmatpush1.bf16.msra.mxu0 0
        %984 = vmatprep.subr.bf16.mxu0 0
        %985 = vmatpush1.bf16.msra.mxu0 0
        %986 = vmatprep.subr.bf16.mxu0 0
        %987 = vmatpush1.bf16.msra.mxu0 0
        %988 = vmatprep.subr.bf16.mxu0 0
        %989 = vmatpush1.bf16.msra.mxu0 0
        %990 = vmatprep.subr.bf16.mxu0 0
        %991 = vmatpush1.bf16.msra.mxu0 0
        %992 = vmatprep.mubr.bf16.mxu0 0
        %993 = vmatmul.mubr.bf16.gmra.mrb[0].mxu0 %v937
        %v994 = vpop.f32.mrb[0].mxu0
        %v995 = vadd.f32 0.0, %v994
        %v996 = vpop.f32.mrb[0].mxu0
        %v997 = vpop.f32.mrb[0].mxu0
        %v998 = vadd.f32 0.0, %v997
        %v999 = vpop.f32.mrb[0].mxu0
        %1000 = vmatprep.mubr.bf16.mxu0 0
        %1001 = vmatmul.mubr.bf16.gmra.mrb[0].mxu0 %v940
        %v1002 = vpop.f32.mrb[0].mxu0
        %v1003 = vadd.f32 0.0, %v1002
        %v1004 = vpop.f32.mrb[0].mxu0
        %v1005 = vpop.f32.mrb[0].mxu0
        %v1006 = vadd.f32 0.0, %v1005
        %v1007 = vpop.f32.mrb[0].mxu0
        %1008 = vmatprep.mubr.bf16.mxu0 0
        %1009 = vmatmul.mubr.bf16.gmra.mrb[0].mxu0 %v943
        %v1010 = vpop.f32.mrb[0].mxu0
        %v1011 = vadd.f32 0.0, %v1010
        %v1012 = vpop.f32.mrb[0].mxu0
        %v1013 = vpop.f32.mrb[0].mxu0
        %v1014 = vadd.f32 0.0, %v1013
        %v1015 = vpop.f32.mrb[0].mxu0
        %1016 = vmatprep.mubr.bf16.mxu0 0
        %1017 = vmatmul.mubr.bf16.gmra.mrb[0].mxu0 %v946
        %v1018 = vpop.f32.mrb[0].mxu0
        %v1019 = vadd.f32 0.0, %v1018
        %v1020 = vpop.f32.mrb[0].mxu0
        %v1021 = vpop.f32.mrb[0].mxu0
        %v1022 = vadd.f32 0.0, %v1021
        %v1023 = vpop.f32.mrb[0].mxu0
        %1024 = vmatprep.mubr.bf16.mxu0 0
        %1025 = vmatmul.mubr.bf16.gmra.mrb[0].mxu0 %v949
        %v1026 = vpop.f32.mrb[0].mxu0
        %v1027 = vadd.f32 0.0, %v1026
        %v1028 = vpop.f32.mrb[0].mxu0
        %v1029 = vpop.f32.mrb[0].mxu0
        %v1030 = vadd.f32 0.0, %v1029
        %v1031 = vpop.f32.mrb[0].mxu0
        %1032 = vmatprep.mubr.bf16.mxu0 0
        %1033 = vmatmul.mubr.bf16.gmra.mrb[0].mxu0 %v952
        %v1034 = vpop.f32.mrb[0].mxu0
        %v1035 = vadd.f32 0.0, %v1034
        %v1036 = vpop.f32.mrb[0].mxu0
        %v1037 = vpop.f32.mrb[0].mxu0
        %v1038 = vadd.f32 0.0, %v1037
        %v1039 = vpop.f32.mrb[0].mxu0
        %1040 = vmatprep.mubr.bf16.mxu0 0
        %1041 = vmatmul.mubr.bf16.gmra.mrb[0].mxu0 %v955
        %v1042 = vpop.f32.mrb[0].mxu0
        %v1043 = vadd.f32 0.0, %v1042
        %v1044 = vpop.f32.mrb[0].mxu0
        %v1045 = vpop.f32.mrb[0].mxu0
        %v1046 = vadd.f32 0.0, %v1045
        %v1047 = vpop.f32.mrb[0].mxu0
        %1048 = vmatprep.mubr.bf16.mxu0 0
        %1049 = vmatmul.mubr.bf16.gmra.mrb[0].mxu0 %v958
        %v1050 = vpop.f32.mrb[0].mxu0
        %v1051 = vadd.f32 0.0, %v1050
        %v1052 = vpop.f32.mrb[0].mxu0
        %v1053 = vpop.f32.mrb[0].mxu0
        %v1054 = vadd.f32 0.0, %v1053
        %v1055 = vpop.f32.mrb[0].mxu0
        %1056 = vdwg.mxu0
        %v1057 = vpack.c.bf16 %v998, %v995
        %v1058 = vpack.c.bf16 %v1006, %v1003
        %v1059 = vpack.c.bf16 %v1014, %v1011
        %v1060 = vpack.c.bf16 %v1022, %v1019
        %v1061 = vpack.c.bf16 %v1030, %v1027
        %v1062 = vpack.c.bf16 %v1038, %v1035
        %v1063 = vpack.c.bf16 %v1046, %v1043
        %v1064 = vpack.c.bf16 %v1054, %v1051
        %1065 = vst.msk [vmem:[#allocation2] sm:$0xff] %vm656, %v1057
        %1066 = vst.msk [vmem:[#allocation2 + $0x8] sm:$0xff] %vm656, %v1058
        %1067 = vst.msk [vmem:[#allocation2 + $0x10] sm:$0xff] %vm656, %v1059
        %1068 = vst.msk [vmem:[#allocation2 + $0x18] sm:$0xff] %vm656, %v1060
        %1069 = vst.msk [vmem:[#allocation2 + $0x20] sm:$0xff] %vm656, %v1061
        %1070 = vst.msk [vmem:[#allocation2 + $0x28] sm:$0xff] %vm656, %v1062
        %1071 = vst.msk [vmem:[#allocation2 + $0x30] sm:$0xff] %vm656, %v1063
        %1072 = vst.msk [vmem:[#allocation2 + $0x38] sm:$0xff] %vm656, %v1064
        %v1073 = vld [vmem:[%s8] sm:$0xf]
        %1082 = vrot.lane.b32.xlu0 %v1057, 96
        %v1083 = vpop.permute.xlu0 %1082
        %1084 = vrot.lane.b32.xlu0 %v1058, 96
        %v1085 = vpop.permute.xlu0 %1084
        %1086 = vrot.lane.b32.xlu0 %v1059, 96
        %v1087 = vpop.permute.xlu0 %1086
        %1088 = vrot.lane.b32.xlu0 %v1060, 96
        %v1089 = vpop.permute.xlu0 %1088
        %1090 = vrot.lane.b32.xlu0 %v1061, 96
        %v1091 = vpop.permute.xlu0 %1090
        %1092 = vrot.lane.b32.xlu0 %v1062, 96
        %v1093 = vpop.permute.xlu0 %1092
        %1094 = vrot.lane.b32.xlu0 %v1063, 96
        %v1095 = vpop.permute.xlu0 %1094
        %1096 = vrot.lane.b32.xlu0 %v1064, 96
        %v1097 = vpop.permute.xlu0 %1096
        %vm1098 = vcmask 64512
        %v1100 = vsel %vm1098, %v1083, 0
        %v1103 = vsel %vm1098, %v1085, 0
        %v1106 = vsel %vm1098, %v1087, 0
        %v1109 = vsel %vm1098, %v1089, 0
        %v1112 = vsel %vm1098, %v1091, 0
        %v1115 = vsel %vm1098, %v1093, 0
        %v1118 = vsel %vm1098, %v1095, 0
        %v1121 = vsel %vm1098, %v1097, 0
        %vm1123 = vcmask 1043456
        %v1125 = vsel %vm1123, %v1073, 0
        %1127 = vmatprep.subr.bf16.mxu0 0
        %1128 = vmatpush1.bf16.msra.mxu0 %v1125
        %1129 = vmatprep.subr.bf16.mxu0 0
        %1130 = vmatpush1.bf16.msra.mxu0 0
        %1131 = vmatprep.subr.bf16.mxu0 0
        %1132 = vmatpush1.bf16.msra.mxu0 0
        %1133 = vmatprep.subr.bf16.mxu0 0
        %1134 = vmatpush1.bf16.msra.mxu0 0
        %1135 = vmatprep.subr.bf16.mxu0 0
        %1136 = vmatpush1.bf16.msra.mxu0 0
        %1137 = vmatprep.subr.bf16.mxu0 0
        %1138 = vmatpush1.bf16.msra.mxu0 0
        %1139 = vmatprep.subr.bf16.mxu0 0
        %1140 = vmatpush1.bf16.msra.mxu0 0
        %1141 = vmatprep.subr.bf16.mxu0 0
        %1142 = vmatpush1.bf16.msra.mxu0 0
        %1143 = vmatprep.subr.bf16.mxu0 0
        %1144 = vmatpush1.bf16.msra.mxu0 0
        %1145 = vmatprep.subr.bf16.mxu0 0
        %1146 = vmatpush1.bf16.msra.mxu0 0
        %1147 = vmatprep.subr.bf16.mxu0 0
        %1148 = vmatpush1.bf16.msra.mxu0 0
        %1149 = vmatprep.subr.bf16.mxu0 0
        %1150 = vmatpush1.bf16.msra.mxu0 0
        %1151 = vmatprep.subr.bf16.mxu0 0
        %1152 = vmatpush1.bf16.msra.mxu0 0
        %1153 = vmatprep.subr.bf16.mxu0 0
        %1154 = vmatpush1.bf16.msra.mxu0 0
        %1155 = vmatprep.subr.bf16.mxu0 0
        %1156 = vmatpush1.bf16.msra.mxu0 0
        %1157 = vmatprep.subr.bf16.mxu0 0
        %1158 = vmatpush1.bf16.msra.mxu0 0
        %1159 = vmatprep.mubr.bf16.mxu0 0
        %1160 = vmatmul.mubr.bf16.gmra.mrb[0].mxu0 %v1100
        %v1161 = vpop.f32.mrb[0].mxu0
        %v1162 = vadd.f32 0.0, %v1161
        %v1163 = vpop.f32.mrb[0].mxu0
        %v1164 = vpop.f32.mrb[0].mxu0
        %v1165 = vadd.f32 0.0, %v1164
        %v1166 = vpop.f32.mrb[0].mxu0
        %1167 = vmatprep.mubr.bf16.mxu0 0
        %1168 = vmatmul.mubr.bf16.gmra.mrb[0].mxu0 %v1103
        %v1169 = vpop.f32.mrb[0].mxu0
        %v1170 = vadd.f32 0.0, %v1169
        %v1171 = vpop.f32.mrb[0].mxu0
        %v1172 = vpop.f32.mrb[0].mxu0
        %v1173 = vadd.f32 0.0, %v1172
        %v1174 = vpop.f32.mrb[0].mxu0
        %1175 = vmatprep.mubr.bf16.mxu0 0
        %1176 = vmatmul.mubr.bf16.gmra.mrb[0].mxu0 %v1106
        %v1177 = vpop.f32.mrb[0].mxu0
        %v1178 = vadd.f32 0.0, %v1177
        %v1179 = vpop.f32.mrb[0].mxu0
        %v1180 = vpop.f32.mrb[0].mxu0
        %v1181 = vadd.f32 0.0, %v1180
        %v1182 = vpop.f32.mrb[0].mxu0
        %1183 = vmatprep.mubr.bf16.mxu0 0
        %1184 = vmatmul.mubr.bf16.gmra.mrb[0].mxu0 %v1109
        %v1185 = vpop.f32.mrb[0].mxu0
        %v1186 = vadd.f32 0.0, %v1185
        %v1187 = vpop.f32.mrb[0].mxu0
        %v1188 = vpop.f32.mrb[0].mxu0
        %v1189 = vadd.f32 0.0, %v1188
        %v1190 = vpop.f32.mrb[0].mxu0
        %1191 = vmatprep.mubr.bf16.mxu0 0
        %1192 = vmatmul.mubr.bf16.gmra.mrb[0].mxu0 %v1112
        %v1193 = vpop.f32.mrb[0].mxu0
        %v1194 = vadd.f32 0.0, %v1193
        %v1195 = vpop.f32.mrb[0].mxu0
        %v1196 = vpop.f32.mrb[0].mxu0
        %v1197 = vadd.f32 0.0, %v1196
        %v1198 = vpop.f32.mrb[0].mxu0
        %1199 = vmatprep.mubr.bf16.mxu0 0
        %1200 = vmatmul.mubr.bf16.gmra.mrb[0].mxu0 %v1115
        %v1201 = vpop.f32.mrb[0].mxu0
        %v1202 = vadd.f32 0.0, %v1201
        %v1203 = vpop.f32.mrb[0].mxu0
        %v1204 = vpop.f32.mrb[0].mxu0
        %v1205 = vadd.f32 0.0, %v1204
        %v1206 = vpop.f32.mrb[0].mxu0
        %1207 = vmatprep.mubr.bf16.mxu0 0
        %1208 = vmatmul.mubr.bf16.gmra.mrb[0].mxu0 %v1118
        %v1209 = vpop.f32.mrb[0].mxu0
        %v1210 = vadd.f32 0.0, %v1209
        %v1211 = vpop.f32.mrb[0].mxu0
        %v1212 = vpop.f32.mrb[0].mxu0
        %v1213 = vadd.f32 0.0, %v1212
        %v1214 = vpop.f32.mrb[0].mxu0
        %1215 = vmatprep.mubr.bf16.mxu0 0
        %1216 = vmatmul.mubr.bf16.gmra.mrb[0].mxu0 %v1121
        %v1217 = vpop.f32.mrb[0].mxu0
        %v1218 = vadd.f32 0.0, %v1217
        %v1219 = vpop.f32.mrb[0].mxu0
        %v1220 = vpop.f32.mrb[0].mxu0
        %v1221 = vadd.f32 0.0, %v1220
        %v1222 = vpop.f32.mrb[0].mxu0
        %1223 = vdwg.mxu0
        %v1224 = vpack.c.bf16 %v1165, %v1162
        %v1225 = vpack.c.bf16 %v1173, %v1170
        %v1226 = vpack.c.bf16 %v1181, %v1178
        %v1227 = vpack.c.bf16 %v1189, %v1186
        %v1228 = vpack.c.bf16 %v1197, %v1194
        %v1229 = vpack.c.bf16 %v1205, %v1202
        %v1230 = vpack.c.bf16 %v1213, %v1210
        %v1231 = vpack.c.bf16 %v1221, %v1218
        %1232 = vst.msk [vmem:[#allocation3] sm:$0xff] %vm656, %v1224
        %1233 = vst.msk [vmem:[#allocation3 + $0x8] sm:$0xff] %vm656, %v1225
        %1234 = vst.msk [vmem:[#allocation3 + $0x10] sm:$0xff] %vm656, %v1226
        %1235 = vst.msk [vmem:[#allocation3 + $0x18] sm:$0xff] %vm656, %v1227
        %1236 = vst.msk [vmem:[#allocation3 + $0x20] sm:$0xff] %vm656, %v1228
        %1237 = vst.msk [vmem:[#allocation3 + $0x28] sm:$0xff] %vm656, %v1229
        %1238 = vst.msk [vmem:[#allocation3 + $0x30] sm:$0xff] %vm656, %v1230
        %1239 = vst.msk [vmem:[#allocation3 + $0x38] sm:$0xff] %vm656, %v1231
        %v1240 = vld [vmem:[%s8 + $0x4] sm:$0xf]
        %1241 = vrot.lane.b32.xlu0 %v1057, 88
        %v1242 = vpop.permute.xlu0 %1241
        %1243 = vrot.lane.b32.xlu0 %v1058, 88
        %v1244 = vpop.permute.xlu0 %1243
        %1245 = vrot.lane.b32.xlu0 %v1059, 88
        %v1246 = vpop.permute.xlu0 %1245
        %1247 = vrot.lane.b32.xlu0 %v1060, 88
        %v1248 = vpop.permute.xlu0 %1247
        %1249 = vrot.lane.b32.xlu0 %v1061, 88
        %v1250 = vpop.permute.xlu0 %1249
        %1251 = vrot.lane.b32.xlu0 %v1062, 88
        %v1252 = vpop.permute.xlu0 %1251
        %1253 = vrot.lane.b32.xlu0 %v1063, 88
        %v1254 = vpop.permute.xlu0 %1253
        %1255 = vrot.lane.b32.xlu0 %v1064, 88
        %v1256 = vpop.permute.xlu0 %1255
        %v1258 = vsel %vm1098, %v1242, 0
        %v1261 = vsel %vm1098, %v1244, 0
        %v1264 = vsel %vm1098, %v1246, 0
        %v1267 = vsel %vm1098, %v1248, 0
        %v1270 = vsel %vm1098, %v1250, 0
        %v1273 = vsel %vm1098, %v1252, 0
        %v1276 = vsel %vm1098, %v1254, 0
        %v1279 = vsel %vm1098, %v1256, 0
        %v1282 = vsel %vm1123, %v1240, 0
        %1284 = vmatprep.subr.bf16.mxu0 0
        %1285 = vmatpush1.bf16.msra.mxu0 %v1282
        %1286 = vmatprep.subr.bf16.mxu0 0
        %1287 = vmatpush1.bf16.msra.mxu0 0
        %1288 = vmatprep.subr.bf16.mxu0 0
        %1289 = vmatpush1.bf16.msra.mxu0 0
        %1290 = vmatprep.subr.bf16.mxu0 0
        %1291 = vmatpush1.bf16.msra.mxu0 0
        %1292 = vmatprep.subr.bf16.mxu0 0
        %1293 = vmatpush1.bf16.msra.mxu0 0
        %1294 = vmatprep.subr.bf16.mxu0 0
        %1295 = vmatpush1.bf16.msra.mxu0 0
        %1296 = vmatprep.subr.bf16.mxu0 0
        %1297 = vmatpush1.bf16.msra.mxu0 0
        %1298 = vmatprep.subr.bf16.mxu0 0
        %1299 = vmatpush1.bf16.msra.mxu0 0
        %1300 = vmatprep.subr.bf16.mxu0 0
        %1301 = vmatpush1.bf16.msra.mxu0 0
        %1302 = vmatprep.subr.bf16.mxu0 0
        %1303 = vmatpush1.bf16.msra.mxu0 0
        %1304 = vmatprep.subr.bf16.mxu0 0
        %1305 = vmatpush1.bf16.msra.mxu0 0
        %1306 = vmatprep.subr.bf16.mxu0 0
        %1307 = vmatpush1.bf16.msra.mxu0 0
        %1308 = vmatprep.subr.bf16.mxu0 0
        %1309 = vmatpush1.bf16.msra.mxu0 0
        %1310 = vmatprep.subr.bf16.mxu0 0
        %1311 = vmatpush1.bf16.msra.mxu0 0
        %1312 = vmatprep.subr.bf16.mxu0 0
        %1313 = vmatpush1.bf16.msra.mxu0 0
        %1314 = vmatprep.subr.bf16.mxu0 0
        %1315 = vmatpush1.bf16.msra.mxu0 0
        %1316 = vmatprep.mubr.bf16.mxu0 0
        %1317 = vmatmul.mubr.bf16.gmra.mrb[0].mxu0 %v1258
        %v1318 = vpop.f32.mrb[0].mxu0
        %v1319 = vadd.f32 0.0, %v1318
        %v1320 = vpop.f32.mrb[0].mxu0
        %v1321 = vpop.f32.mrb[0].mxu0
        %v1322 = vadd.f32 0.0, %v1321
        %v1323 = vpop.f32.mrb[0].mxu0
        %1324 = vmatprep.mubr.bf16.mxu0 0
        %1325 = vmatmul.mubr.bf16.gmra.mrb[0].mxu0 %v1261
        %v1326 = vpop.f32.mrb[0].mxu0
        %v1327 = vadd.f32 0.0, %v1326
        %v1328 = vpop.f32.mrb[0].mxu0
        %v1329 = vpop.f32.mrb[0].mxu0
        %v1330 = vadd.f32 0.0, %v1329
        %v1331 = vpop.f32.mrb[0].mxu0
        %1332 = vmatprep.mubr.bf16.mxu0 0
        %1333 = vmatmul.mubr.bf16.gmra.mrb[0].mxu0 %v1264
        %v1334 = vpop.f32.mrb[0].mxu0
        %v1335 = vadd.f32 0.0, %v1334
        %v1336 = vpop.f32.mrb[0].mxu0
        %v1337 = vpop.f32.mrb[0].mxu0
        %v1338 = vadd.f32 0.0, %v1337
        %v1339 = vpop.f32.mrb[0].mxu0
        %1340 = vmatprep.mubr.bf16.mxu0 0
        %1341 = vmatmul.mubr.bf16.gmra.mrb[0].mxu0 %v1267
        %v1342 = vpop.f32.mrb[0].mxu0
        %v1343 = vadd.f32 0.0, %v1342
        %v1344 = vpop.f32.mrb[0].mxu0
        %v1345 = vpop.f32.mrb[0].mxu0
        %v1346 = vadd.f32 0.0, %v1345
        %v1347 = vpop.f32.mrb[0].mxu0
        %1348 = vmatprep.mubr.bf16.mxu0 0
        %1349 = vmatmul.mubr.bf16.gmra.mrb[0].mxu0 %v1270
        %v1350 = vpop.f32.mrb[0].mxu0
        %v1351 = vadd.f32 0.0, %v1350
        %v1352 = vpop.f32.mrb[0].mxu0
        %v1353 = vpop.f32.mrb[0].mxu0
        %v1354 = vadd.f32 0.0, %v1353
        %v1355 = vpop.f32.mrb[0].mxu0
        %1356 = vmatprep.mubr.bf16.mxu0 0
        %1357 = vmatmul.mubr.bf16.gmra.mrb[0].mxu0 %v1273
        %v1358 = vpop.f32.mrb[0].mxu0
        %v1359 = vadd.f32 0.0, %v1358
        %v1360 = vpop.f32.mrb[0].mxu0
        %v1361 = vpop.f32.mrb[0].mxu0
        %v1362 = vadd.f32 0.0, %v1361
        %v1363 = vpop.f32.mrb[0].mxu0
        %1364 = vmatprep.mubr.bf16.mxu0 0
        %1365 = vmatmul.mubr.bf16.gmra.mrb[0].mxu0 %v1276
        %v1366 = vpop.f32.mrb[0].mxu0
        %v1367 = vadd.f32 0.0, %v1366
        %v1368 = vpop.f32.mrb[0].mxu0
        %v1369 = vpop.f32.mrb[0].mxu0
        %v1370 = vadd.f32 0.0, %v1369
        %v1371 = vpop.f32.mrb[0].mxu0
        %1372 = vmatprep.mubr.bf16.mxu0 0
        %1373 = vmatmul.mubr.bf16.gmra.mrb[0].mxu0 %v1279
        %v1374 = vpop.f32.mrb[0].mxu0
        %v1375 = vadd.f32 0.0, %v1374
        %v1376 = vpop.f32.mrb[0].mxu0
        %v1377 = vpop.f32.mrb[0].mxu0
        %v1378 = vadd.f32 0.0, %v1377
        %v1379 = vpop.f32.mrb[0].mxu0
        %1380 = vdwg.mxu0
        %v1381 = vpack.c.bf16 %v1322, %v1319
        %v1382 = vpack.c.bf16 %v1330, %v1327
        %v1383 = vpack.c.bf16 %v1338, %v1335
        %v1384 = vpack.c.bf16 %v1346, %v1343
        %v1385 = vpack.c.bf16 %v1354, %v1351
        %v1386 = vpack.c.bf16 %v1362, %v1359
        %v1387 = vpack.c.bf16 %v1370, %v1367
        %v1388 = vpack.c.bf16 %v1378, %v1375
        %s1389 = scalar_lea.vmem [#allocation3], 64
        %1390 = vst.msk [vmem:[%s1389] sm:$0xff] %vm656, %v1381
        %1391 = vst.msk [vmem:[%s1389 + $0x8] sm:$0xff] %vm656, %v1382
        %1392 = vst.msk [vmem:[%s1389 + $0x10] sm:$0xff] %vm656, %v1383
        %1393 = vst.msk [vmem:[%s1389 + $0x18] sm:$0xff] %vm656, %v1384
        %1394 = vst.msk [vmem:[%s1389 + $0x20] sm:$0xff] %vm656, %v1385
        %1395 = vst.msk [vmem:[%s1389 + $0x28] sm:$0xff] %vm656, %v1386
        %1396 = vst.msk [vmem:[%s1389 + $0x30] sm:$0xff] %vm656, %v1387
        %1397 = vst.msk [vmem:[%s1389 + $0x38] sm:$0xff] %vm656, %v1388
        %v1398 = vld [vmem:[%s8 + $0x8] sm:$0xf]
        %1399 = vrot.lane.b32.xlu0 %v1057, 80
        %v1400 = vpop.permute.xlu0 %1399
        %1401 = vrot.lane.b32.xlu0 %v1058, 80
        %v1402 = vpop.permute.xlu0 %1401
        %1403 = vrot.lane.b32.xlu0 %v1059, 80
        %v1404 = vpop.permute.xlu0 %1403
        %1405 = vrot.lane.b32.xlu0 %v1060, 80
        %v1406 = vpop.permute.xlu0 %1405
        %1407 = vrot.lane.b32.xlu0 %v1061, 80
        %v1408 = vpop.permute.xlu0 %1407
        %1409 = vrot.lane.b32.xlu0 %v1062, 80
        %v1410 = vpop.permute.xlu0 %1409
        %1411 = vrot.lane.b32.xlu0 %v1063, 80
        %v1412 = vpop.permute.xlu0 %1411
        %1413 = vrot.lane.b32.xlu0 %v1064, 80
        %v1414 = vpop.permute.xlu0 %1413
        %v1416 = vsel %vm1098, %v1400, 0
        %v1419 = vsel %vm1098, %v1402, 0
        %v1422 = vsel %vm1098, %v1404, 0
        %v1425 = vsel %vm1098, %v1406, 0
        %v1428 = vsel %vm1098, %v1408, 0
        %v1431 = vsel %vm1098, %v1410, 0
        %v1434 = vsel %vm1098, %v1412, 0
        %v1437 = vsel %vm1098, %v1414, 0
        %v1440 = vsel %vm1123, %v1398, 0
        %1442 = vmatprep.subr.bf16.mxu0 0
        %1443 = vmatpush1.bf16.msra.mxu0 %v1440
        %1444 = vmatprep.subr.bf16.mxu0 0
        %1445 = vmatpush1.bf16.msra.mxu0 0
        %1446 = vmatprep.subr.bf16.mxu0 0
        %1447 = vmatpush1.bf16.msra.mxu0 0
        %1448 = vmatprep.subr.bf16.mxu0 0
        %1449 = vmatpush1.bf16.msra.mxu0 0
        %1450 = vmatprep.subr.bf16.mxu0 0
        %1451 = vmatpush1.bf16.msra.mxu0 0
        %1452 = vmatprep.subr.bf16.mxu0 0
        %1453 = vmatpush1.bf16.msra.mxu0 0
        %1454 = vmatprep.subr.bf16.mxu0 0
        %1455 = vmatpush1.bf16.msra.mxu0 0
        %1456 = vmatprep.subr.bf16.mxu0 0
        %1457 = vmatpush1.bf16.msra.mxu0 0
        %1458 = vmatprep.subr.bf16.mxu0 0
        %1459 = vmatpush1.bf16.msra.mxu0 0
        %1460 = vmatprep.subr.bf16.mxu0 0
        %1461 = vmatpush1.bf16.msra.mxu0 0
        %1462 = vmatprep.subr.bf16.mxu0 0
        %1463 = vmatpush1.bf16.msra.mxu0 0
        %1464 = vmatprep.subr.bf16.mxu0 0
        %1465 = vmatpush1.bf16.msra.mxu0 0
        %1466 = vmatprep.subr.bf16.mxu0 0
        %1467 = vmatpush1.bf16.msra.mxu0 0
        %1468 = vmatprep.subr.bf16.mxu0 0
        %1469 = vmatpush1.bf16.msra.mxu0 0
        %1470 = vmatprep.subr.bf16.mxu0 0
        %1471 = vmatpush1.bf16.msra.mxu0 0
        %1472 = vmatprep.subr.bf16.mxu0 0
        %1473 = vmatpush1.bf16.msra.mxu0 0
        %1474 = vmatprep.mubr.bf16.mxu0 0
        %1475 = vmatmul.mubr.bf16.gmra.mrb[0].mxu0 %v1416
        %v1476 = vpop.f32.mrb[0].mxu0
        %v1477 = vadd.f32 0.0, %v1476
        %v1478 = vpop.f32.mrb[0].mxu0
        %v1479 = vpop.f32.mrb[0].mxu0
        %v1480 = vadd.f32 0.0, %v1479
        %v1481 = vpop.f32.mrb[0].mxu0
        %1482 = vmatprep.mubr.bf16.mxu0 0
        %1483 = vmatmul.mubr.bf16.gmra.mrb[0].mxu0 %v1419
        %v1484 = vpop.f32.mrb[0].mxu0
        %v1485 = vadd.f32 0.0, %v1484
        %v1486 = vpop.f32.mrb[0].mxu0
        %v1487 = vpop.f32.mrb[0].mxu0
        %v1488 = vadd.f32 0.0, %v1487
        %v1489 = vpop.f32.mrb[0].mxu0
        %1490 = vmatprep.mubr.bf16.mxu0 0
        %1491 = vmatmul.mubr.bf16.gmra.mrb[0].mxu0 %v1422
        %v1492 = vpop.f32.mrb[0].mxu0
        %v1493 = vadd.f32 0.0, %v1492
        %v1494 = vpop.f32.mrb[0].mxu0
        %v1495 = vpop.f32.mrb[0].mxu0
        %v1496 = vadd.f32 0.0, %v1495
        %v1497 = vpop.f32.mrb[0].mxu0
        %1498 = vmatprep.mubr.bf16.mxu0 0
        %1499 = vmatmul.mubr.bf16.gmra.mrb[0].mxu0 %v1425
        %v1500 = vpop.f32.mrb[0].mxu0
        %v1501 = vadd.f32 0.0, %v1500
        %v1502 = vpop.f32.mrb[0].mxu0
        %v1503 = vpop.f32.mrb[0].mxu0
        %v1504 = vadd.f32 0.0, %v1503
        %v1505 = vpop.f32.mrb[0].mxu0
        %1506 = vmatprep.mubr.bf16.mxu0 0
        %1507 = vmatmul.mubr.bf16.gmra.mrb[0].mxu0 %v1428
        %v1508 = vpop.f32.mrb[0].mxu0
        %v1509 = vadd.f32 0.0, %v1508
        %v1510 = vpop.f32.mrb[0].mxu0
        %v1511 = vpop.f32.mrb[0].mxu0
        %v1512 = vadd.f32 0.0, %v1511
        %v1513 = vpop.f32.mrb[0].mxu0
        %1514 = vmatprep.mubr.bf16.mxu0 0
        %1515 = vmatmul.mubr.bf16.gmra.mrb[0].mxu0 %v1431
        %v1516 = vpop.f32.mrb[0].mxu0
        %v1517 = vadd.f32 0.0, %v1516
        %v1518 = vpop.f32.mrb[0].mxu0
        %v1519 = vpop.f32.mrb[0].mxu0
        %v1520 = vadd.f32 0.0, %v1519
        %v1521 = vpop.f32.mrb[0].mxu0
        %1522 = vmatprep.mubr.bf16.mxu0 0
        %1523 = vmatmul.mubr.bf16.gmra.mrb[0].mxu0 %v1434
        %v1524 = vpop.f32.mrb[0].mxu0
        %v1525 = vadd.f32 0.0, %v1524
        %v1526 = vpop.f32.mrb[0].mxu0
        %v1527 = vpop.f32.mrb[0].mxu0
        %v1528 = vadd.f32 0.0, %v1527
        %v1529 = vpop.f32.mrb[0].mxu0
        %1530 = vmatprep.mubr.bf16.mxu0 0
        %1531 = vmatmul.mubr.bf16.gmra.mrb[0].mxu0 %v1437
        %v1532 = vpop.f32.mrb[0].mxu0
        %v1533 = vadd.f32 0.0, %v1532
        %v1534 = vpop.f32.mrb[0].mxu0
        %v1535 = vpop.f32.mrb[0].mxu0
        %v1536 = vadd.f32 0.0, %v1535
        %v1537 = vpop.f32.mrb[0].mxu0
        %1538 = vdwg.mxu0
        %v1539 = vpack.c.bf16 %v1480, %v1477
        %v1540 = vpack.c.bf16 %v1488, %v1485
        %v1541 = vpack.c.bf16 %v1496, %v1493
        %v1542 = vpack.c.bf16 %v1504, %v1501
        %v1543 = vpack.c.bf16 %v1512, %v1509
        %v1544 = vpack.c.bf16 %v1520, %v1517
        %v1545 = vpack.c.bf16 %v1528, %v1525
        %v1546 = vpack.c.bf16 %v1536, %v1533
        %s1547 = scalar_lea.vmem [#allocation3], 128
        %1548 = vst.msk [vmem:[%s1547] sm:$0xff] %vm656, %v1539
        %1549 = vst.msk [vmem:[%s1547 + $0x8] sm:$0xff] %vm656, %v1540
        %1550 = vst.msk [vmem:[%s1547 + $0x10] sm:$0xff] %vm656, %v1541
        %1551 = vst.msk [vmem:[%s1547 + $0x18] sm:$0xff] %vm656, %v1542
        %1552 = vst.msk [vmem:[%s1547 + $0x20] sm:$0xff] %vm656, %v1543
        %1553 = vst.msk [vmem:[%s1547 + $0x28] sm:$0xff] %vm656, %v1544
        %1554 = vst.msk [vmem:[%s1547 + $0x30] sm:$0xff] %vm656, %v1545
        %1555 = vst.msk [vmem:[%s1547 + $0x38] sm:$0xff] %vm656, %v1546
        %v1556 = vld [vmem:[%s8 + $0xc] sm:$0xf]
        %1557 = vrot.lane.b32.xlu0 %v1057, 72
        %v1558 = vpop.permute.xlu0 %1557
        %1559 = vrot.lane.b32.xlu0 %v1058, 72
        %v1560 = vpop.permute.xlu0 %1559
        %1561 = vrot.lane.b32.xlu0 %v1059, 72
        %v1562 = vpop.permute.xlu0 %1561
        %1563 = vrot.lane.b32.xlu0 %v1060, 72
        %v1564 = vpop.permute.xlu0 %1563
        %1565 = vrot.lane.b32.xlu0 %v1061, 72
        %v1566 = vpop.permute.xlu0 %1565
        %1567 = vrot.lane.b32.xlu0 %v1062, 72
        %v1568 = vpop.permute.xlu0 %1567
        %1569 = vrot.lane.b32.xlu0 %v1063, 72
        %v1570 = vpop.permute.xlu0 %1569
        %1571 = vrot.lane.b32.xlu0 %v1064, 72
        %v1572 = vpop.permute.xlu0 %1571
        %v1574 = vsel %vm1098, %v1558, 0
        %v1577 = vsel %vm1098, %v1560, 0
        %v1580 = vsel %vm1098, %v1562, 0
        %v1583 = vsel %vm1098, %v1564, 0
        %v1586 = vsel %vm1098, %v1566, 0
        %v1589 = vsel %vm1098, %v1568, 0
        %v1592 = vsel %vm1098, %v1570, 0
        %v1595 = vsel %vm1098, %v1572, 0
        %v1598 = vsel %vm1123, %v1556, 0
        %1600 = vmatprep.subr.bf16.mxu0 0
        %1601 = vmatpush1.bf16.msra.mxu0 %v1598
        %1602 = vmatprep.subr.bf16.mxu0 0
        %1603 = vmatpush1.bf16.msra.mxu0 0
        %1604 = vmatprep.subr.bf16.mxu0 0
        %1605 = vmatpush1.bf16.msra.mxu0 0
        %1606 = vmatprep.subr.bf16.mxu0 0
        %1607 = vmatpush1.bf16.msra.mxu0 0
        %1608 = vmatprep.subr.bf16.mxu0 0
        %1609 = vmatpush1.bf16.msra.mxu0 0
        %1610 = vmatprep.subr.bf16.mxu0 0
        %1611 = vmatpush1.bf16.msra.mxu0 0
        %1612 = vmatprep.subr.bf16.mxu0 0
        %1613 = vmatpush1.bf16.msra.mxu0 0
        %1614 = vmatprep.subr.bf16.mxu0 0
        %1615 = vmatpush1.bf16.msra.mxu0 0
        %1616 = vmatprep.subr.bf16.mxu0 0
        %1617 = vmatpush1.bf16.msra.mxu0 0
        %1618 = vmatprep.subr.bf16.mxu0 0
        %1619 = vmatpush1.bf16.msra.mxu0 0
        %1620 = vmatprep.subr.bf16.mxu0 0
        %1621 = vmatpush1.bf16.msra.mxu0 0
        %1622 = vmatprep.subr.bf16.mxu0 0
        %1623 = vmatpush1.bf16.msra.mxu0 0
        %1624 = vmatprep.subr.bf16.mxu0 0
        %1625 = vmatpush1.bf16.msra.mxu0 0
        %1626 = vmatprep.subr.bf16.mxu0 0
        %1627 = vmatpush1.bf16.msra.mxu0 0
        %1628 = vmatprep.subr.bf16.mxu0 0
        %1629 = vmatpush1.bf16.msra.mxu0 0
        %1630 = vmatprep.subr.bf16.mxu0 0
        %1631 = vmatpush1.bf16.msra.mxu0 0
        %1632 = vmatprep.mubr.bf16.mxu0 0
        %1633 = vmatmul.mubr.bf16.gmra.mrb[0].mxu0 %v1574
        %v1634 = vpop.f32.mrb[0].mxu0
        %v1635 = vadd.f32 0.0, %v1634
        %v1636 = vpop.f32.mrb[0].mxu0
        %v1637 = vpop.f32.mrb[0].mxu0
        %v1638 = vadd.f32 0.0, %v1637
        %v1639 = vpop.f32.mrb[0].mxu0
        %1640 = vmatprep.mubr.bf16.mxu0 0
        %1641 = vmatmul.mubr.bf16.gmra.mrb[0].mxu0 %v1577
        %v1642 = vpop.f32.mrb[0].mxu0
        %v1643 = vadd.f32 0.0, %v1642
        %v1644 = vpop.f32.mrb[0].mxu0
        %v1645 = vpop.f32.mrb[0].mxu0
        %v1646 = vadd.f32 0.0, %v1645
        %v1647 = vpop.f32.mrb[0].mxu0
        %1648 = vmatprep.mubr.bf16.mxu0 0
        %1649 = vmatmul.mubr.bf16.gmra.mrb[0].mxu0 %v1580
        %v1650 = vpop.f32.mrb[0].mxu0
        %v1651 = vadd.f32 0.0, %v1650
        %v1652 = vpop.f32.mrb[0].mxu0
        %v1653 = vpop.f32.mrb[0].mxu0
        %v1654 = vadd.f32 0.0, %v1653
        %v1655 = vpop.f32.mrb[0].mxu0
        %1656 = vmatprep.mubr.bf16.mxu0 0
        %1657 = vmatmul.mubr.bf16.gmra.mrb[0].mxu0 %v1583
        %v1658 = vpop.f32.mrb[0].mxu0
        %v1659 = vadd.f32 0.0, %v1658
        %v1660 = vpop.f32.mrb[0].mxu0
        %v1661 = vpop.f32.mrb[0].mxu0
        %v1662 = vadd.f32 0.0, %v1661
        %v1663 = vpop.f32.mrb[0].mxu0
        %1664 = vmatprep.mubr.bf16.mxu0 0
        %1665 = vmatmul.mubr.bf16.gmra.mrb[0].mxu0 %v1586
        %v1666 = vpop.f32.mrb[0].mxu0
        %v1667 = vadd.f32 0.0, %v1666
        %v1668 = vpop.f32.mrb[0].mxu0
        %v1669 = vpop.f32.mrb[0].mxu0
        %v1670 = vadd.f32 0.0, %v1669
        %v1671 = vpop.f32.mrb[0].mxu0
        %1672 = vmatprep.mubr.bf16.mxu0 0
        %1673 = vmatmul.mubr.bf16.gmra.mrb[0].mxu0 %v1589
        %v1674 = vpop.f32.mrb[0].mxu0
        %v1675 = vadd.f32 0.0, %v1674
        %v1676 = vpop.f32.mrb[0].mxu0
        %v1677 = vpop.f32.mrb[0].mxu0
        %v1678 = vadd.f32 0.0, %v1677
        %v1679 = vpop.f32.mrb[0].mxu0
        %1680 = vmatprep.mubr.bf16.mxu0 0
        %1681 = vmatmul.mubr.bf16.gmra.mrb[0].mxu0 %v1592
        %v1682 = vpop.f32.mrb[0].mxu0
        %v1683 = vadd.f32 0.0, %v1682
        %v1684 = vpop.f32.mrb[0].mxu0
        %v1685 = vpop.f32.mrb[0].mxu0
        %v1686 = vadd.f32 0.0, %v1685
        %v1687 = vpop.f32.mrb[0].mxu0
        %1688 = vmatprep.mubr.bf16.mxu0 0
        %1689 = vmatmul.mubr.bf16.gmra.mrb[0].mxu0 %v1595
        %v1690 = vpop.f32.mrb[0].mxu0
        %v1691 = vadd.f32 0.0, %v1690
        %v1692 = vpop.f32.mrb[0].mxu0
        %v1693 = vpop.f32.mrb[0].mxu0
        %v1694 = vadd.f32 0.0, %v1693
        %v1695 = vpop.f32.mrb[0].mxu0
        %1696 = vdwg.mxu0
        %v1697 = vpack.c.bf16 %v1638, %v1635
        %v1698 = vpack.c.bf16 %v1646, %v1643
        %v1699 = vpack.c.bf16 %v1654, %v1651
        %v1700 = vpack.c.bf16 %v1662, %v1659
        %v1701 = vpack.c.bf16 %v1670, %v1667
        %v1702 = vpack.c.bf16 %v1678, %v1675
        %v1703 = vpack.c.bf16 %v1686, %v1683
        %v1704 = vpack.c.bf16 %v1694, %v1691
        %s1705 = scalar_lea.vmem [#allocation3], 192
        %1706 = vst.msk [vmem:[%s1705] sm:$0xff] %vm656, %v1697
        %1707 = vst.msk [vmem:[%s1705 + $0x8] sm:$0xff] %vm656, %v1698
        %1708 = vst.msk [vmem:[%s1705 + $0x10] sm:$0xff] %vm656, %v1699
        %1709 = vst.msk [vmem:[%s1705 + $0x18] sm:$0xff] %vm656, %v1700
        %1710 = vst.msk [vmem:[%s1705 + $0x20] sm:$0xff] %vm656, %v1701
        %1711 = vst.msk [vmem:[%s1705 + $0x28] sm:$0xff] %vm656, %v1702
        %1712 = vst.msk [vmem:[%s1705 + $0x30] sm:$0xff] %vm656, %v1703
        %1713 = vst.msk [vmem:[%s1705 + $0x38] sm:$0xff] %vm656, %v1704
      $region64: #{tpu_custom_call.1} parent=59 // pred_fallthru
        _
      %v1714 = vld [vmem:[%s402] sm:$0xf]
      %v1715 = vld [vmem:[%s402 + $0x4] sm:$0xf]
      %v1716 = vld [vmem:[%s402 + $0x8] sm:$0xf]
      %v1717 = vld [vmem:[%s402 + $0xc] sm:$0xf]
      %v1718 = vld [vmem:[%s402 + $0x10] sm:$0xf]
      %v1719 = vld [vmem:[%s402 + $0x14] sm:$0xf]
      %v1720 = vld [vmem:[%s402 + $0x18] sm:$0xf]
      %v1721 = vld [vmem:[%s402 + $0x1c] sm:$0xf]
      %v1722 = vld [vmem:[%s402 + $0x20] sm:$0xf]
      %v1723 = vld [vmem:[%s402 + $0x24] sm:$0xf]
      %v1724 = vld [vmem:[%s402 + $0x28] sm:$0xf]
      %v1725 = vld [vmem:[%s402 + $0x2c] sm:$0xf]
      %v1726 = vld [vmem:[%s402 + $0x30] sm:$0xf]
      %v1727 = vld [vmem:[%s402 + $0x34] sm:$0xf]
      %v1728 = vld [vmem:[%s402 + $0x38] sm:$0xf]
      %v1729 = vld [vmem:[%s402 + $0x3c] sm:$0xf]
      %v1730 = vld [vmem:[%s2] sm:$0xf]
      %v1731 = vld [vmem:[%s2 + $0x4] sm:$0xf]
      %v1732 = vld [vmem:[%s2 + $0x8] sm:$0xf]
      %v1733 = vld [vmem:[%s2 + $0xc] sm:$0xf]
      %v1750 = vunpack.c.l.b16 %v1714
      %v1751 = vunpack.c.l.b16 %v1715
      %v1752 = vunpack.c.l.b16 %v1716
      %v1753 = vunpack.c.l.b16 %v1717
      %v1754 = vunpack.c.l.b16 %v1718
      %v1755 = vunpack.c.l.b16 %v1719
      %v1756 = vunpack.c.l.b16 %v1720
      %v1757 = vunpack.c.l.b16 %v1721
      %v1758 = vunpack.c.l.b16 %v1722
      %v1759 = vunpack.c.l.b16 %v1723
      %v1760 = vunpack.c.l.b16 %v1724
      %v1761 = vunpack.c.l.b16 %v1725
      %v1762 = vunpack.c.l.b16 %v1726
      %v1763 = vunpack.c.l.b16 %v1727
      %v1764 = vunpack.c.l.b16 %v1728
      %v1765 = vunpack.c.l.b16 %v1729
      %v1766 = vpack.c.b16 %v1751, %v1750
      %v1767 = vpack.c.b16 %v1753, %v1752
      %v1768 = vpack.c.b16 %v1755, %v1754
      %v1769 = vpack.c.b16 %v1757, %v1756
      %v1770 = vpack.c.b16 %v1759, %v1758
      %v1771 = vpack.c.b16 %v1761, %v1760
      %v1772 = vpack.c.b16 %v1763, %v1762
      %v1773 = vpack.c.b16 %v1765, %v1764
      %v1778 = vunpack.c.l.b16 %v1730
      %v1779 = vunpack.c.l.b16 %v1731
      %v1780 = vunpack.c.l.b16 %v1732
      %v1781 = vunpack.c.l.b16 %v1733
      %v1782 = vpack.c.b16 %v1779, %v1778
      %v1783 = vpack.c.b16 %v1781, %v1780
      %vm1786 = vcmask 261120
      %v1788 = vsel %vm1786, %v1766, 0
      %v1791 = vsel %vm1786, %v1767, 0
      %v1794 = vsel %vm1786, %v1768, 0
      %v1797 = vsel %vm1786, %v1769, 0
      %v1800 = vsel %vm1786, %v1770, 0
      %v1803 = vsel %vm1786, %v1771, 0
      %v1806 = vsel %vm1786, %v1772, 0
      %v1809 = vsel %vm1786, %v1773, 0
      %1811 = vmatprep.subr.bf16.mxu0 0
      %1812 = vmatpush1.bf16.msra.mxu0 %v1782
      %1813 = vmatprep.subr.bf16.mxu0 0
      %1814 = vmatpush1.bf16.msra.mxu0 %v1783
      %1815 = vmatprep.subr.bf16.mxu0 0
      %1816 = vmatpush1.bf16.msra.mxu0 0
      %1817 = vmatprep.subr.bf16.mxu0 0
      %1818 = vmatpush1.bf16.msra.mxu0 0
      %1819 = vmatprep.subr.bf16.mxu0 0
      %1820 = vmatpush1.bf16.msra.mxu0 0
      %1821 = vmatprep.subr.bf16.mxu0 0
      %1822 = vmatpush1.bf16.msra.mxu0 0
      %1823 = vmatprep.subr.bf16.mxu0 0
      %1824 = vmatpush1.bf16.msra.mxu0 0
      %1825 = vmatprep.subr.bf16.mxu0 0
      %1826 = vmatpush1.bf16.msra.mxu0 0
      %1827 = vmatprep.subr.bf16.mxu0 0
      %1828 = vmatpush1.bf16.msra.mxu0 0
      %1829 = vmatprep.subr.bf16.mxu0 0
      %1830 = vmatpush1.bf16.msra.mxu0 0
      %1831 = vmatprep.subr.bf16.mxu0 0
      %1832 = vmatpush1.bf16.msra.mxu0 0
      %1833 = vmatprep.subr.bf16.mxu0 0
      %1834 = vmatpush1.bf16.msra.mxu0 0
      %1835 = vmatprep.subr.bf16.mxu0 0
      %1836 = vmatpush1.bf16.msra.mxu0 0
      %1837 = vmatprep.subr.bf16.mxu0 0
      %1838 = vmatpush1.bf16.msra.mxu0 0
      %1839 = vmatprep.subr.bf16.mxu0 0
      %1840 = vmatpush1.bf16.msra.mxu0 0
      %1841 = vmatprep.subr.bf16.mxu0 0
      %1842 = vmatpush1.bf16.msra.mxu0 0
      %1843 = vmatprep.mubr.bf16.mxu0 0
      %1844 = vmatmul.mubr.bf16.gmra.mrb[0].mxu0 %v1788
      %v1845 = vpop.f32.mrb[0].mxu0
      %v1846 = vadd.f32 0.0, %v1845
      %v1847 = vpop.f32.mrb[0].mxu0
      %v1848 = vpop.f32.mrb[0].mxu0
      %v1849 = vadd.f32 0.0, %v1848
      %v1850 = vpop.f32.mrb[0].mxu0
      %1851 = vmatprep.mubr.bf16.mxu0 0
      %1852 = vmatmul.mubr.bf16.gmra.mrb[0].mxu0 %v1791
      %v1853 = vpop.f32.mrb[0].mxu0
      %v1854 = vadd.f32 0.0, %v1853
      %v1855 = vpop.f32.mrb[0].mxu0
      %v1856 = vpop.f32.mrb[0].mxu0
      %v1857 = vadd.f32 0.0, %v1856
      %v1858 = vpop.f32.mrb[0].mxu0
      %1859 = vmatprep.mubr.bf16.mxu0 0
      %1860 = vmatmul.mubr.bf16.gmra.mrb[0].mxu0 %v1794
      %v1861 = vpop.f32.mrb[0].mxu0
      %v1862 = vadd.f32 0.0, %v1861
      %v1863 = vpop.f32.mrb[0].mxu0
      %v1864 = vpop.f32.mrb[0].mxu0
      %v1865 = vadd.f32 0.0, %v1864
      %v1866 = vpop.f32.mrb[0].mxu0
      %1867 = vmatprep.mubr.bf16.mxu0 0
      %1868 = vmatmul.mubr.bf16.gmra.mrb[0].mxu0 %v1797
      %v1869 = vpop.f32.mrb[0].mxu0
      %v1870 = vadd.f32 0.0, %v1869
      %v1871 = vpop.f32.mrb[0].mxu0
      %v1872 = vpop.f32.mrb[0].mxu0
      %v1873 = vadd.f32 0.0, %v1872
      %v1874 = vpop.f32.mrb[0].mxu0
      %1875 = vmatprep.mubr.bf16.mxu0 0
      %1876 = vmatmul.mubr.bf16.gmra.mrb[0].mxu0 %v1800
      %v1877 = vpop.f32.mrb[0].mxu0
      %v1878 = vadd.f32 0.0, %v1877
      %v1879 = vpop.f32.mrb[0].mxu0
      %v1880 = vpop.f32.mrb[0].mxu0
      %v1881 = vadd.f32 0.0, %v1880
      %v1882 = vpop.f32.mrb[0].mxu0
      %1883 = vmatprep.mubr.bf16.mxu0 0
      %1884 = vmatmul.mubr.bf16.gmra.mrb[0].mxu0 %v1803
      %v1885 = vpop.f32.mrb[0].mxu0
      %v1886 = vadd.f32 0.0, %v1885
      %v1887 = vpop.f32.mrb[0].mxu0
      %v1888 = vpop.f32.mrb[0].mxu0
      %v1889 = vadd.f32 0.0, %v1888
      %v1890 = vpop.f32.mrb[0].mxu0
      %1891 = vmatprep.mubr.bf16.mxu0 0
      %1892 = vmatmul.mubr.bf16.gmra.mrb[0].mxu0 %v1806
      %v1893 = vpop.f32.mrb[0].mxu0
      %v1894 = vadd.f32 0.0, %v1893
      %v1895 = vpop.f32.mrb[0].mxu0
      %v1896 = vpop.f32.mrb[0].mxu0
      %v1897 = vadd.f32 0.0, %v1896
      %v1898 = vpop.f32.mrb[0].mxu0
      %1899 = vmatprep.mubr.bf16.mxu0 0
      %1900 = vmatmul.mubr.bf16.gmra.mrb[0].mxu0 %v1809
      %v1901 = vpop.f32.mrb[0].mxu0
      %v1902 = vadd.f32 0.0, %v1901
      %v1903 = vpop.f32.mrb[0].mxu0
      %v1904 = vpop.f32.mrb[0].mxu0
      %v1905 = vadd.f32 0.0, %v1904
      %v1906 = vpop.f32.mrb[0].mxu0
      %1907 = vdwg.mxu0
      %v1908 = vpack.c.bf16 %v1849, %v1846
      %v1909 = vpack.c.bf16 %v1857, %v1854
      %v1910 = vpack.c.bf16 %v1865, %v1862
      %v1911 = vpack.c.bf16 %v1873, %v1870
      %v1912 = vpack.c.bf16 %v1881, %v1878
      %v1913 = vpack.c.bf16 %v1889, %v1886
      %v1914 = vpack.c.bf16 %v1897, %v1894
      %v1915 = vpack.c.bf16 %v1905, %v1902
      %v1916 = vlaneseq
      %v1917 = vand.u32 %v1916, 127
      %vm1918 = vcmp.ge.s32.totalorder %v1917, 64
      %v1919 = vld [vmem:[#allocation2] sm:$0xff]
      %v1920 = vld [vmem:[#allocation2 + $0x8] sm:$0xff]
      %v1921 = vld [vmem:[#allocation2 + $0x10] sm:$0xff]
      %v1922 = vld [vmem:[#allocation2 + $0x18] sm:$0xff]
      %v1923 = vld [vmem:[#allocation2 + $0x20] sm:$0xff]
      %v1924 = vld [vmem:[#allocation2 + $0x28] sm:$0xff]
      %v1925 = vld [vmem:[#allocation2 + $0x30] sm:$0xff]
      %v1926 = vld [vmem:[#allocation2 + $0x38] sm:$0xff]
      %vm1927 = vcmask 64512
      %v1929 = vsel %vm1927, %v1908, 0
      %v1932 = vsel %vm1927, %v1909, 0
      %v1935 = vsel %vm1927, %v1910, 0
      %v1938 = vsel %vm1927, %v1911, 0
      %v1941 = vsel %vm1927, %v1912, 0
      %v1944 = vsel %vm1927, %v1913, 0
      %v1947 = vsel %vm1927, %v1914, 0
      %v1950 = vsel %vm1927, %v1915, 0
      %v1953 = vsel %vm1927, %v1919, 0
      %v1956 = vsel %vm1927, %v1920, 0
      %v1959 = vsel %vm1927, %v1921, 0
      %v1962 = vsel %vm1927, %v1922, 0
      %v1965 = vsel %vm1927, %v1923, 0
      %v1968 = vsel %vm1927, %v1924, 0
      %v1971 = vsel %vm1927, %v1925, 0
      %v1974 = vsel %vm1927, %v1926, 0
      %1976 = vmatprep.subr.bf16.mxu0 0
      %1977 = vmatpush1.bf16.xpose.msra.mxu0 %v1953
      %1978 = vmatprep.subr.bf16.mxu0 0
      %1979 = vmatpush1.bf16.xpose.msra.mxu0 %v1956
      %1980 = vmatprep.subr.bf16.mxu0 0
      %1981 = vmatpush1.bf16.xpose.msra.mxu0 %v1959
      %1982 = vmatprep.subr.bf16.mxu0 0
      %1983 = vmatpush1.bf16.xpose.msra.mxu0 %v1962
      %1984 = vmatprep.subr.bf16.mxu0 0
      %1985 = vmatpush1.bf16.xpose.msra.mxu0 %v1965
      %1986 = vmatprep.subr.bf16.mxu0 0
      %1987 = vmatpush1.bf16.xpose.msra.mxu0 %v1968
      %1988 = vmatprep.subr.bf16.mxu0 0
      %1989 = vmatpush1.bf16.xpose.msra.mxu0 %v1971
      %1990 = vmatprep.subr.bf16.mxu0 0
      %1991 = vmatpush1.bf16.xpose.msra.mxu0 %v1974
      %1992 = vmatprep.subr.bf16.mxu0 0
      %1993 = vmatpush1.bf16.xpose.msra.mxu0 0
      %1994 = vmatprep.subr.bf16.mxu0 0
      %1995 = vmatpush1.bf16.xpose.msra.mxu0 0
      %1996 = vmatprep.subr.bf16.mxu0 0
      %1997 = vmatpush1.bf16.xpose.msra.mxu0 0
      %1998 = vmatprep.subr.bf16.mxu0 0
      %1999 = vmatpush1.bf16.xpose.msra.mxu0 0
      %2000 = vmatprep.subr.bf16.mxu0 0
      %2001 = vmatpush1.bf16.xpose.msra.mxu0 0
      %2002 = vmatprep.subr.bf16.mxu0 0
      %2003 = vmatpush1.bf16.xpose.msra.mxu0 0
      %2004 = vmatprep.subr.bf16.mxu0 0
      %2005 = vmatpush1.bf16.xpose.msra.mxu0 0
      %2006 = vmatprep.subr.bf16.mxu0 0
      %2007 = vmatpush1.bf16.xpose.msra.mxu0 0
      %2008 = vmatprep.mubr.bf16.mxu0 0
      %2009 = vmatmul.mubr.bf16.gmra.mrb[0].mxu0 %v1929
      %v2010 = vpop.f32.mrb[0].mxu0
      %v2011 = vadd.f32 0.0, %v2010
      %v2012 = vpop.f32.mrb[0].mxu0
      %v2013 = vpop.f32.mrb[0].mxu0
      %v2014 = vadd.f32 0.0, %v2013
      %v2015 = vpop.f32.mrb[0].mxu0
      %2016 = vmatprep.mubr.bf16.mxu0 0
      %2017 = vmatmul.mubr.bf16.gmra.mrb[0].mxu0 %v1932
      %v2018 = vpop.f32.mrb[0].mxu0
      %v2019 = vadd.f32 0.0, %v2018
      %v2020 = vpop.f32.mrb[0].mxu0
      %v2021 = vpop.f32.mrb[0].mxu0
      %v2022 = vadd.f32 0.0, %v2021
      %v2023 = vpop.f32.mrb[0].mxu0
      %2024 = vmatprep.mubr.bf16.mxu0 0
      %2025 = vmatmul.mubr.bf16.gmra.mrb[0].mxu0 %v1935
      %v2026 = vpop.f32.mrb[0].mxu0
      %v2027 = vadd.f32 0.0, %v2026
      %v2028 = vpop.f32.mrb[0].mxu0
      %v2029 = vpop.f32.mrb[0].mxu0
      %v2030 = vadd.f32 0.0, %v2029
      %v2031 = vpop.f32.mrb[0].mxu0
      %2032 = vmatprep.mubr.bf16.mxu0 0
      %2033 = vmatmul.mubr.bf16.gmra.mrb[0].mxu0 %v1938
      %v2034 = vpop.f32.mrb[0].mxu0
      %v2035 = vadd.f32 0.0, %v2034
      %v2036 = vpop.f32.mrb[0].mxu0
      %v2037 = vpop.f32.mrb[0].mxu0
      %v2038 = vadd.f32 0.0, %v2037
      %v2039 = vpop.f32.mrb[0].mxu0
      %2040 = vmatprep.mubr.bf16.mxu0 0
      %2041 = vmatmul.mubr.bf16.gmra.mrb[0].mxu0 %v1941
      %v2042 = vpop.f32.mrb[0].mxu0
      %v2043 = vadd.f32 0.0, %v2042
      %v2044 = vpop.f32.mrb[0].mxu0
      %v2045 = vpop.f32.mrb[0].mxu0
      %v2046 = vadd.f32 0.0, %v2045
      %v2047 = vpop.f32.mrb[0].mxu0
      %2048 = vmatprep.mubr.bf16.mxu0 0
      %2049 = vmatmul.mubr.bf16.gmra.mrb[0].mxu0 %v1944
      %v2050 = vpop.f32.mrb[0].mxu0
      %v2051 = vadd.f32 0.0, %v2050
      %v2052 = vpop.f32.mrb[0].mxu0
      %v2053 = vpop.f32.mrb[0].mxu0
      %v2054 = vadd.f32 0.0, %v2053
      %v2055 = vpop.f32.mrb[0].mxu0
      %2056 = vmatprep.mubr.bf16.mxu0 0
      %2057 = vmatmul.mubr.bf16.gmra.mrb[0].mxu0 %v1947
      %v2058 = vpop.f32.mrb[0].mxu0
      %v2059 = vadd.f32 0.0, %v2058
      %v2060 = vpop.f32.mrb[0].mxu0
      %v2061 = vpop.f32.mrb[0].mxu0
      %v2062 = vadd.f32 0.0, %v2061
      %v2063 = vpop.f32.mrb[0].mxu0
      %2064 = vmatprep.mubr.bf16.mxu0 0
      %2065 = vmatmul.mubr.bf16.gmra.mrb[0].mxu0 %v1950
      %v2066 = vpop.f32.mrb[0].mxu0
      %v2067 = vadd.f32 0.0, %v2066
      %v2068 = vpop.f32.mrb[0].mxu0
      %v2069 = vpop.f32.mrb[0].mxu0
      %v2070 = vadd.f32 0.0, %v2069
      %v2071 = vpop.f32.mrb[0].mxu0
      %2072 = vdwg.mxu0
      %v2073 = vsel %vm1918, -1e+30, %v2011
      %v2074 = vsel %vm1918, -1e+30, %v2014
      %v2075 = vsel %vm1918, -1e+30, %v2019
      %v2076 = vsel %vm1918, -1e+30, %v2022
      %v2077 = vsel %vm1918, -1e+30, %v2027
      %v2078 = vsel %vm1918, -1e+30, %v2030
      %v2079 = vsel %vm1918, -1e+30, %v2035
      %v2080 = vsel %vm1918, -1e+30, %v2038
      %v2081 = vsel %vm1918, -1e+30, %v2043
      %v2082 = vsel %vm1918, -1e+30, %v2046
      %v2083 = vsel %vm1918, -1e+30, %v2051
      %v2084 = vsel %vm1918, -1e+30, %v2054
      %v2085 = vsel %vm1918, -1e+30, %v2059
      %v2086 = vsel %vm1918, -1e+30, %v2062
      %v2087 = vsel %vm1918, -1e+30, %v2067
      %v2088 = vsel %vm1918, -1e+30, %v2070
      %2089 = vmax.xlane.f32.xlu0 %v2073
      %v2090 = vpop.xlane.xlu0 %2089
      %2091 = vmax.xlane.f32.xlu0 %v2074
      %v2092 = vpop.xlane.xlu0 %2091
      %2093 = vmax.xlane.f32.xlu0 %v2075
      %v2094 = vpop.xlane.xlu0 %2093
      %2095 = vmax.xlane.f32.xlu0 %v2076
      %v2096 = vpop.xlane.xlu0 %2095
      %2097 = vmax.xlane.f32.xlu0 %v2077
      %v2098 = vpop.xlane.xlu0 %2097
      %2099 = vmax.xlane.f32.xlu0 %v2078
      %v2100 = vpop.xlane.xlu0 %2099
      %2101 = vmax.xlane.f32.xlu0 %v2079
      %v2102 = vpop.xlane.xlu0 %2101
      %2103 = vmax.xlane.f32.xlu0 %v2080
      %v2104 = vpop.xlane.xlu0 %2103
      %2105 = vmax.xlane.f32.xlu0 %v2081
      %v2106 = vpop.xlane.xlu0 %2105
      %2107 = vmax.xlane.f32.xlu0 %v2082
      %v2108 = vpop.xlane.xlu0 %2107
      %2109 = vmax.xlane.f32.xlu0 %v2083
      %v2110 = vpop.xlane.xlu0 %2109
      %2111 = vmax.xlane.f32.xlu0 %v2084
      %v2112 = vpop.xlane.xlu0 %2111
      %2113 = vmax.xlane.f32.xlu0 %v2085
      %v2114 = vpop.xlane.xlu0 %2113
      %2115 = vmax.xlane.f32.xlu0 %v2086
      %v2116 = vpop.xlane.xlu0 %2115
      %2117 = vmax.xlane.f32.xlu0 %v2087
      %v2118 = vpop.xlane.xlu0 %2117
      %2119 = vmax.xlane.f32.xlu0 %v2088
      %v2120 = vpop.xlane.xlu0 %2119
      %v2121 = vsub.f32 %v2073, %v2090
      %v2122 = vsub.f32 %v2074, %v2092
      %v2123 = vsub.f32 %v2075, %v2094
      %v2124 = vsub.f32 %v2076, %v2096
      %v2125 = vsub.f32 %v2077, %v2098
      %v2126 = vsub.f32 %v2078, %v2100
      %v2127 = vsub.f32 %v2079, %v2102
      %v2128 = vsub.f32 %v2080, %v2104
      %v2129 = vsub.f32 %v2081, %v2106
      %v2130 = vsub.f32 %v2082, %v2108
      %v2131 = vsub.f32 %v2083, %v2110
      %v2132 = vsub.f32 %v2084, %v2112
      %v2133 = vsub.f32 %v2085, %v2114
      %v2134 = vsub.f32 %v2086, %v2116
      %v2135 = vsub.f32 %v2087, %v2118
      %v2136 = vsub.f32 %v2088, %v2120
      %v2137 = vmul.f32 %v2121, 1.442695
      %v2138 = vpow.pop %v2137
      %v2139 = vmul.f32 %v2122, 1.442695
      %v2140 = vpow.pop %v2139
      %v2141 = vmul.f32 %v2123, 1.442695
      %v2142 = vpow.pop %v2141
      %v2143 = vmul.f32 %v2124, 1.442695
      %v2144 = vpow.pop %v2143
      %v2145 = vmul.f32 %v2125, 1.442695
      %v2146 = vpow.pop %v2145
      %v2147 = vmul.f32 %v2126, 1.442695
      %v2148 = vpow.pop %v2147
      %v2149 = vmul.f32 %v2127, 1.442695
      %v2150 = vpow.pop %v2149
      %v2151 = vmul.f32 %v2128, 1.442695
      %v2152 = vpow.pop %v2151
      %v2153 = vmul.f32 %v2129, 1.442695
      %v2154 = vpow.pop %v2153
      %v2155 = vmul.f32 %v2130, 1.442695
      %v2156 = vpow.pop %v2155
      %v2157 = vmul.f32 %v2131, 1.442695
      %v2158 = vpow.pop %v2157
      %v2159 = vmul.f32 %v2132, 1.442695
      %v2160 = vpow.pop %v2159
      %v2161 = vmul.f32 %v2133, 1.442695
      %v2162 = vpow.pop %v2161
      %v2163 = vmul.f32 %v2134, 1.442695
      %v2164 = vpow.pop %v2163
      %v2165 = vmul.f32 %v2135, 1.442695
      %v2166 = vpow.pop %v2165
      %v2167 = vmul.f32 %v2136, 1.442695
      %v2168 = vpow.pop %v2167
      %2169 = vadd.xlane.f32.xlu0 %v2138
      %v2170 = vpop.xlane.xlu0 %2169
      %2171 = vadd.xlane.f32.xlu0 %v2140
      %v2172 = vpop.xlane.xlu0 %2171
      %2173 = vadd.xlane.f32.xlu0 %v2142
      %v2174 = vpop.xlane.xlu0 %2173
      %2175 = vadd.xlane.f32.xlu0 %v2144
      %v2176 = vpop.xlane.xlu0 %2175
      %2177 = vadd.xlane.f32.xlu0 %v2146
      %v2178 = vpop.xlane.xlu0 %2177
      %2179 = vadd.xlane.f32.xlu0 %v2148
      %v2180 = vpop.xlane.xlu0 %2179
      %2181 = vadd.xlane.f32.xlu0 %v2150
      %v2182 = vpop.xlane.xlu0 %2181
      %2183 = vadd.xlane.f32.xlu0 %v2152
      %v2184 = vpop.xlane.xlu0 %2183
      %2185 = vadd.xlane.f32.xlu0 %v2154
      %v2186 = vpop.xlane.xlu0 %2185
      %2187 = vadd.xlane.f32.xlu0 %v2156
      %v2188 = vpop.xlane.xlu0 %2187
      %2189 = vadd.xlane.f32.xlu0 %v2158
      %v2190 = vpop.xlane.xlu0 %2189
      %2191 = vadd.xlane.f32.xlu0 %v2160
      %v2192 = vpop.xlane.xlu0 %2191
      %2193 = vadd.xlane.f32.xlu0 %v2162
      %v2194 = vpop.xlane.xlu0 %2193
      %2195 = vadd.xlane.f32.xlu0 %v2164
      %v2196 = vpop.xlane.xlu0 %2195
      %2197 = vadd.xlane.f32.xlu0 %v2166
      %v2198 = vpop.xlane.xlu0 %2197
      %2199 = vadd.xlane.f32.xlu0 %v2168
      %v2200 = vpop.xlane.xlu0 %2199
      %v2201 = vrcp.pop %v2170
      %v2202 = vrcp.pop %v2172
      %v2203 = vrcp.pop %v2174
      %v2204 = vrcp.pop %v2176
      %v2205 = vrcp.pop %v2178
      %v2206 = vrcp.pop %v2180
      %v2207 = vrcp.pop %v2182
      %v2208 = vrcp.pop %v2184
      %v2209 = vrcp.pop %v2186
      %v2210 = vrcp.pop %v2188
      %v2211 = vrcp.pop %v2190
      %v2212 = vrcp.pop %v2192
      %v2213 = vrcp.pop %v2194
      %v2214 = vrcp.pop %v2196
      %v2215 = vrcp.pop %v2198
      %v2216 = vrcp.pop %v2200
      %v2217 = vmul.f32 %v2138, %v2201
      %v2218 = vmul.f32 %v2140, %v2202
      %v2219 = vmul.f32 %v2142, %v2203
      %v2220 = vmul.f32 %v2144, %v2204
      %v2221 = vmul.f32 %v2146, %v2205
      %v2222 = vmul.f32 %v2148, %v2206
      %v2223 = vmul.f32 %v2150, %v2207
      %v2224 = vmul.f32 %v2152, %v2208
      %v2225 = vmul.f32 %v2154, %v2209
      %v2226 = vmul.f32 %v2156, %v2210
      %v2227 = vmul.f32 %v2158, %v2211
      %v2228 = vmul.f32 %v2160, %v2212
      %v2229 = vmul.f32 %v2162, %v2213
      %v2230 = vmul.f32 %v2164, %v2214
      %v2231 = vmul.f32 %v2166, %v2215
      %v2232 = vmul.f32 %v2168, %v2216
      %v2233 = vpack.c.bf16 %v2218, %v2217
      %v2234 = vpack.c.bf16 %v2220, %v2219
      %v2235 = vpack.c.bf16 %v2222, %v2221
      %v2236 = vpack.c.bf16 %v2224, %v2223
      %v2237 = vpack.c.bf16 %v2226, %v2225
      %v2238 = vpack.c.bf16 %v2228, %v2227
      %v2239 = vpack.c.bf16 %v2230, %v2229
      %v2240 = vpack.c.bf16 %v2232, %v2231
      %v2241 = vld [vmem:[#allocation3] sm:$0xff]
      %v2242 = vld [vmem:[#allocation3 + $0x8] sm:$0xff]
      %v2243 = vld [vmem:[#allocation3 + $0x10] sm:$0xff]
      %v2244 = vld [vmem:[#allocation3 + $0x18] sm:$0xff]
      %v2245 = vld [vmem:[#allocation3 + $0x20] sm:$0xff]
      %v2246 = vld [vmem:[#allocation3 + $0x28] sm:$0xff]
      %v2247 = vld [vmem:[#allocation3 + $0x30] sm:$0xff]
      %v2248 = vld [vmem:[#allocation3 + $0x38] sm:$0xff]
      %2257 = vrot.lane.b32.xlu0 %v1908, 120
      %v2258 = vpop.permute.xlu0 %2257
      %2259 = vrot.lane.b32.xlu0 %v1909, 120
      %v2260 = vpop.permute.xlu0 %2259
      %2261 = vrot.lane.b32.xlu0 %v1910, 120
      %v2262 = vpop.permute.xlu0 %2261
      %2263 = vrot.lane.b32.xlu0 %v1911, 120
      %v2264 = vpop.permute.xlu0 %2263
      %2265 = vrot.lane.b32.xlu0 %v1912, 120
      %v2266 = vpop.permute.xlu0 %2265
      %2267 = vrot.lane.b32.xlu0 %v1913, 120
      %v2268 = vpop.permute.xlu0 %2267
      %2269 = vrot.lane.b32.xlu0 %v1914, 120
      %v2270 = vpop.permute.xlu0 %2269
      %2271 = vrot.lane.b32.xlu0 %v1915, 120
      %v2272 = vpop.permute.xlu0 %2271
      %2281 = vrot.lane.b32.xlu0 %v1919, 120
      %v2282 = vpop.permute.xlu0 %2281
      %2283 = vrot.lane.b32.xlu0 %v1920, 120
      %v2284 = vpop.permute.xlu0 %2283
      %2285 = vrot.lane.b32.xlu0 %v1921, 120
      %v2286 = vpop.permute.xlu0 %2285
      %2287 = vrot.lane.b32.xlu0 %v1922, 120
      %v2288 = vpop.permute.xlu0 %2287
      %2289 = vrot.lane.b32.xlu0 %v1923, 120
      %v2290 = vpop.permute.xlu0 %2289
      %2291 = vrot.lane.b32.xlu0 %v1924, 120
      %v2292 = vpop.permute.xlu0 %2291
      %2293 = vrot.lane.b32.xlu0 %v1925, 120
      %v2294 = vpop.permute.xlu0 %2293
      %2295 = vrot.lane.b32.xlu0 %v1926, 120
      %v2296 = vpop.permute.xlu0 %2295
      %v2298 = vsel %vm1927, %v2258, 0
      %v2301 = vsel %vm1927, %v2260, 0
      %v2304 = vsel %vm1927, %v2262, 0
      %v2307 = vsel %vm1927, %v2264, 0
      %v2310 = vsel %vm1927, %v2266, 0
      %v2313 = vsel %vm1927, %v2268, 0
      %v2316 = vsel %vm1927, %v2270, 0
      %v2319 = vsel %vm1927, %v2272, 0
      %v2322 = vsel %vm1927, %v2282, 0
      %v2325 = vsel %vm1927, %v2284, 0
      %v2328 = vsel %vm1927, %v2286, 0
      %v2331 = vsel %vm1927, %v2288, 0
      %v2334 = vsel %vm1927, %v2290, 0
      %v2337 = vsel %vm1927, %v2292, 0
      %v2340 = vsel %vm1927, %v2294, 0
      %v2343 = vsel %vm1927, %v2296, 0
      %2345 = vmatprep.subr.bf16.mxu0 0
      %2346 = vmatpush1.bf16.xpose.msra.mxu0 %v2322
      %2347 = vmatprep.subr.bf16.mxu0 0
      %2348 = vmatpush1.bf16.xpose.msra.mxu0 %v2325
      %2349 = vmatprep.subr.bf16.mxu0 0
      %2350 = vmatpush1.bf16.xpose.msra.mxu0 %v2328
      %2351 = vmatprep.subr.bf16.mxu0 0
      %2352 = vmatpush1.bf16.xpose.msra.mxu0 %v2331
      %2353 = vmatprep.subr.bf16.mxu0 0
      %2354 = vmatpush1.bf16.xpose.msra.mxu0 %v2334
      %2355 = vmatprep.subr.bf16.mxu0 0
      %2356 = vmatpush1.bf16.xpose.msra.mxu0 %v2337
      %2357 = vmatprep.subr.bf16.mxu0 0
      %2358 = vmatpush1.bf16.xpose.msra.mxu0 %v2340
      %2359 = vmatprep.subr.bf16.mxu0 0
      %2360 = vmatpush1.bf16.xpose.msra.mxu0 %v2343
      %2361 = vmatprep.subr.bf16.mxu0 0
      %2362 = vmatpush1.bf16.xpose.msra.mxu0 0
      %2363 = vmatprep.subr.bf16.mxu0 0
      %2364 = vmatpush1.bf16.xpose.msra.mxu0 0
      %2365 = vmatprep.subr.bf16.mxu0 0
      %2366 = vmatpush1.bf16.xpose.msra.mxu0 0
      %2367 = vmatprep.subr.bf16.mxu0 0
      %2368 = vmatpush1.bf16.xpose.msra.mxu0 0
      %2369 = vmatprep.subr.bf16.mxu0 0
      %2370 = vmatpush1.bf16.xpose.msra.mxu0 0
      %2371 = vmatprep.subr.bf16.mxu0 0
      %2372 = vmatpush1.bf16.xpose.msra.mxu0 0
      %2373 = vmatprep.subr.bf16.mxu0 0
      %2374 = vmatpush1.bf16.xpose.msra.mxu0 0
      %2375 = vmatprep.subr.bf16.mxu0 0
      %2376 = vmatpush1.bf16.xpose.msra.mxu0 0
      %2377 = vmatprep.mubr.bf16.mxu0 0
      %2378 = vmatmul.mubr.bf16.gmra.mrb[0].mxu0 %v2298
      %v2379 = vpop.f32.mrb[0].mxu0
      %v2380 = vadd.f32 0.0, %v2379
      %v2381 = vpop.f32.mrb[0].mxu0
      %v2382 = vpop.f32.mrb[0].mxu0
      %v2383 = vadd.f32 0.0, %v2382
      %v2384 = vpop.f32.mrb[0].mxu0
      %2385 = vmatprep.mubr.bf16.mxu0 0
      %2386 = vmatmul.mubr.bf16.gmra.mrb[0].mxu0 %v2301
      %v2387 = vpop.f32.mrb[0].mxu0
      %v2388 = vadd.f32 0.0, %v2387
      %v2389 = vpop.f32.mrb[0].mxu0
      %v2390 = vpop.f32.mrb[0].mxu0
      %v2391 = vadd.f32 0.0, %v2390
      %v2392 = vpop.f32.mrb[0].mxu0
      %2393 = vmatprep.mubr.bf16.mxu0 0
      %2394 = vmatmul.mubr.bf16.gmra.mrb[0].mxu0 %v2304
      %v2395 = vpop.f32.mrb[0].mxu0
      %v2396 = vadd.f32 0.0, %v2395
      %v2397 = vpop.f32.mrb[0].mxu0
      %v2398 = vpop.f32.mrb[0].mxu0
      %v2399 = vadd.f32 0.0, %v2398
      %v2400 = vpop.f32.mrb[0].mxu0
      %2401 = vmatprep.mubr.bf16.mxu0 0
      %2402 = vmatmul.mubr.bf16.gmra.mrb[0].mxu0 %v2307
      %v2403 = vpop.f32.mrb[0].mxu0
      %v2404 = vadd.f32 0.0, %v2403
      %v2405 = vpop.f32.mrb[0].mxu0
      %v2406 = vpop.f32.mrb[0].mxu0
      %v2407 = vadd.f32 0.0, %v2406
      %v2408 = vpop.f32.mrb[0].mxu0
      %2409 = vmatprep.mubr.bf16.mxu0 0
      %2410 = vmatmul.mubr.bf16.gmra.mrb[0].mxu0 %v2310
      %v2411 = vpop.f32.mrb[0].mxu0
      %v2412 = vadd.f32 0.0, %v2411
      %v2413 = vpop.f32.mrb[0].mxu0
      %v2414 = vpop.f32.mrb[0].mxu0
      %v2415 = vadd.f32 0.0, %v2414
      %v2416 = vpop.f32.mrb[0].mxu0
      %2417 = vmatprep.mubr.bf16.mxu0 0
      %2418 = vmatmul.mubr.bf16.gmra.mrb[0].mxu0 %v2313
      %v2419 = vpop.f32.mrb[0].mxu0
      %v2420 = vadd.f32 0.0, %v2419
      %v2421 = vpop.f32.mrb[0].mxu0
      %v2422 = vpop.f32.mrb[0].mxu0
      %v2423 = vadd.f32 0.0, %v2422
      %v2424 = vpop.f32.mrb[0].mxu0
      %2425 = vmatprep.mubr.bf16.mxu0 0
      %2426 = vmatmul.mubr.bf16.gmra.mrb[0].mxu0 %v2316
      %v2427 = vpop.f32.mrb[0].mxu0
      %v2428 = vadd.f32 0.0, %v2427
      %v2429 = vpop.f32.mrb[0].mxu0
      %v2430 = vpop.f32.mrb[0].mxu0
      %v2431 = vadd.f32 0.0, %v2430
      %v2432 = vpop.f32.mrb[0].mxu0
      %2433 = vmatprep.mubr.bf16.mxu0 0
      %2434 = vmatmul.mubr.bf16.gmra.mrb[0].mxu0 %v2319
      %v2435 = vpop.f32.mrb[0].mxu0
      %v2436 = vadd.f32 0.0, %v2435
      %v2437 = vpop.f32.mrb[0].mxu0
      %v2438 = vpop.f32.mrb[0].mxu0
      %v2439 = vadd.f32 0.0, %v2438
      %v2440 = vpop.f32.mrb[0].mxu0
      %2441 = vdwg.mxu0
      %v2442 = vsel %vm1918, -1e+30, %v2380
      %v2443 = vsel %vm1918, -1e+30, %v2383
      %v2444 = vsel %vm1918, -1e+30, %v2388
      %v2445 = vsel %vm1918, -1e+30, %v2391
      %v2446 = vsel %vm1918, -1e+30, %v2396
      %v2447 = vsel %vm1918, -1e+30, %v2399
      %v2448 = vsel %vm1918, -1e+30, %v2404
      %v2449 = vsel %vm1918, -1e+30, %v2407
      %v2450 = vsel %vm1918, -1e+30, %v2412
      %v2451 = vsel %vm1918, -1e+30, %v2415
      %v2452 = vsel %vm1918, -1e+30, %v2420
      %v2453 = vsel %vm1918, -1e+30, %v2423
      %v2454 = vsel %vm1918, -1e+30, %v2428
      %v2455 = vsel %vm1918, -1e+30, %v2431
      %v2456 = vsel %vm1918, -1e+30, %v2436
      %v2457 = vsel %vm1918, -1e+30, %v2439
      %2458 = vmax.xlane.f32.xlu0 %v2442
      %v2459 = vpop.xlane.xlu0 %2458
      %2460 = vmax.xlane.f32.xlu0 %v2443
      %v2461 = vpop.xlane.xlu0 %2460
      %2462 = vmax.xlane.f32.xlu0 %v2444
      %v2463 = vpop.xlane.xlu0 %2462
      %2464 = vmax.xlane.f32.xlu0 %v2445
      %v2465 = vpop.xlane.xlu0 %2464
      %2466 = vmax.xlane.f32.xlu0 %v2446
      %v2467 = vpop.xlane.xlu0 %2466
      %2468 = vmax.xlane.f32.xlu0 %v2447
      %v2469 = vpop.xlane.xlu0 %2468
      %2470 = vmax.xlane.f32.xlu0 %v2448
      %v2471 = vpop.xlane.xlu0 %2470
      %2472 = vmax.xlane.f32.xlu0 %v2449
      %v2473 = vpop.xlane.xlu0 %2472
      %2474 = vmax.xlane.f32.xlu0 %v2450
      %v2475 = vpop.xlane.xlu0 %2474
      %2476 = vmax.xlane.f32.xlu0 %v2451
      %v2477 = vpop.xlane.xlu0 %2476
      %2478 = vmax.xlane.f32.xlu0 %v2452
      %v2479 = vpop.xlane.xlu0 %2478
      %2480 = vmax.xlane.f32.xlu0 %v2453
      %v2481 = vpop.xlane.xlu0 %2480
      %2482 = vmax.xlane.f32.xlu0 %v2454
      %v2483 = vpop.xlane.xlu0 %2482
      %2484 = vmax.xlane.f32.xlu0 %v2455
      %v2485 = vpop.xlane.xlu0 %2484
      %2486 = vmax.xlane.f32.xlu0 %v2456
      %v2487 = vpop.xlane.xlu0 %2486
      %2488 = vmax.xlane.f32.xlu0 %v2457
      %v2489 = vpop.xlane.xlu0 %2488
      %v2490 = vsub.f32 %v2442, %v2459
      %v2491 = vsub.f32 %v2443, %v2461
      %v2492 = vsub.f32 %v2444, %v2463
      %v2493 = vsub.f32 %v2445, %v2465
      %v2494 = vsub.f32 %v2446, %v2467
      %v2495 = vsub.f32 %v2447, %v2469
      %v2496 = vsub.f32 %v2448, %v2471
      %v2497 = vsub.f32 %v2449, %v2473
      %v2498 = vsub.f32 %v2450, %v2475
      %v2499 = vsub.f32 %v2451, %v2477
      %v2500 = vsub.f32 %v2452, %v2479
      %v2501 = vsub.f32 %v2453, %v2481
      %v2502 = vsub.f32 %v2454, %v2483
      %v2503 = vsub.f32 %v2455, %v2485
      %v2504 = vsub.f32 %v2456, %v2487
      %v2505 = vsub.f32 %v2457, %v2489
      %v2506 = vmul.f32 %v2490, 1.442695
      %v2507 = vpow.pop %v2506
      %v2508 = vmul.f32 %v2491, 1.442695
      %v2509 = vpow.pop %v2508
      %v2510 = vmul.f32 %v2492, 1.442695
      %v2511 = vpow.pop %v2510
      %v2512 = vmul.f32 %v2493, 1.442695
      %v2513 = vpow.pop %v2512
      %v2514 = vmul.f32 %v2494, 1.442695
      %v2515 = vpow.pop %v2514
      %v2516 = vmul.f32 %v2495, 1.442695
      %v2517 = vpow.pop %v2516
      %v2518 = vmul.f32 %v2496, 1.442695
      %v2519 = vpow.pop %v2518
      %v2520 = vmul.f32 %v2497, 1.442695
      %v2521 = vpow.pop %v2520
      %v2522 = vmul.f32 %v2498, 1.442695
      %v2523 = vpow.pop %v2522
      %v2524 = vmul.f32 %v2499, 1.442695
      %v2525 = vpow.pop %v2524
      %v2526 = vmul.f32 %v2500, 1.442695
      %v2527 = vpow.pop %v2526
      %v2528 = vmul.f32 %v2501, 1.442695
      %v2529 = vpow.pop %v2528
      %v2530 = vmul.f32 %v2502, 1.442695
      %v2531 = vpow.pop %v2530
      %v2532 = vmul.f32 %v2503, 1.442695
      %v2533 = vpow.pop %v2532
      %v2534 = vmul.f32 %v2504, 1.442695
      %v2535 = vpow.pop %v2534
      %v2536 = vmul.f32 %v2505, 1.442695
      %v2537 = vpow.pop %v2536
      %2538 = vadd.xlane.f32.xlu0 %v2507
      %v2539 = vpop.xlane.xlu0 %2538
      %2540 = vadd.xlane.f32.xlu0 %v2509
      %v2541 = vpop.xlane.xlu0 %2540
      %2542 = vadd.xlane.f32.xlu0 %v2511
      %v2543 = vpop.xlane.xlu0 %2542
      %2544 = vadd.xlane.f32.xlu0 %v2513
      %v2545 = vpop.xlane.xlu0 %2544
      %2546 = vadd.xlane.f32.xlu0 %v2515
      %v2547 = vpop.xlane.xlu0 %2546
      %2548 = vadd.xlane.f32.xlu0 %v2517
      %v2549 = vpop.xlane.xlu0 %2548
      %2550 = vadd.xlane.f32.xlu0 %v2519
      %v2551 = vpop.xlane.xlu0 %2550
      %2552 = vadd.xlane.f32.xlu0 %v2521
      %v2553 = vpop.xlane.xlu0 %2552
      %2554 = vadd.xlane.f32.xlu0 %v2523
      %v2555 = vpop.xlane.xlu0 %2554
      %2556 = vadd.xlane.f32.xlu0 %v2525
      %v2557 = vpop.xlane.xlu0 %2556
      %2558 = vadd.xlane.f32.xlu0 %v2527
      %v2559 = vpop.xlane.xlu0 %2558
      %2560 = vadd.xlane.f32.xlu0 %v2529
      %v2561 = vpop.xlane.xlu0 %2560
      %2562 = vadd.xlane.f32.xlu0 %v2531
      %v2563 = vpop.xlane.xlu0 %2562
      %2564 = vadd.xlane.f32.xlu0 %v2533
      %v2565 = vpop.xlane.xlu0 %2564
      %2566 = vadd.xlane.f32.xlu0 %v2535
      %v2567 = vpop.xlane.xlu0 %2566
      %2568 = vadd.xlane.f32.xlu0 %v2537
      %v2569 = vpop.xlane.xlu0 %2568
      %v2570 = vrcp.pop %v2539
      %v2571 = vrcp.pop %v2541
      %v2572 = vrcp.pop %v2543
      %v2573 = vrcp.pop %v2545
      %v2574 = vrcp.pop %v2547
      %v2575 = vrcp.pop %v2549
      %v2576 = vrcp.pop %v2551
      %v2577 = vrcp.pop %v2553
      %v2578 = vrcp.pop %v2555
      %v2579 = vrcp.pop %v2557
      %v2580 = vrcp.pop %v2559
      %v2581 = vrcp.pop %v2561
      %v2582 = vrcp.pop %v2563
      %v2583 = vrcp.pop %v2565
      %v2584 = vrcp.pop %v2567
      %v2585 = vrcp.pop %v2569
      %v2586 = vmul.f32 %v2507, %v2570
      %v2587 = vmul.f32 %v2509, %v2571
      %v2588 = vmul.f32 %v2511, %v2572
      %v2589 = vmul.f32 %v2513, %v2573
      %v2590 = vmul.f32 %v2515, %v2574
      %v2591 = vmul.f32 %v2517, %v2575
      %v2592 = vmul.f32 %v2519, %v2576
      %v2593 = vmul.f32 %v2521, %v2577
      %v2594 = vmul.f32 %v2523, %v2578
      %v2595 = vmul.f32 %v2525, %v2579
      %v2596 = vmul.f32 %v2527, %v2580
      %v2597 = vmul.f32 %v2529, %v2581
      %v2598 = vmul.f32 %v2531, %v2582
      %v2599 = vmul.f32 %v2533, %v2583
      %v2600 = vmul.f32 %v2535, %v2584
      %v2601 = vmul.f32 %v2537, %v2585
      %v2602 = vpack.c.bf16 %v2587, %v2586
      %v2603 = vpack.c.bf16 %v2589, %v2588
      %v2604 = vpack.c.bf16 %v2591, %v2590
      %v2605 = vpack.c.bf16 %v2593, %v2592
      %v2606 = vpack.c.bf16 %v2595, %v2594
      %v2607 = vpack.c.bf16 %v2597, %v2596
      %v2608 = vpack.c.bf16 %v2599, %v2598
      %v2609 = vpack.c.bf16 %v2601, %v2600
      %s2610 = scalar_lea.vmem [#allocation3], 64
      %v2611 = vld [vmem:[%s2610] sm:$0xff]
      %v2612 = vld [vmem:[%s2610 + $0x8] sm:$0xff]
      %v2613 = vld [vmem:[%s2610 + $0x10] sm:$0xff]
      %v2614 = vld [vmem:[%s2610 + $0x18] sm:$0xff]
      %v2615 = vld [vmem:[%s2610 + $0x20] sm:$0xff]
      %v2616 = vld [vmem:[%s2610 + $0x28] sm:$0xff]
      %v2617 = vld [vmem:[%s2610 + $0x30] sm:$0xff]
      %v2618 = vld [vmem:[%s2610 + $0x38] sm:$0xff]
      %2619 = vmatprep.subr.bf16.mxu0 0
      %2620 = vmatpush1.bf16.msra.mxu0 %v2611
      %2621 = vmatprep.subr.bf16.mxu0 0
      %2622 = vmatpush1.bf16.msra.mxu0 %v2612
      %2623 = vmatprep.subr.bf16.mxu0 0
      %2624 = vmatpush1.bf16.msra.mxu0 %v2613
      %2625 = vmatprep.subr.bf16.mxu0 0
      %2626 = vmatpush1.bf16.msra.mxu0 %v2614
      %2627 = vmatprep.subr.bf16.mxu0 0
      %2628 = vmatpush1.bf16.msra.mxu0 %v2615
      %2629 = vmatprep.subr.bf16.mxu0 0
      %2630 = vmatpush1.bf16.msra.mxu0 %v2616
      %2631 = vmatprep.subr.bf16.mxu0 0
      %2632 = vmatpush1.bf16.msra.mxu0 %v2617
      %2633 = vmatprep.subr.bf16.mxu0 0
      %2634 = vmatpush1.bf16.msra.mxu0 %v2618
      %2635 = vmatprep.subr.bf16.mxu0 0
      %2636 = vmatpush1.bf16.msra.mxu0 0
      %2637 = vmatprep.subr.bf16.mxu0 0
      %2638 = vmatpush1.bf16.msra.mxu0 0
      %2639 = vmatprep.subr.bf16.mxu0 0
      %2640 = vmatpush1.bf16.msra.mxu0 0
      %2641 = vmatprep.subr.bf16.mxu0 0
      %2642 = vmatpush1.bf16.msra.mxu0 0
      %2643 = vmatprep.subr.bf16.mxu0 0
      %2644 = vmatpush1.bf16.msra.mxu0 0
      %2645 = vmatprep.subr.bf16.mxu0 0
      %2646 = vmatpush1.bf16.msra.mxu0 0
      %2647 = vmatprep.subr.bf16.mxu0 0
      %2648 = vmatpush1.bf16.msra.mxu0 0
      %2649 = vmatprep.subr.bf16.mxu0 0
      %2650 = vmatpush1.bf16.msra.mxu0 0
      %2651 = vmatprep.mubr.bf16.mxu0 0
      %2652 = vmatmul.mubr.bf16.gmra.mrb[0].mxu0 %v2602
      %v2653 = vpop.f32.mrb[0].mxu0
      %v2654 = vadd.f32 0.0, %v2653
      %v2655 = vpop.f32.mrb[0].mxu0
      %v2656 = vpop.f32.mrb[0].mxu0
      %v2657 = vadd.f32 0.0, %v2656
      %v2658 = vpop.f32.mrb[0].mxu0
      %2659 = vmatprep.mubr.bf16.mxu0 0
      %2660 = vmatmul.mubr.bf16.gmra.mrb[0].mxu0 %v2603
      %v2661 = vpop.f32.mrb[0].mxu0
      %v2662 = vadd.f32 0.0, %v2661
      %v2663 = vpop.f32.mrb[0].mxu0
      %v2664 = vpop.f32.mrb[0].mxu0
      %v2665 = vadd.f32 0.0, %v2664
      %v2666 = vpop.f32.mrb[0].mxu0
      %2667 = vmatprep.mubr.bf16.mxu0 0
      %2668 = vmatmul.mubr.bf16.gmra.mrb[0].mxu0 %v2604
      %v2669 = vpop.f32.mrb[0].mxu0
      %v2670 = vadd.f32 0.0, %v2669
      %v2671 = vpop.f32.mrb[0].mxu0
      %v2672 = vpop.f32.mrb[0].mxu0
      %v2673 = vadd.f32 0.0, %v2672
      %v2674 = vpop.f32.mrb[0].mxu0
      %2675 = vmatprep.mubr.bf16.mxu0 0
      %2676 = vmatmul.mubr.bf16.gmra.mrb[0].mxu0 %v2605
      %v2677 = vpop.f32.mrb[0].mxu0
      %v2678 = vadd.f32 0.0, %v2677
      %v2679 = vpop.f32.mrb[0].mxu0
      %v2680 = vpop.f32.mrb[0].mxu0
      %v2681 = vadd.f32 0.0, %v2680
      %v2682 = vpop.f32.mrb[0].mxu0
      %2683 = vmatprep.mubr.bf16.mxu0 0
      %2684 = vmatmul.mubr.bf16.gmra.mrb[0].mxu0 %v2606
      %v2685 = vpop.f32.mrb[0].mxu0
      %v2686 = vadd.f32 0.0, %v2685
      %v2687 = vpop.f32.mrb[0].mxu0
      %v2688 = vpop.f32.mrb[0].mxu0
      %v2689 = vadd.f32 0.0, %v2688
      %v2690 = vpop.f32.mrb[0].mxu0
      %2691 = vmatprep.mubr.bf16.mxu0 0
      %2692 = vmatmul.mubr.bf16.gmra.mrb[0].mxu0 %v2607
      %v2693 = vpop.f32.mrb[0].mxu0
      %v2694 = vadd.f32 0.0, %v2693
      %v2695 = vpop.f32.mrb[0].mxu0
      %v2696 = vpop.f32.mrb[0].mxu0
      %v2697 = vadd.f32 0.0, %v2696
      %v2698 = vpop.f32.mrb[0].mxu0
      %2699 = vmatprep.mubr.bf16.mxu0 0
      %2700 = vmatmul.mubr.bf16.gmra.mrb[0].mxu0 %v2608
      %v2701 = vpop.f32.mrb[0].mxu0
      %v2702 = vadd.f32 0.0, %v2701
      %v2703 = vpop.f32.mrb[0].mxu0
      %v2704 = vpop.f32.mrb[0].mxu0
      %v2705 = vadd.f32 0.0, %v2704
      %v2706 = vpop.f32.mrb[0].mxu0
      %2707 = vmatprep.mubr.bf16.mxu0 0
      %2708 = vmatmul.mubr.bf16.gmra.mrb[0].mxu0 %v2609
      %v2709 = vpop.f32.mrb[0].mxu0
      %v2710 = vadd.f32 0.0, %v2709
      %v2711 = vpop.f32.mrb[0].mxu0
      %v2712 = vpop.f32.mrb[0].mxu0
      %v2713 = vadd.f32 0.0, %v2712
      %v2714 = vpop.f32.mrb[0].mxu0
      %2715 = vdwg.mxu0
      %2716 = vmatprep.subr.bf16.mxu0 0
      %2717 = vmatpush1.bf16.msra.mxu0 %v2241
      %2718 = vmatprep.subr.bf16.mxu0 0
      %2719 = vmatpush1.bf16.msra.mxu0 %v2242
      %2720 = vmatprep.subr.bf16.mxu0 0
      %2721 = vmatpush1.bf16.msra.mxu0 %v2243
      %2722 = vmatprep.subr.bf16.mxu0 0
      %2723 = vmatpush1.bf16.msra.mxu0 %v2244
      %2724 = vmatprep.subr.bf16.mxu0 0
      %2725 = vmatpush1.bf16.msra.mxu0 %v2245
      %2726 = vmatprep.subr.bf16.mxu0 0
      %2727 = vmatpush1.bf16.msra.mxu0 %v2246
      %2728 = vmatprep.subr.bf16.mxu0 0
      %2729 = vmatpush1.bf16.msra.mxu0 %v2247
      %2730 = vmatprep.subr.bf16.mxu0 0
      %2731 = vmatpush1.bf16.msra.mxu0 %v2248
      %2732 = vmatprep.subr.bf16.mxu0 0
      %2733 = vmatpush1.bf16.msra.mxu0 0
      %2734 = vmatprep.subr.bf16.mxu0 0
      %2735 = vmatpush1.bf16.msra.mxu0 0
      %2736 = vmatprep.subr.bf16.mxu0 0
      %2737 = vmatpush1.bf16.msra.mxu0 0
      %2738 = vmatprep.subr.bf16.mxu0 0
      %2739 = vmatpush1.bf16.msra.mxu0 0
      %2740 = vmatprep.subr.bf16.mxu0 0
      %2741 = vmatpush1.bf16.msra.mxu0 0
      %2742 = vmatprep.subr.bf16.mxu0 0
      %2743 = vmatpush1.bf16.msra.mxu0 0
      %2744 = vmatprep.subr.bf16.mxu0 0
      %2745 = vmatpush1.bf16.msra.mxu0 0
      %2746 = vmatprep.subr.bf16.mxu0 0
      %2747 = vmatpush1.bf16.msra.mxu0 0
      %2748 = vmatprep.mubr.bf16.mxu0 0
      %2749 = vmatmul.mubr.bf16.gmra.mrb[0].mxu0 %v2233
      %v2750 = vpop.f32.mrb[0].mxu0
      %v2751 = vadd.f32 %v2654, %v2750
      %v2752 = vpop.f32.mrb[0].mxu0
      %v2753 = vpop.f32.mrb[0].mxu0
      %v2754 = vadd.f32 %v2657, %v2753
      %v2755 = vpop.f32.mrb[0].mxu0
      %2756 = vmatprep.mubr.bf16.mxu0 0
      %2757 = vmatmul.mubr.bf16.gmra.mrb[0].mxu0 %v2234
      %v2758 = vpop.f32.mrb[0].mxu0
      %v2759 = vadd.f32 %v2662, %v2758
      %v2760 = vpop.f32.mrb[0].mxu0
      %v2761 = vpop.f32.mrb[0].mxu0
      %v2762 = vadd.f32 %v2665, %v2761
      %v2763 = vpop.f32.mrb[0].mxu0
      %2764 = vmatprep.mubr.bf16.mxu0 0
      %2765 = vmatmul.mubr.bf16.gmra.mrb[0].mxu0 %v2235
      %v2766 = vpop.f32.mrb[0].mxu0
      %v2767 = vadd.f32 %v2670, %v2766
      %v2768 = vpop.f32.mrb[0].mxu0
      %v2769 = vpop.f32.mrb[0].mxu0
      %v2770 = vadd.f32 %v2673, %v2769
      %v2771 = vpop.f32.mrb[0].mxu0
      %2772 = vmatprep.mubr.bf16.mxu0 0
      %2773 = vmatmul.mubr.bf16.gmra.mrb[0].mxu0 %v2236
      %v2774 = vpop.f32.mrb[0].mxu0
      %v2775 = vadd.f32 %v2678, %v2774
      %v2776 = vpop.f32.mrb[0].mxu0
      %v2777 = vpop.f32.mrb[0].mxu0
      %v2778 = vadd.f32 %v2681, %v2777
      %v2779 = vpop.f32.mrb[0].mxu0
      %2780 = vmatprep.mubr.bf16.mxu0 0
      %2781 = vmatmul.mubr.bf16.gmra.mrb[0].mxu0 %v2237
      %v2782 = vpop.f32.mrb[0].mxu0
      %v2783 = vadd.f32 %v2686, %v2782
      %v2784 = vpop.f32.mrb[0].mxu0
      %v2785 = vpop.f32.mrb[0].mxu0
      %v2786 = vadd.f32 %v2689, %v2785
      %v2787 = vpop.f32.mrb[0].mxu0
      %2788 = vmatprep.mubr.bf16.mxu0 0
      %2789 = vmatmul.mubr.bf16.gmra.mrb[0].mxu0 %v2238
      %v2790 = vpop.f32.mrb[0].mxu0
      %v2791 = vadd.f32 %v2694, %v2790
      %v2792 = vpop.f32.mrb[0].mxu0
      %v2793 = vpop.f32.mrb[0].mxu0
      %v2794 = vadd.f32 %v2697, %v2793
      %v2795 = vpop.f32.mrb[0].mxu0
      %2796 = vmatprep.mubr.bf16.mxu0 0
      %2797 = vmatmul.mubr.bf16.gmra.mrb[0].mxu0 %v2239
      %v2798 = vpop.f32.mrb[0].mxu0
      %v2799 = vadd.f32 %v2702, %v2798
      %v2800 = vpop.f32.mrb[0].mxu0
      %v2801 = vpop.f32.mrb[0].mxu0
      %v2802 = vadd.f32 %v2705, %v2801
      %v2803 = vpop.f32.mrb[0].mxu0
      %2804 = vmatprep.mubr.bf16.mxu0 0
      %2805 = vmatmul.mubr.bf16.gmra.mrb[0].mxu0 %v2240
      %v2806 = vpop.f32.mrb[0].mxu0
      %v2807 = vadd.f32 %v2710, %v2806
      %v2808 = vpop.f32.mrb[0].mxu0
      %v2809 = vpop.f32.mrb[0].mxu0
      %v2810 = vadd.f32 %v2713, %v2809
      %v2811 = vpop.f32.mrb[0].mxu0
      %2812 = vdwg.mxu0
      %2813 = vrot.lane.b32.xlu0 %v1908, 112
      %v2814 = vpop.permute.xlu0 %2813
      %2815 = vrot.lane.b32.xlu0 %v1909, 112
      %v2816 = vpop.permute.xlu0 %2815
      %2817 = vrot.lane.b32.xlu0 %v1910, 112
      %v2818 = vpop.permute.xlu0 %2817
      %2819 = vrot.lane.b32.xlu0 %v1911, 112
      %v2820 = vpop.permute.xlu0 %2819
      %2821 = vrot.lane.b32.xlu0 %v1912, 112
      %v2822 = vpop.permute.xlu0 %2821
      %2823 = vrot.lane.b32.xlu0 %v1913, 112
      %v2824 = vpop.permute.xlu0 %2823
      %2825 = vrot.lane.b32.xlu0 %v1914, 112
      %v2826 = vpop.permute.xlu0 %2825
      %2827 = vrot.lane.b32.xlu0 %v1915, 112
      %v2828 = vpop.permute.xlu0 %2827
      %2829 = vrot.lane.b32.xlu0 %v1919, 112
      %v2830 = vpop.permute.xlu0 %2829
      %2831 = vrot.lane.b32.xlu0 %v1920, 112
      %v2832 = vpop.permute.xlu0 %2831
      %2833 = vrot.lane.b32.xlu0 %v1921, 112
      %v2834 = vpop.permute.xlu0 %2833
      %2835 = vrot.lane.b32.xlu0 %v1922, 112
      %v2836 = vpop.permute.xlu0 %2835
      %2837 = vrot.lane.b32.xlu0 %v1923, 112
      %v2838 = vpop.permute.xlu0 %2837
      %2839 = vrot.lane.b32.xlu0 %v1924, 112
      %v2840 = vpop.permute.xlu0 %2839
      %2841 = vrot.lane.b32.xlu0 %v1925, 112
      %v2842 = vpop.permute.xlu0 %2841
      %2843 = vrot.lane.b32.xlu0 %v1926, 112
      %v2844 = vpop.permute.xlu0 %2843
      %v2846 = vsel %vm1927, %v2814, 0
      %v2849 = vsel %vm1927, %v2816, 0
      %v2852 = vsel %vm1927, %v2818, 0
      %v2855 = vsel %vm1927, %v2820, 0
      %v2858 = vsel %vm1927, %v2822, 0
      %v2861 = vsel %vm1927, %v2824, 0
      %v2864 = vsel %vm1927, %v2826, 0
      %v2867 = vsel %vm1927, %v2828, 0
      %v2870 = vsel %vm1927, %v2830, 0
      %v2873 = vsel %vm1927, %v2832, 0
      %v2876 = vsel %vm1927, %v2834, 0
      %v2879 = vsel %vm1927, %v2836, 0
      %v2882 = vsel %vm1927, %v2838, 0
      %v2885 = vsel %vm1927, %v2840, 0
      %v2888 = vsel %vm1927, %v2842, 0
      %v2891 = vsel %vm1927, %v2844, 0
      %2893 = vmatprep.subr.bf16.mxu0 0
      %2894 = vmatpush1.bf16.xpose.msra.mxu0 %v2870
      %2895 = vmatprep.subr.bf16.mxu0 0
      %2896 = vmatpush1.bf16.xpose.msra.mxu0 %v2873
      %2897 = vmatprep.subr.bf16.mxu0 0
      %2898 = vmatpush1.bf16.xpose.msra.mxu0 %v2876
      %2899 = vmatprep.subr.bf16.mxu0 0
      %2900 = vmatpush1.bf16.xpose.msra.mxu0 %v2879
      %2901 = vmatprep.subr.bf16.mxu0 0
      %2902 = vmatpush1.bf16.xpose.msra.mxu0 %v2882
      %2903 = vmatprep.subr.bf16.mxu0 0
      %2904 = vmatpush1.bf16.xpose.msra.mxu0 %v2885
      %2905 = vmatprep.subr.bf16.mxu0 0
      %2906 = vmatpush1.bf16.xpose.msra.mxu0 %v2888
      %2907 = vmatprep.subr.bf16.mxu0 0
      %2908 = vmatpush1.bf16.xpose.msra.mxu0 %v2891
      %2909 = vmatprep.subr.bf16.mxu0 0
      %2910 = vmatpush1.bf16.xpose.msra.mxu0 0
      %2911 = vmatprep.subr.bf16.mxu0 0
      %2912 = vmatpush1.bf16.xpose.msra.mxu0 0
      %2913 = vmatprep.subr.bf16.mxu0 0
      %2914 = vmatpush1.bf16.xpose.msra.mxu0 0
      %2915 = vmatprep.subr.bf16.mxu0 0
      %2916 = vmatpush1.bf16.xpose.msra.mxu0 0
      %2917 = vmatprep.subr.bf16.mxu0 0
      %2918 = vmatpush1.bf16.xpose.msra.mxu0 0
      %2919 = vmatprep.subr.bf16.mxu0 0
      %2920 = vmatpush1.bf16.xpose.msra.mxu0 0
      %2921 = vmatprep.subr.bf16.mxu0 0
      %2922 = vmatpush1.bf16.xpose.msra.mxu0 0
      %2923 = vmatprep.subr.bf16.mxu0 0
      %2924 = vmatpush1.bf16.xpose.msra.mxu0 0
      %2925 = vmatprep.mubr.bf16.mxu0 0
      %2926 = vmatmul.mubr.bf16.gmra.mrb[0].mxu0 %v2846
      %v2927 = vpop.f32.mrb[0].mxu0
      %v2928 = vadd.f32 0.0, %v2927
      %v2929 = vpop.f32.mrb[0].mxu0
      %v2930 = vpop.f32.mrb[0].mxu0
      %v2931 = vadd.f32 0.0, %v2930
      %v2932 = vpop.f32.mrb[0].mxu0
      %2933 = vmatprep.mubr.bf16.mxu0 0
      %2934 = vmatmul.mubr.bf16.gmra.mrb[0].mxu0 %v2849
      %v2935 = vpop.f32.mrb[0].mxu0
      %v2936 = vadd.f32 0.0, %v2935
      %v2937 = vpop.f32.mrb[0].mxu0
      %v2938 = vpop.f32.mrb[0].mxu0
      %v2939 = vadd.f32 0.0, %v2938
      %v2940 = vpop.f32.mrb[0].mxu0
      %2941 = vmatprep.mubr.bf16.mxu0 0
      %2942 = vmatmul.mubr.bf16.gmra.mrb[0].mxu0 %v2852
      %v2943 = vpop.f32.mrb[0].mxu0
      %v2944 = vadd.f32 0.0, %v2943
      %v2945 = vpop.f32.mrb[0].mxu0
      %v2946 = vpop.f32.mrb[0].mxu0
      %v2947 = vadd.f32 0.0, %v2946
      %v2948 = vpop.f32.mrb[0].mxu0
      %2949 = vmatprep.mubr.bf16.mxu0 0
      %2950 = vmatmul.mubr.bf16.gmra.mrb[0].mxu0 %v2855
      %v2951 = vpop.f32.mrb[0].mxu0
      %v2952 = vadd.f32 0.0, %v2951
      %v2953 = vpop.f32.mrb[0].mxu0
      %v2954 = vpop.f32.mrb[0].mxu0
      %v2955 = vadd.f32 0.0, %v2954
      %v2956 = vpop.f32.mrb[0].mxu0
      %2957 = vmatprep.mubr.bf16.mxu0 0
      %2958 = vmatmul.mubr.bf16.gmra.mrb[0].mxu0 %v2858
      %v2959 = vpop.f32.mrb[0].mxu0
      %v2960 = vadd.f32 0.0, %v2959
      %v2961 = vpop.f32.mrb[0].mxu0
      %v2962 = vpop.f32.mrb[0].mxu0
      %v2963 = vadd.f32 0.0, %v2962
      %v2964 = vpop.f32.mrb[0].mxu0
      %2965 = vmatprep.mubr.bf16.mxu0 0
      %2966 = vmatmul.mubr.bf16.gmra.mrb[0].mxu0 %v2861
      %v2967 = vpop.f32.mrb[0].mxu0
      %v2968 = vadd.f32 0.0, %v2967
      %v2969 = vpop.f32.mrb[0].mxu0
      %v2970 = vpop.f32.mrb[0].mxu0
      %v2971 = vadd.f32 0.0, %v2970
      %v2972 = vpop.f32.mrb[0].mxu0
      %2973 = vmatprep.mubr.bf16.mxu0 0
      %2974 = vmatmul.mubr.bf16.gmra.mrb[0].mxu0 %v2864
      %v2975 = vpop.f32.mrb[0].mxu0
      %v2976 = vadd.f32 0.0, %v2975
      %v2977 = vpop.f32.mrb[0].mxu0
      %v2978 = vpop.f32.mrb[0].mxu0
      %v2979 = vadd.f32 0.0, %v2978
      %v2980 = vpop.f32.mrb[0].mxu0
      %2981 = vmatprep.mubr.bf16.mxu0 0
      %2982 = vmatmul.mubr.bf16.gmra.mrb[0].mxu0 %v2867
      %v2983 = vpop.f32.mrb[0].mxu0
      %v2984 = vadd.f32 0.0, %v2983
      %v2985 = vpop.f32.mrb[0].mxu0
      %v2986 = vpop.f32.mrb[0].mxu0
      %v2987 = vadd.f32 0.0, %v2986
      %v2988 = vpop.f32.mrb[0].mxu0
      %2989 = vdwg.mxu0
      %v2990 = vsel %vm1918, -1e+30, %v2928
      %v2991 = vsel %vm1918, -1e+30, %v2931
      %v2992 = vsel %vm1918, -1e+30, %v2936
      %v2993 = vsel %vm1918, -1e+30, %v2939
      %v2994 = vsel %vm1918, -1e+30, %v2944
      %v2995 = vsel %vm1918, -1e+30, %v2947
      %v2996 = vsel %vm1918, -1e+30, %v2952
      %v2997 = vsel %vm1918, -1e+30, %v2955
      %v2998 = vsel %vm1918, -1e+30, %v2960
      %v2999 = vsel %vm1918, -1e+30, %v2963
      %v3000 = vsel %vm1918, -1e+30, %v2968
      %v3001 = vsel %vm1918, -1e+30, %v2971
      %v3002 = vsel %vm1918, -1e+30, %v2976
      %v3003 = vsel %vm1918, -1e+30, %v2979
      %v3004 = vsel %vm1918, -1e+30, %v2984
      %v3005 = vsel %vm1918, -1e+30, %v2987
      %3006 = vmax.xlane.f32.xlu0 %v2990
      %v3007 = vpop.xlane.xlu0 %3006
      %3008 = vmax.xlane.f32.xlu0 %v2991
      %v3009 = vpop.xlane.xlu0 %3008
      %3010 = vmax.xlane.f32.xlu0 %v2992
      %v3011 = vpop.xlane.xlu0 %3010
      %3012 = vmax.xlane.f32.xlu0 %v2993
      %v3013 = vpop.xlane.xlu0 %3012
      %3014 = vmax.xlane.f32.xlu0 %v2994
      %v3015 = vpop.xlane.xlu0 %3014
      %3016 = vmax.xlane.f32.xlu0 %v2995
      %v3017 = vpop.xlane.xlu0 %3016
      %3018 = vmax.xlane.f32.xlu0 %v2996
      %v3019 = vpop.xlane.xlu0 %3018
      %3020 = vmax.xlane.f32.xlu0 %v2997
      %v3021 = vpop.xlane.xlu0 %3020
      %3022 = vmax.xlane.f32.xlu0 %v2998
      %v3023 = vpop.xlane.xlu0 %3022
      %3024 = vmax.xlane.f32.xlu0 %v2999
      %v3025 = vpop.xlane.xlu0 %3024
      %3026 = vmax.xlane.f32.xlu0 %v3000
      %v3027 = vpop.xlane.xlu0 %3026
      %3028 = vmax.xlane.f32.xlu0 %v3001
      %v3029 = vpop.xlane.xlu0 %3028
      %3030 = vmax.xlane.f32.xlu0 %v3002
      %v3031 = vpop.xlane.xlu0 %3030
      %3032 = vmax.xlane.f32.xlu0 %v3003
      %v3033 = vpop.xlane.xlu0 %3032
      %3034 = vmax.xlane.f32.xlu0 %v3004
      %v3035 = vpop.xlane.xlu0 %3034
      %3036 = vmax.xlane.f32.xlu0 %v3005
      %v3037 = vpop.xlane.xlu0 %3036
      %v3038 = vsub.f32 %v2990, %v3007
      %v3039 = vsub.f32 %v2991, %v3009
      %v3040 = vsub.f32 %v2992, %v3011
      %v3041 = vsub.f32 %v2993, %v3013
      %v3042 = vsub.f32 %v2994, %v3015
      %v3043 = vsub.f32 %v2995, %v3017
      %v3044 = vsub.f32 %v2996, %v3019
      %v3045 = vsub.f32 %v2997, %v3021
      %v3046 = vsub.f32 %v2998, %v3023
      %v3047 = vsub.f32 %v2999, %v3025
      %v3048 = vsub.f32 %v3000, %v3027
      %v3049 = vsub.f32 %v3001, %v3029
      %v3050 = vsub.f32 %v3002, %v3031
      %v3051 = vsub.f32 %v3003, %v3033
      %v3052 = vsub.f32 %v3004, %v3035
      %v3053 = vsub.f32 %v3005, %v3037
      %v3054 = vmul.f32 %v3038, 1.442695
      %v3055 = vpow.pop %v3054
      %v3056 = vmul.f32 %v3039, 1.442695
      %v3057 = vpow.pop %v3056
      %v3058 = vmul.f32 %v3040, 1.442695
      %v3059 = vpow.pop %v3058
      %v3060 = vmul.f32 %v3041, 1.442695
      %v3061 = vpow.pop %v3060
      %v3062 = vmul.f32 %v3042, 1.442695
      %v3063 = vpow.pop %v3062
      %v3064 = vmul.f32 %v3043, 1.442695
      %v3065 = vpow.pop %v3064
      %v3066 = vmul.f32 %v3044, 1.442695
      %v3067 = vpow.pop %v3066
      %v3068 = vmul.f32 %v3045, 1.442695
      %v3069 = vpow.pop %v3068
      %v3070 = vmul.f32 %v3046, 1.442695
      %v3071 = vpow.pop %v3070
      %v3072 = vmul.f32 %v3047, 1.442695
      %v3073 = vpow.pop %v3072
      %v3074 = vmul.f32 %v3048, 1.442695
      %v3075 = vpow.pop %v3074
      %v3076 = vmul.f32 %v3049, 1.442695
      %v3077 = vpow.pop %v3076
      %v3078 = vmul.f32 %v3050, 1.442695
      %v3079 = vpow.pop %v3078
      %v3080 = vmul.f32 %v3051, 1.442695
      %v3081 = vpow.pop %v3080
      %v3082 = vmul.f32 %v3052, 1.442695
      %v3083 = vpow.pop %v3082
      %v3084 = vmul.f32 %v3053, 1.442695
      %v3085 = vpow.pop %v3084
      %3086 = vadd.xlane.f32.xlu0 %v3055
      %v3087 = vpop.xlane.xlu0 %3086
      %3088 = vadd.xlane.f32.xlu0 %v3057
      %v3089 = vpop.xlane.xlu0 %3088
      %3090 = vadd.xlane.f32.xlu0 %v3059
      %v3091 = vpop.xlane.xlu0 %3090
      %3092 = vadd.xlane.f32.xlu0 %v3061
      %v3093 = vpop.xlane.xlu0 %3092
      %3094 = vadd.xlane.f32.xlu0 %v3063
      %v3095 = vpop.xlane.xlu0 %3094
      %3096 = vadd.xlane.f32.xlu0 %v3065
      %v3097 = vpop.xlane.xlu0 %3096
      %3098 = vadd.xlane.f32.xlu0 %v3067
      %v3099 = vpop.xlane.xlu0 %3098
      %3100 = vadd.xlane.f32.xlu0 %v3069
      %v3101 = vpop.xlane.xlu0 %3100
      %3102 = vadd.xlane.f32.xlu0 %v3071
      %v3103 = vpop.xlane.xlu0 %3102
      %3104 = vadd.xlane.f32.xlu0 %v3073
      %v3105 = vpop.xlane.xlu0 %3104
      %3106 = vadd.xlane.f32.xlu0 %v3075
      %v3107 = vpop.xlane.xlu0 %3106
      %3108 = vadd.xlane.f32.xlu0 %v3077
      %v3109 = vpop.xlane.xlu0 %3108
      %3110 = vadd.xlane.f32.xlu0 %v3079
      %v3111 = vpop.xlane.xlu0 %3110
      %3112 = vadd.xlane.f32.xlu0 %v3081
      %v3113 = vpop.xlane.xlu0 %3112
      %3114 = vadd.xlane.f32.xlu0 %v3083
      %v3115 = vpop.xlane.xlu0 %3114
      %3116 = vadd.xlane.f32.xlu0 %v3085
      %v3117 = vpop.xlane.xlu0 %3116
      %v3118 = vrcp.pop %v3087
      %v3119 = vrcp.pop %v3089
      %v3120 = vrcp.pop %v3091
      %v3121 = vrcp.pop %v3093
      %v3122 = vrcp.pop %v3095
      %v3123 = vrcp.pop %v3097
      %v3124 = vrcp.pop %v3099
      %v3125 = vrcp.pop %v3101
      %v3126 = vrcp.pop %v3103
      %v3127 = vrcp.pop %v3105
      %v3128 = vrcp.pop %v3107
      %v3129 = vrcp.pop %v3109
      %v3130 = vrcp.pop %v3111
      %v3131 = vrcp.pop %v3113
      %v3132 = vrcp.pop %v3115
      %v3133 = vrcp.pop %v3117
      %v3134 = vmul.f32 %v3055, %v3118
      %v3135 = vmul.f32 %v3057, %v3119
      %v3136 = vmul.f32 %v3059, %v3120
      %v3137 = vmul.f32 %v3061, %v3121
      %v3138 = vmul.f32 %v3063, %v3122
      %v3139 = vmul.f32 %v3065, %v3123
      %v3140 = vmul.f32 %v3067, %v3124
      %v3141 = vmul.f32 %v3069, %v3125
      %v3142 = vmul.f32 %v3071, %v3126
      %v3143 = vmul.f32 %v3073, %v3127
      %v3144 = vmul.f32 %v3075, %v3128
      %v3145 = vmul.f32 %v3077, %v3129
      %v3146 = vmul.f32 %v3079, %v3130
      %v3147 = vmul.f32 %v3081, %v3131
      %v3148 = vmul.f32 %v3083, %v3132
      %v3149 = vmul.f32 %v3085, %v3133
      %v3150 = vpack.c.bf16 %v3135, %v3134
      %v3151 = vpack.c.bf16 %v3137, %v3136
      %v3152 = vpack.c.bf16 %v3139, %v3138
      %v3153 = vpack.c.bf16 %v3141, %v3140
      %v3154 = vpack.c.bf16 %v3143, %v3142
      %v3155 = vpack.c.bf16 %v3145, %v3144
      %v3156 = vpack.c.bf16 %v3147, %v3146
      %v3157 = vpack.c.bf16 %v3149, %v3148
      %s3158 = scalar_lea.vmem [#allocation3], 128
      %v3159 = vld [vmem:[%s3158] sm:$0xff]
      %v3160 = vld [vmem:[%s3158 + $0x8] sm:$0xff]
      %v3161 = vld [vmem:[%s3158 + $0x10] sm:$0xff]
      %v3162 = vld [vmem:[%s3158 + $0x18] sm:$0xff]
      %v3163 = vld [vmem:[%s3158 + $0x20] sm:$0xff]
      %v3164 = vld [vmem:[%s3158 + $0x28] sm:$0xff]
      %v3165 = vld [vmem:[%s3158 + $0x30] sm:$0xff]
      %v3166 = vld [vmem:[%s3158 + $0x38] sm:$0xff]
      %3167 = vmatprep.subr.bf16.mxu0 0
      %3168 = vmatpush1.bf16.msra.mxu0 %v3159
      %3169 = vmatprep.subr.bf16.mxu0 0
      %3170 = vmatpush1.bf16.msra.mxu0 %v3160
      %3171 = vmatprep.subr.bf16.mxu0 0
      %3172 = vmatpush1.bf16.msra.mxu0 %v3161
      %3173 = vmatprep.subr.bf16.mxu0 0
      %3174 = vmatpush1.bf16.msra.mxu0 %v3162
      %3175 = vmatprep.subr.bf16.mxu0 0
      %3176 = vmatpush1.bf16.msra.mxu0 %v3163
      %3177 = vmatprep.subr.bf16.mxu0 0
      %3178 = vmatpush1.bf16.msra.mxu0 %v3164
      %3179 = vmatprep.subr.bf16.mxu0 0
      %3180 = vmatpush1.bf16.msra.mxu0 %v3165
      %3181 = vmatprep.subr.bf16.mxu0 0
      %3182 = vmatpush1.bf16.msra.mxu0 %v3166
      %3183 = vmatprep.subr.bf16.mxu0 0
      %3184 = vmatpush1.bf16.msra.mxu0 0
      %3185 = vmatprep.subr.bf16.mxu0 0
      %3186 = vmatpush1.bf16.msra.mxu0 0
      %3187 = vmatprep.subr.bf16.mxu0 0
      %3188 = vmatpush1.bf16.msra.mxu0 0
      %3189 = vmatprep.subr.bf16.mxu0 0
      %3190 = vmatpush1.bf16.msra.mxu0 0
      %3191 = vmatprep.subr.bf16.mxu0 0
      %3192 = vmatpush1.bf16.msra.mxu0 0
      %3193 = vmatprep.subr.bf16.mxu0 0
      %3194 = vmatpush1.bf16.msra.mxu0 0
      %3195 = vmatprep.subr.bf16.mxu0 0
      %3196 = vmatpush1.bf16.msra.mxu0 0
      %3197 = vmatprep.subr.bf16.mxu0 0
      %3198 = vmatpush1.bf16.msra.mxu0 0
      %3199 = vmatprep.mubr.bf16.mxu0 0
      %3200 = vmatmul.mubr.bf16.gmra.mrb[0].mxu0 %v3150
      %v3201 = vpop.f32.mrb[0].mxu0
      %v3202 = vadd.f32 0.0, %v3201
      %v3203 = vpop.f32.mrb[0].mxu0
      %v3204 = vpop.f32.mrb[0].mxu0
      %v3205 = vadd.f32 0.0, %v3204
      %v3206 = vpop.f32.mrb[0].mxu0
      %3207 = vmatprep.mubr.bf16.mxu0 0
      %3208 = vmatmul.mubr.bf16.gmra.mrb[0].mxu0 %v3151
      %v3209 = vpop.f32.mrb[0].mxu0
      %v3210 = vadd.f32 0.0, %v3209
      %v3211 = vpop.f32.mrb[0].mxu0
      %v3212 = vpop.f32.mrb[0].mxu0
      %v3213 = vadd.f32 0.0, %v3212
      %v3214 = vpop.f32.mrb[0].mxu0
      %3215 = vmatprep.mubr.bf16.mxu0 0
      %3216 = vmatmul.mubr.bf16.gmra.mrb[0].mxu0 %v3152
      %v3217 = vpop.f32.mrb[0].mxu0
      %v3218 = vadd.f32 0.0, %v3217
      %v3219 = vpop.f32.mrb[0].mxu0
      %v3220 = vpop.f32.mrb[0].mxu0
      %v3221 = vadd.f32 0.0, %v3220
      %v3222 = vpop.f32.mrb[0].mxu0
      %3223 = vmatprep.mubr.bf16.mxu0 0
      %3224 = vmatmul.mubr.bf16.gmra.mrb[0].mxu0 %v3153
      %v3225 = vpop.f32.mrb[0].mxu0
      %v3226 = vadd.f32 0.0, %v3225
      %v3227 = vpop.f32.mrb[0].mxu0
      %v3228 = vpop.f32.mrb[0].mxu0
      %v3229 = vadd.f32 0.0, %v3228
      %v3230 = vpop.f32.mrb[0].mxu0
      %3231 = vmatprep.mubr.bf16.mxu0 0
      %3232 = vmatmul.mubr.bf16.gmra.mrb[0].mxu0 %v3154
      %v3233 = vpop.f32.mrb[0].mxu0
      %v3234 = vadd.f32 0.0, %v3233
      %v3235 = vpop.f32.mrb[0].mxu0
      %v3236 = vpop.f32.mrb[0].mxu0
      %v3237 = vadd.f32 0.0, %v3236
      %v3238 = vpop.f32.mrb[0].mxu0
      %3239 = vmatprep.mubr.bf16.mxu0 0
      %3240 = vmatmul.mubr.bf16.gmra.mrb[0].mxu0 %v3155
      %v3241 = vpop.f32.mrb[0].mxu0
      %v3242 = vadd.f32 0.0, %v3241
      %v3243 = vpop.f32.mrb[0].mxu0
      %v3244 = vpop.f32.mrb[0].mxu0
      %v3245 = vadd.f32 0.0, %v3244
      %v3246 = vpop.f32.mrb[0].mxu0
      %3247 = vmatprep.mubr.bf16.mxu0 0
      %3248 = vmatmul.mubr.bf16.gmra.mrb[0].mxu0 %v3156
      %v3249 = vpop.f32.mrb[0].mxu0
      %v3250 = vadd.f32 0.0, %v3249
      %v3251 = vpop.f32.mrb[0].mxu0
      %v3252 = vpop.f32.mrb[0].mxu0
      %v3253 = vadd.f32 0.0, %v3252
      %v3254 = vpop.f32.mrb[0].mxu0
      %3255 = vmatprep.mubr.bf16.mxu0 0
      %3256 = vmatmul.mubr.bf16.gmra.mrb[0].mxu0 %v3157
      %v3257 = vpop.f32.mrb[0].mxu0
      %v3258 = vadd.f32 0.0, %v3257
      %v3259 = vpop.f32.mrb[0].mxu0
      %v3260 = vpop.f32.mrb[0].mxu0
      %v3261 = vadd.f32 0.0, %v3260
      %v3262 = vpop.f32.mrb[0].mxu0
      %3263 = vdwg.mxu0
      %v3264 = vadd.f32 %v2751, %v3202
      %v3265 = vadd.f32 %v2754, %v3205
      %v3266 = vadd.f32 %v2759, %v3210
      %v3267 = vadd.f32 %v2762, %v3213
      %v3268 = vadd.f32 %v2767, %v3218
      %v3269 = vadd.f32 %v2770, %v3221
      %v3270 = vadd.f32 %v2775, %v3226
      %v3271 = vadd.f32 %v2778, %v3229
      %v3272 = vadd.f32 %v2783, %v3234
      %v3273 = vadd.f32 %v2786, %v3237
      %v3274 = vadd.f32 %v2791, %v3242
      %v3275 = vadd.f32 %v2794, %v3245
      %v3276 = vadd.f32 %v2799, %v3250
      %v3277 = vadd.f32 %v2802, %v3253
      %v3278 = vadd.f32 %v2807, %v3258
      %v3279 = vadd.f32 %v2810, %v3261
      %3280 = vrot.lane.b32.xlu0 %v1908, 104
      %v3281 = vpop.permute.xlu0 %3280
      %3282 = vrot.lane.b32.xlu0 %v1909, 104
      %v3283 = vpop.permute.xlu0 %3282
      %3284 = vrot.lane.b32.xlu0 %v1910, 104
      %v3285 = vpop.permute.xlu0 %3284
      %3286 = vrot.lane.b32.xlu0 %v1911, 104
      %v3287 = vpop.permute.xlu0 %3286
      %3288 = vrot.lane.b32.xlu0 %v1912, 104
      %v3289 = vpop.permute.xlu0 %3288
      %3290 = vrot.lane.b32.xlu0 %v1913, 104
      %v3291 = vpop.permute.xlu0 %3290
      %3292 = vrot.lane.b32.xlu0 %v1914, 104
      %v3293 = vpop.permute.xlu0 %3292
      %3294 = vrot.lane.b32.xlu0 %v1915, 104
      %v3295 = vpop.permute.xlu0 %3294
      %3296 = vrot.lane.b32.xlu0 %v1919, 104
      %v3297 = vpop.permute.xlu0 %3296
      %3298 = vrot.lane.b32.xlu0 %v1920, 104
      %v3299 = vpop.permute.xlu0 %3298
      %3300 = vrot.lane.b32.xlu0 %v1921, 104
      %v3301 = vpop.permute.xlu0 %3300
      %3302 = vrot.lane.b32.xlu0 %v1922, 104
      %v3303 = vpop.permute.xlu0 %3302
      %3304 = vrot.lane.b32.xlu0 %v1923, 104
      %v3305 = vpop.permute.xlu0 %3304
      %3306 = vrot.lane.b32.xlu0 %v1924, 104
      %v3307 = vpop.permute.xlu0 %3306
      %3308 = vrot.lane.b32.xlu0 %v1925, 104
      %v3309 = vpop.permute.xlu0 %3308
      %3310 = vrot.lane.b32.xlu0 %v1926, 104
      %v3311 = vpop.permute.xlu0 %3310
      %v3313 = vsel %vm1927, %v3281, 0
      %v3316 = vsel %vm1927, %v3283, 0
      %v3319 = vsel %vm1927, %v3285, 0
      %v3322 = vsel %vm1927, %v3287, 0
      %v3325 = vsel %vm1927, %v3289, 0
      %v3328 = vsel %vm1927, %v3291, 0
      %v3331 = vsel %vm1927, %v3293, 0
      %v3334 = vsel %vm1927, %v3295, 0
      %v3337 = vsel %vm1927, %v3297, 0
      %v3340 = vsel %vm1927, %v3299, 0
      %v3343 = vsel %vm1927, %v3301, 0
      %v3346 = vsel %vm1927, %v3303, 0
      %v3349 = vsel %vm1927, %v3305, 0
      %v3352 = vsel %vm1927, %v3307, 0
      %v3355 = vsel %vm1927, %v3309, 0
      %v3358 = vsel %vm1927, %v3311, 0
      %3360 = vmatprep.subr.bf16.mxu0 0
      %3361 = vmatpush1.bf16.xpose.msra.mxu0 %v3337
      %3362 = vmatprep.subr.bf16.mxu0 0
      %3363 = vmatpush1.bf16.xpose.msra.mxu0 %v3340
      %3364 = vmatprep.subr.bf16.mxu0 0
      %3365 = vmatpush1.bf16.xpose.msra.mxu0 %v3343
      %3366 = vmatprep.subr.bf16.mxu0 0
      %3367 = vmatpush1.bf16.xpose.msra.mxu0 %v3346
      %3368 = vmatprep.subr.bf16.mxu0 0
      %3369 = vmatpush1.bf16.xpose.msra.mxu0 %v3349
      %3370 = vmatprep.subr.bf16.mxu0 0
      %3371 = vmatpush1.bf16.xpose.msra.mxu0 %v3352
      %3372 = vmatprep.subr.bf16.mxu0 0
      %3373 = vmatpush1.bf16.xpose.msra.mxu0 %v3355
      %3374 = vmatprep.subr.bf16.mxu0 0
      %3375 = vmatpush1.bf16.xpose.msra.mxu0 %v3358
      %3376 = vmatprep.subr.bf16.mxu0 0
      %3377 = vmatpush1.bf16.xpose.msra.mxu0 0
      %3378 = vmatprep.subr.bf16.mxu0 0
      %3379 = vmatpush1.bf16.xpose.msra.mxu0 0
      %3380 = vmatprep.subr.bf16.mxu0 0
      %3381 = vmatpush1.bf16.xpose.msra.mxu0 0
      %3382 = vmatprep.subr.bf16.mxu0 0
      %3383 = vmatpush1.bf16.xpose.msra.mxu0 0
      %3384 = vmatprep.subr.bf16.mxu0 0
      %3385 = vmatpush1.bf16.xpose.msra.mxu0 0
      %3386 = vmatprep.subr.bf16.mxu0 0
      %3387 = vmatpush1.bf16.xpose.msra.mxu0 0
      %3388 = vmatprep.subr.bf16.mxu0 0
      %3389 = vmatpush1.bf16.xpose.msra.mxu0 0
      %3390 = vmatprep.subr.bf16.mxu0 0
      %3391 = vmatpush1.bf16.xpose.msra.mxu0 0
      %3392 = vmatprep.mubr.bf16.mxu0 0
      %3393 = vmatmul.mubr.bf16.gmra.mrb[0].mxu0 %v3313
      %v3394 = vpop.f32.mrb[0].mxu0
      %v3395 = vadd.f32 0.0, %v3394
      %v3396 = vpop.f32.mrb[0].mxu0
      %v3397 = vpop.f32.mrb[0].mxu0
      %v3398 = vadd.f32 0.0, %v3397
      %v3399 = vpop.f32.mrb[0].mxu0
      %3400 = vmatprep.mubr.bf16.mxu0 0
      %3401 = vmatmul.mubr.bf16.gmra.mrb[0].mxu0 %v3316
      %v3402 = vpop.f32.mrb[0].mxu0
      %v3403 = vadd.f32 0.0, %v3402
      %v3404 = vpop.f32.mrb[0].mxu0
      %v3405 = vpop.f32.mrb[0].mxu0
      %v3406 = vadd.f32 0.0, %v3405
      %v3407 = vpop.f32.mrb[0].mxu0
      %3408 = vmatprep.mubr.bf16.mxu0 0
      %3409 = vmatmul.mubr.bf16.gmra.mrb[0].mxu0 %v3319
      %v3410 = vpop.f32.mrb[0].mxu0
      %v3411 = vadd.f32 0.0, %v3410
      %v3412 = vpop.f32.mrb[0].mxu0
      %v3413 = vpop.f32.mrb[0].mxu0
      %v3414 = vadd.f32 0.0, %v3413
      %v3415 = vpop.f32.mrb[0].mxu0
      %3416 = vmatprep.mubr.bf16.mxu0 0
      %3417 = vmatmul.mubr.bf16.gmra.mrb[0].mxu0 %v3322
      %v3418 = vpop.f32.mrb[0].mxu0
      %v3419 = vadd.f32 0.0, %v3418
      %v3420 = vpop.f32.mrb[0].mxu0
      %v3421 = vpop.f32.mrb[0].mxu0
      %v3422 = vadd.f32 0.0, %v3421
      %v3423 = vpop.f32.mrb[0].mxu0
      %3424 = vmatprep.mubr.bf16.mxu0 0
      %3425 = vmatmul.mubr.bf16.gmra.mrb[0].mxu0 %v3325
      %v3426 = vpop.f32.mrb[0].mxu0
      %v3427 = vadd.f32 0.0, %v3426
      %v3428 = vpop.f32.mrb[0].mxu0
      %v3429 = vpop.f32.mrb[0].mxu0
      %v3430 = vadd.f32 0.0, %v3429
      %v3431 = vpop.f32.mrb[0].mxu0
      %3432 = vmatprep.mubr.bf16.mxu0 0
      %3433 = vmatmul.mubr.bf16.gmra.mrb[0].mxu0 %v3328
      %v3434 = vpop.f32.mrb[0].mxu0
      %v3435 = vadd.f32 0.0, %v3434
      %v3436 = vpop.f32.mrb[0].mxu0
      %v3437 = vpop.f32.mrb[0].mxu0
      %v3438 = vadd.f32 0.0, %v3437
      %v3439 = vpop.f32.mrb[0].mxu0
      %3440 = vmatprep.mubr.bf16.mxu0 0
      %3441 = vmatmul.mubr.bf16.gmra.mrb[0].mxu0 %v3331
      %v3442 = vpop.f32.mrb[0].mxu0
      %v3443 = vadd.f32 0.0, %v3442
      %v3444 = vpop.f32.mrb[0].mxu0
      %v3445 = vpop.f32.mrb[0].mxu0
      %v3446 = vadd.f32 0.0, %v3445
      %v3447 = vpop.f32.mrb[0].mxu0
      %3448 = vmatprep.mubr.bf16.mxu0 0
      %3449 = vmatmul.mubr.bf16.gmra.mrb[0].mxu0 %v3334
      %v3450 = vpop.f32.mrb[0].mxu0
      %v3451 = vadd.f32 0.0, %v3450
      %v3452 = vpop.f32.mrb[0].mxu0
      %v3453 = vpop.f32.mrb[0].mxu0
      %v3454 = vadd.f32 0.0, %v3453
      %v3455 = vpop.f32.mrb[0].mxu0
      %3456 = vdwg.mxu0
      %v3457 = vsel %vm1918, -1e+30, %v3395
      %v3458 = vsel %vm1918, -1e+30, %v3398
      %v3459 = vsel %vm1918, -1e+30, %v3403
      %v3460 = vsel %vm1918, -1e+30, %v3406
      %v3461 = vsel %vm1918, -1e+30, %v3411
      %v3462 = vsel %vm1918, -1e+30, %v3414
      %v3463 = vsel %vm1918, -1e+30, %v3419
      %v3464 = vsel %vm1918, -1e+30, %v3422
      %v3465 = vsel %vm1918, -1e+30, %v3427
      %v3466 = vsel %vm1918, -1e+30, %v3430
      %v3467 = vsel %vm1918, -1e+30, %v3435
      %v3468 = vsel %vm1918, -1e+30, %v3438
      %v3469 = vsel %vm1918, -1e+30, %v3443
      %v3470 = vsel %vm1918, -1e+30, %v3446
      %v3471 = vsel %vm1918, -1e+30, %v3451
      %v3472 = vsel %vm1918, -1e+30, %v3454
      %3473 = vmax.xlane.f32.xlu0 %v3457
      %v3474 = vpop.xlane.xlu0 %3473
      %3475 = vmax.xlane.f32.xlu0 %v3458
      %v3476 = vpop.xlane.xlu0 %3475
      %3477 = vmax.xlane.f32.xlu0 %v3459
      %v3478 = vpop.xlane.xlu0 %3477
      %3479 = vmax.xlane.f32.xlu0 %v3460
      %v3480 = vpop.xlane.xlu0 %3479
      %3481 = vmax.xlane.f32.xlu0 %v3461
      %v3482 = vpop.xlane.xlu0 %3481
      %3483 = vmax.xlane.f32.xlu0 %v3462
      %v3484 = vpop.xlane.xlu0 %3483
      %3485 = vmax.xlane.f32.xlu0 %v3463
      %v3486 = vpop.xlane.xlu0 %3485
      %3487 = vmax.xlane.f32.xlu0 %v3464
      %v3488 = vpop.xlane.xlu0 %3487
      %3489 = vmax.xlane.f32.xlu0 %v3465
      %v3490 = vpop.xlane.xlu0 %3489
      %3491 = vmax.xlane.f32.xlu0 %v3466
      %v3492 = vpop.xlane.xlu0 %3491
      %3493 = vmax.xlane.f32.xlu0 %v3467
      %v3494 = vpop.xlane.xlu0 %3493
      %3495 = vmax.xlane.f32.xlu0 %v3468
      %v3496 = vpop.xlane.xlu0 %3495
      %3497 = vmax.xlane.f32.xlu0 %v3469
      %v3498 = vpop.xlane.xlu0 %3497
      %3499 = vmax.xlane.f32.xlu0 %v3470
      %v3500 = vpop.xlane.xlu0 %3499
      %3501 = vmax.xlane.f32.xlu0 %v3471
      %v3502 = vpop.xlane.xlu0 %3501
      %3503 = vmax.xlane.f32.xlu0 %v3472
      %v3504 = vpop.xlane.xlu0 %3503
      %v3505 = vsub.f32 %v3457, %v3474
      %v3506 = vsub.f32 %v3458, %v3476
      %v3507 = vsub.f32 %v3459, %v3478
      %v3508 = vsub.f32 %v3460, %v3480
      %v3509 = vsub.f32 %v3461, %v3482
      %v3510 = vsub.f32 %v3462, %v3484
      %v3511 = vsub.f32 %v3463, %v3486
      %v3512 = vsub.f32 %v3464, %v3488
      %v3513 = vsub.f32 %v3465, %v3490
      %v3514 = vsub.f32 %v3466, %v3492
      %v3515 = vsub.f32 %v3467, %v3494
      %v3516 = vsub.f32 %v3468, %v3496
      %v3517 = vsub.f32 %v3469, %v3498
      %v3518 = vsub.f32 %v3470, %v3500
      %v3519 = vsub.f32 %v3471, %v3502
      %v3520 = vsub.f32 %v3472, %v3504
      %v3521 = vmul.f32 %v3505, 1.442695
      %v3522 = vpow.pop %v3521
      %v3523 = vmul.f32 %v3506, 1.442695
      %v3524 = vpow.pop %v3523
      %v3525 = vmul.f32 %v3507, 1.442695
      %v3526 = vpow.pop %v3525
      %v3527 = vmul.f32 %v3508, 1.442695
      %v3528 = vpow.pop %v3527
      %v3529 = vmul.f32 %v3509, 1.442695
      %v3530 = vpow.pop %v3529
      %v3531 = vmul.f32 %v3510, 1.442695
      %v3532 = vpow.pop %v3531
      %v3533 = vmul.f32 %v3511, 1.442695
      %v3534 = vpow.pop %v3533
      %v3535 = vmul.f32 %v3512, 1.442695
      %v3536 = vpow.pop %v3535
      %v3537 = vmul.f32 %v3513, 1.442695
      %v3538 = vpow.pop %v3537
      %v3539 = vmul.f32 %v3514, 1.442695
      %v3540 = vpow.pop %v3539
      %v3541 = vmul.f32 %v3515, 1.442695
      %v3542 = vpow.pop %v3541
      %v3543 = vmul.f32 %v3516, 1.442695
      %v3544 = vpow.pop %v3543
      %v3545 = vmul.f32 %v3517, 1.442695
      %v3546 = vpow.pop %v3545
      %v3547 = vmul.f32 %v3518, 1.442695
      %v3548 = vpow.pop %v3547
      %v3549 = vmul.f32 %v3519, 1.442695
      %v3550 = vpow.pop %v3549
      %v3551 = vmul.f32 %v3520, 1.442695
      %v3552 = vpow.pop %v3551
      %3553 = vadd.xlane.f32.xlu0 %v3522
      %v3554 = vpop.xlane.xlu0 %3553
      %3555 = vadd.xlane.f32.xlu0 %v3524
      %v3556 = vpop.xlane.xlu0 %3555
      %3557 = vadd.xlane.f32.xlu0 %v3526
      %v3558 = vpop.xlane.xlu0 %3557
      %3559 = vadd.xlane.f32.xlu0 %v3528
      %v3560 = vpop.xlane.xlu0 %3559
      %3561 = vadd.xlane.f32.xlu0 %v3530
      %v3562 = vpop.xlane.xlu0 %3561
      %3563 = vadd.xlane.f32.xlu0 %v3532
      %v3564 = vpop.xlane.xlu0 %3563
      %3565 = vadd.xlane.f32.xlu0 %v3534
      %v3566 = vpop.xlane.xlu0 %3565
      %3567 = vadd.xlane.f32.xlu0 %v3536
      %v3568 = vpop.xlane.xlu0 %3567
      %3569 = vadd.xlane.f32.xlu0 %v3538
      %v3570 = vpop.xlane.xlu0 %3569
      %3571 = vadd.xlane.f32.xlu0 %v3540
      %v3572 = vpop.xlane.xlu0 %3571
      %3573 = vadd.xlane.f32.xlu0 %v3542
      %v3574 = vpop.xlane.xlu0 %3573
      %3575 = vadd.xlane.f32.xlu0 %v3544
      %v3576 = vpop.xlane.xlu0 %3575
      %3577 = vadd.xlane.f32.xlu0 %v3546
      %v3578 = vpop.xlane.xlu0 %3577
      %3579 = vadd.xlane.f32.xlu0 %v3548
      %v3580 = vpop.xlane.xlu0 %3579
      %3581 = vadd.xlane.f32.xlu0 %v3550
      %v3582 = vpop.xlane.xlu0 %3581
      %3583 = vadd.xlane.f32.xlu0 %v3552
      %v3584 = vpop.xlane.xlu0 %3583
      %v3585 = vrcp.pop %v3554
      %v3586 = vrcp.pop %v3556
      %v3587 = vrcp.pop %v3558
      %v3588 = vrcp.pop %v3560
      %v3589 = vrcp.pop %v3562
      %v3590 = vrcp.pop %v3564
      %v3591 = vrcp.pop %v3566
      %v3592 = vrcp.pop %v3568
      %v3593 = vrcp.pop %v3570
      %v3594 = vrcp.pop %v3572
      %v3595 = vrcp.pop %v3574
      %v3596 = vrcp.pop %v3576
      %v3597 = vrcp.pop %v3578
      %v3598 = vrcp.pop %v3580
      %v3599 = vrcp.pop %v3582
      %v3600 = vrcp.pop %v3584
      %v3601 = vmul.f32 %v3522, %v3585
      %v3602 = vmul.f32 %v3524, %v3586
      %v3603 = vmul.f32 %v3526, %v3587
      %v3604 = vmul.f32 %v3528, %v3588
      %v3605 = vmul.f32 %v3530, %v3589
      %v3606 = vmul.f32 %v3532, %v3590
      %v3607 = vmul.f32 %v3534, %v3591
      %v3608 = vmul.f32 %v3536, %v3592
      %v3609 = vmul.f32 %v3538, %v3593
      %v3610 = vmul.f32 %v3540, %v3594
      %v3611 = vmul.f32 %v3542, %v3595
      %v3612 = vmul.f32 %v3544, %v3596
      %v3613 = vmul.f32 %v3546, %v3597
      %v3614 = vmul.f32 %v3548, %v3598
      %v3615 = vmul.f32 %v3550, %v3599
      %v3616 = vmul.f32 %v3552, %v3600
      %v3617 = vpack.c.bf16 %v3602, %v3601
      %v3618 = vpack.c.bf16 %v3604, %v3603
      %v3619 = vpack.c.bf16 %v3606, %v3605
      %v3620 = vpack.c.bf16 %v3608, %v3607
      %v3621 = vpack.c.bf16 %v3610, %v3609
      %v3622 = vpack.c.bf16 %v3612, %v3611
      %v3623 = vpack.c.bf16 %v3614, %v3613
      %v3624 = vpack.c.bf16 %v3616, %v3615
      %s3625 = scalar_lea.vmem [#allocation3], 192
      %v3626 = vld [vmem:[%s3625] sm:$0xff]
      %v3627 = vld [vmem:[%s3625 + $0x8] sm:$0xff]
      %v3628 = vld [vmem:[%s3625 + $0x10] sm:$0xff]
      %v3629 = vld [vmem:[%s3625 + $0x18] sm:$0xff]
      %v3630 = vld [vmem:[%s3625 + $0x20] sm:$0xff]
      %v3631 = vld [vmem:[%s3625 + $0x28] sm:$0xff]
      %v3632 = vld [vmem:[%s3625 + $0x30] sm:$0xff]
      %v3633 = vld [vmem:[%s3625 + $0x38] sm:$0xff]
      %3634 = vmatprep.subr.bf16.mxu0 0
      %3635 = vmatpush1.bf16.msra.mxu0 %v3626
      %3636 = vmatprep.subr.bf16.mxu0 0
      %3637 = vmatpush1.bf16.msra.mxu0 %v3627
      %3638 = vmatprep.subr.bf16.mxu0 0
      %3639 = vmatpush1.bf16.msra.mxu0 %v3628
      %3640 = vmatprep.subr.bf16.mxu0 0
      %3641 = vmatpush1.bf16.msra.mxu0 %v3629
      %3642 = vmatprep.subr.bf16.mxu0 0
      %3643 = vmatpush1.bf16.msra.mxu0 %v3630
      %3644 = vmatprep.subr.bf16.mxu0 0
      %3645 = vmatpush1.bf16.msra.mxu0 %v3631
      %3646 = vmatprep.subr.bf16.mxu0 0
      %3647 = vmatpush1.bf16.msra.mxu0 %v3632
      %3648 = vmatprep.subr.bf16.mxu0 0
      %3649 = vmatpush1.bf16.msra.mxu0 %v3633
      %3650 = vmatprep.subr.bf16.mxu0 0
      %3651 = vmatpush1.bf16.msra.mxu0 0
      %3652 = vmatprep.subr.bf16.mxu0 0
      %3653 = vmatpush1.bf16.msra.mxu0 0
      %3654 = vmatprep.subr.bf16.mxu0 0
      %3655 = vmatpush1.bf16.msra.mxu0 0
      %3656 = vmatprep.subr.bf16.mxu0 0
      %3657 = vmatpush1.bf16.msra.mxu0 0
      %3658 = vmatprep.subr.bf16.mxu0 0
      %3659 = vmatpush1.bf16.msra.mxu0 0
      %3660 = vmatprep.subr.bf16.mxu0 0
      %3661 = vmatpush1.bf16.msra.mxu0 0
      %3662 = vmatprep.subr.bf16.mxu0 0
      %3663 = vmatpush1.bf16.msra.mxu0 0
      %3664 = vmatprep.subr.bf16.mxu0 0
      %3665 = vmatpush1.bf16.msra.mxu0 0
      %3666 = vmatprep.mubr.bf16.mxu0 0
      %3667 = vmatmul.mubr.bf16.gmra.mrb[0].mxu0 %v3617
      %v3668 = vpop.f32.mrb[0].mxu0
      %v3669 = vadd.f32 0.0, %v3668
      %v3670 = vpop.f32.mrb[0].mxu0
      %v3671 = vpop.f32.mrb[0].mxu0
      %v3672 = vadd.f32 0.0, %v3671
      %v3673 = vpop.f32.mrb[0].mxu0
      %3674 = vmatprep.mubr.bf16.mxu0 0
      %3675 = vmatmul.mubr.bf16.gmra.mrb[0].mxu0 %v3618
      %v3676 = vpop.f32.mrb[0].mxu0
      %v3677 = vadd.f32 0.0, %v3676
      %v3678 = vpop.f32.mrb[0].mxu0
      %v3679 = vpop.f32.mrb[0].mxu0
      %v3680 = vadd.f32 0.0, %v3679
      %v3681 = vpop.f32.mrb[0].mxu0
      %3682 = vmatprep.mubr.bf16.mxu0 0
      %3683 = vmatmul.mubr.bf16.gmra.mrb[0].mxu0 %v3619
      %v3684 = vpop.f32.mrb[0].mxu0
      %v3685 = vadd.f32 0.0, %v3684
      %v3686 = vpop.f32.mrb[0].mxu0
      %v3687 = vpop.f32.mrb[0].mxu0
      %v3688 = vadd.f32 0.0, %v3687
      %v3689 = vpop.f32.mrb[0].mxu0
      %3690 = vmatprep.mubr.bf16.mxu0 0
      %3691 = vmatmul.mubr.bf16.gmra.mrb[0].mxu0 %v3620
      %v3692 = vpop.f32.mrb[0].mxu0
      %v3693 = vadd.f32 0.0, %v3692
      %v3694 = vpop.f32.mrb[0].mxu0
      %v3695 = vpop.f32.mrb[0].mxu0
      %v3696 = vadd.f32 0.0, %v3695
      %v3697 = vpop.f32.mrb[0].mxu0
      %3698 = vmatprep.mubr.bf16.mxu0 0
      %3699 = vmatmul.mubr.bf16.gmra.mrb[0].mxu0 %v3621
      %v3700 = vpop.f32.mrb[0].mxu0
      %v3701 = vadd.f32 0.0, %v3700
      %v3702 = vpop.f32.mrb[0].mxu0
      %v3703 = vpop.f32.mrb[0].mxu0
      %v3704 = vadd.f32 0.0, %v3703
      %v3705 = vpop.f32.mrb[0].mxu0
      %3706 = vmatprep.mubr.bf16.mxu0 0
      %3707 = vmatmul.mubr.bf16.gmra.mrb[0].mxu0 %v3622
      %v3708 = vpop.f32.mrb[0].mxu0
      %v3709 = vadd.f32 0.0, %v3708
      %v3710 = vpop.f32.mrb[0].mxu0
      %v3711 = vpop.f32.mrb[0].mxu0
      %v3712 = vadd.f32 0.0, %v3711
      %v3713 = vpop.f32.mrb[0].mxu0
      %3714 = vmatprep.mubr.bf16.mxu0 0
      %3715 = vmatmul.mubr.bf16.gmra.mrb[0].mxu0 %v3623
      %v3716 = vpop.f32.mrb[0].mxu0
      %v3717 = vadd.f32 0.0, %v3716
      %v3718 = vpop.f32.mrb[0].mxu0
      %v3719 = vpop.f32.mrb[0].mxu0
      %v3720 = vadd.f32 0.0, %v3719
      %v3721 = vpop.f32.mrb[0].mxu0
      %3722 = vmatprep.mubr.bf16.mxu0 0
      %3723 = vmatmul.mubr.bf16.gmra.mrb[0].mxu0 %v3624
      %v3724 = vpop.f32.mrb[0].mxu0
      %v3725 = vadd.f32 0.0, %v3724
      %v3726 = vpop.f32.mrb[0].mxu0
      %v3727 = vpop.f32.mrb[0].mxu0
      %v3728 = vadd.f32 0.0, %v3727
      %v3729 = vpop.f32.mrb[0].mxu0
      %3730 = vdwg.mxu0
      %v3731 = vadd.f32 %v3264, %v3669
      %v3732 = vadd.f32 %v3265, %v3672
      %v3733 = vadd.f32 %v3266, %v3677
      %v3734 = vadd.f32 %v3267, %v3680
      %v3735 = vadd.f32 %v3268, %v3685
      %v3736 = vadd.f32 %v3269, %v3688
      %v3737 = vadd.f32 %v3270, %v3693
      %v3738 = vadd.f32 %v3271, %v3696
      %v3739 = vadd.f32 %v3272, %v3701
      %v3740 = vadd.f32 %v3273, %v3704
      %v3741 = vadd.f32 %v3274, %v3709
      %v3742 = vadd.f32 %v3275, %v3712
      %v3743 = vadd.f32 %v3276, %v3717
      %v3744 = vadd.f32 %v3277, %v3720
      %v3745 = vadd.f32 %v3278, %v3725
      %v3746 = vadd.f32 %v3279, %v3728
      %v3747 = vld [vmem:[%s9] sm:$0x1]
      %v3749 = vlaneseq
      %v3750 = vshrl.u32 %v3749, 7
      %v3751 = vsub.s32 0, %v3750
      %v3752 = vrot.slane %v3747, %v3751
      %v3754 = vadd.f32 %v3731, %v3752
      %v3755 = vadd.f32 %v3732, %v3752
      %v3756 = vadd.f32 %v3733, %v3752
      %v3757 = vadd.f32 %v3734, %v3752
      %v3758 = vadd.f32 %v3735, %v3752
      %v3759 = vadd.f32 %v3736, %v3752
      %v3760 = vadd.f32 %v3737, %v3752
      %v3761 = vadd.f32 %v3738, %v3752
      %v3762 = vadd.f32 %v3739, %v3752
      %v3763 = vadd.f32 %v3740, %v3752
      %v3764 = vadd.f32 %v3741, %v3752
      %v3765 = vadd.f32 %v3742, %v3752
      %v3766 = vadd.f32 %v3743, %v3752
      %v3767 = vadd.f32 %v3744, %v3752
      %v3768 = vadd.f32 %v3745, %v3752
      %v3769 = vadd.f32 %v3746, %v3752
      %3770 = vst.msk [vmem:[%s417] sm:$0xff] %vm1786, %v3754
      %3771 = vst.msk [vmem:[%s417 + $0x8] sm:$0xff] %vm1786, %v3755
      %3772 = vst.msk [vmem:[%s417 + $0x10] sm:$0xff] %vm1786, %v3756
      %3773 = vst.msk [vmem:[%s417 + $0x18] sm:$0xff] %vm1786, %v3757
      %3774 = vst.msk [vmem:[%s417 + $0x20] sm:$0xff] %vm1786, %v3758
      %3775 = vst.msk [vmem:[%s417 + $0x28] sm:$0xff] %vm1786, %v3759
      %3776 = vst.msk [vmem:[%s417 + $0x30] sm:$0xff] %vm1786, %v3760
      %3777 = vst.msk [vmem:[%s417 + $0x38] sm:$0xff] %vm1786, %v3761
      %3778 = vst.msk [vmem:[%s417 + $0x40] sm:$0xff] %vm1786, %v3762
      %3779 = vst.msk [vmem:[%s417 + $0x48] sm:$0xff] %vm1786, %v3763
      %3780 = vst.msk [vmem:[%s417 + $0x50] sm:$0xff] %vm1786, %v3764
      %3781 = vst.msk [vmem:[%s417 + $0x58] sm:$0xff] %vm1786, %v3765
      %3782 = vst.msk [vmem:[%s417 + $0x60] sm:$0xff] %vm1786, %v3766
      %3783 = vst.msk [vmem:[%s417 + $0x68] sm:$0xff] %vm1786, %v3767
      %3784 = vst.msk [vmem:[%s417 + $0x70] sm:$0xff] %vm1786, %v3768
      %3785 = vst.msk [vmem:[%s417 + $0x78] sm:$0xff] %vm1786, %v3769
      %s3786 = smul.u32 16, %s26
      %p3787 = scmp.lt.s32.totalorder %s25, 1
      %s3788 = scalar_select %p3787, %s25, 1
      %p3789 = scmp.lt.s32.totalorder %s3786, 31
      %s3790 = scalar_select %p3789, %s3786, 31
      %s3791 = smul.addr %s3788, 32
      %s3792 = sadd.s32 %s3790, %s3791
      %s3793 = smul.addr %s3792, 8
      %s3794 = scalar_lea.vmem %s10, %s3793
      // Predicated region
      $region65: #{tpu_custom_call.1} parent=59 // pred_check
        %p3795 = pneg %p275
      $region66: #{tpu_custom_call.1} parent=59 // pred_check_branch
        %3797 = sbr.rel (%p3795) target = $region68
      $region67: #{tpu_custom_call.1} parent=59 // pred_region
        %s3798 = smul.u32 16, %s26
      $region68: #{tpu_custom_call.1} parent=59 // pred_fallthru
        _
    $region60: #{tpu_custom_call.1} parent=5 // pred_fallthru
      _
    %p3799 = scmp.le.s32.totalorder 2, %s16
    // Predicated region
    $region69: #{tpu_custom_call.1} parent=5 // pred_check
      %p3800 = pneg %p3799
    $region70: #{tpu_custom_call.1} parent=5 // pred_check_branch
      %3802 = sbr.rel (%p3800) target = $region72
    $region71: #{tpu_custom_call.1} parent=5 // pred_region
      %s3803 = ssub.s32 %s16, 2
      // Predicated region
      $region73: #{tpu_custom_call.1} parent=71 // pred_check
        %p3804 = pneg %p281
      $region74: #{tpu_custom_call.1} parent=71 // pred_check_branch
        %3806 = sbr.rel (%p3804) target = $region76
      $region75: #{tpu_custom_call.1} parent=71 // pred_region
        %s3807 = smul.u32 16, %s28
        %p3808 = scmp.lt.s32.totalorder %s27, 1
        %s3809 = scalar_select %p3808, %s27, 1
        %p3810 = scmp.lt.s32.totalorder %s3807, 31
        %s3811 = scalar_select %p3810, %s3807, 31
        %s3812 = smul.addr %s3809, 32
        %s3813 = sadd.s32 %s3811, %s3812
        %s3814 = smul.addr %s3813, 8
        %s3815 = scalar_lea.vmem %s10, %s3814
      $region76: #{tpu_custom_call.1} parent=71 // pred_fallthru
        _
    $region72: #{tpu_custom_call.1} parent=5 // pred_fallthru
      _
  $region6: #{tpu_custom_call.1} parent=0 // loop_footer
    %s20 = sadd.s32 1, %s16
  $region7: #{tpu_custom_call.1} parent=0 // loop_footer_branch
    %15 = sbr.rel target = $region3
  $region8: #{tpu_custom_call.1} parent=0 // loop_exit
    _

</llo_original>
